<compile_context>
chip_gen: v5e
topology: v5e:2x2
jax: 0.10.0
libtpu: 0.0.40
codegen_flags: <defaults>
</compile_context>

<pallas_src>
import functools

import jax
import jax.numpy as jnp
from jax.experimental import pallas as pl
from jax.experimental.pallas import tpu as pltpu

EPS = 1e-5
LANES = 128


def _round_up(x, m):
    return (x + m - 1) // m * m


# ----------------------------------------------------------------------------
# Kernels
# ----------------------------------------------------------------------------
def _conv_tile_kernel(xt_ref, scale_ref, shift_ref, w_ref, b_ref,
                      y_ref, stats_ref, *, apply_input_bn_relu):
    """One (batch, H-tile) grid step.

    xt_ref:    (TH+2, W+2, Cpi)  haloed, spatially zero-padded input tile (f32)
    scale_ref: (1, Cpi), shift_ref: (1, Cpi)  folded affine of the *previous* BN
    w_ref:     (9*Cpi, Cpo)      folded 3x3 weights (tap-major, channel-minor)
    b_ref:     (1, Cpo) f32      conv bias
    y_ref:     (TH, W, Cpo)      pre-BN conv output tile (f32)
    stats_ref: (2, Cpo) f32      per-tile [sum; sum of squares] over TH*W positions
    """
    thp2, wp2, cpi = xt_ref.shape
    th, w = thp2 - 2, wp2 - 2
    cpo = y_ref.shape[-1]

    xt = xt_ref[...].astype(jnp.float32)

    if apply_input_bn_relu:
        # BN + ReLU of the previous layer, fused here so the activated tensor is
        # never round-tripped through HBM. Spatially-padded positions (the 1-wide
        # border of the padded *image*) must stay exactly 0 after activation.
        act = jnp.maximum(xt * scale_ref[...] + shift_ref[...], 0.0)
        h_tile = pl.program_id(1)
        h_total = pl.num_programs(1) * th
        row = jax.lax.broadcasted_iota(jnp.int32, (thp2, wp2, 1), 0) + h_tile * th
        col = jax.lax.broadcasted_iota(jnp.int32, (thp2, wp2, 1), 1)
        interior = (row >= 1) & (row <= h_total) & (col >= 1) & (col <= w)
        xt = jnp.where(interior, act, 0.0)

    # im2col: fold the 9 taps into the contraction dim -> a single MXU matmul.
    parts = [xt[dy:dy + th, dx:dx + w, :] for dy in range(3) for dx in range(3)]
    patch = jnp.concatenate(parts, axis=-1).reshape(th * w, 9 * cpi)
    acc = jnp.dot(patch.astype(w_ref.dtype), w_ref[...],
                  preferred_element_type=jnp.float32)
    acc = acc + b_ref[...]

    y_ref[...] = acc.reshape(th, w, cpo)

    # One-pass BN statistics; var = E[x^2] - mean^2 is finished in the wrapper.
    s = jnp.sum(acc, axis=0, keepdims=True)
    ss = jnp.sum(acc * acc, axis=0, keepdims=True)
    stats_ref[...] = jnp.concatenate([s, ss], axis=0)


def _bn_relu_kernel(y_ref, scale_ref, shift_ref, o_ref):
    o_ref[...] = jnp.maximum(y_ref[...] * scale_ref[...] + shift_ref[...], 0.0)


# ----------------------------------------------------------------------------
# pallas_call wrappers
# ----------------------------------------------------------------------------
_COMPILER_PARAMS = pltpu.CompilerParams(
    dimension_semantics=("parallel", "parallel"),
    vmem_limit_bytes=32 * 1024 * 1024,
)


def _conv_block(x_nhwc_p, scale, shift, w_folded, b_col, *, th, apply_input_bn_relu):
    """x_nhwc_p: (N, H, W, Cpi) channel-padded f32 (not spatially padded).
    Returns pre-BN conv output (N, H, W, Cpo) and summed stats (2, Cpo)."""
    n, h, w, cpi = x_nhwc_p.shape
    cpo = w_folded.shape[-1]
    n_h = h // th

    # Spatial zero-pad + halo-expand into non-overlapping (TH+2)-row tiles so plain
    # Blocked BlockSpecs can pipeline them.
    # TODO(synk): replace the halo-expanded copy with element-indexed overlapping
    # windows or a manual double-buffered DMA to avoid duplicating 2 rows per tile.
    xpad = jnp.pad(x_nhwc_p, ((0, 0), (1, 1), (1, 1), (0, 0)))
    rows = jnp.arange(n_h)[:, None] * th + jnp.arange(th + 2)[None, :]
    xtiles = xpad[:, rows]                              # (N, nH, TH+2, W+2, Cpi)

    kernel = functools.partial(_conv_tile_kernel,
                               apply_input_bn_relu=apply_input_bn_relu)
    y, stats = pl.pallas_call(
        kernel,
        grid=(n, n_h),
        in_specs=[
            pl.BlockSpec((None, None, th + 2, w + 2, cpi),
                         lambda b, i: (b, i, 0, 0, 0)),
            pl.BlockSpec((1, cpi), lambda b, i: (0, 0)),
            pl.BlockSpec((1, cpi), lambda b, i: (0, 0)),
            pl.BlockSpec((9 * cpi, cpo), lambda b, i: (0, 0)),
            pl.BlockSpec((1, cpo), lambda b, i: (0, 0)),
        ],
        out_specs=(
            pl.BlockSpec((None, th, w, cpo), lambda b, i: (b, i, 0, 0)),
            pl.BlockSpec((None, None, 2, cpo), lambda b, i: (b, i, 0, 0)),
        ),
        out_shape=(
            jax.ShapeDtypeStruct((n, h, w, cpo), jnp.float32),
            jax.ShapeDtypeStruct((n, n_h, 2, cpo), jnp.float32),
        ),
        compiler_params=_COMPILER_PARAMS,
    )(xtiles, scale, shift, w_folded, b_col)
    return y, stats.sum(axis=(0, 1))


def _bn_relu(y, scale, shift, *, th):
    n, h, w, cp = y.shape
    n_h = h // th
    return pl.pallas_call(
        _bn_relu_kernel,
        grid=(n, n_h),
        in_specs=[
            pl.BlockSpec((None, th, w, cp), lambda b, i: (b, i, 0, 0)),
            pl.BlockSpec((1, cp), lambda b, i: (0, 0)),
            pl.BlockSpec((1, cp), lambda b, i: (0, 0)),
        ],
        out_specs=pl.BlockSpec((None, th, w, cp), lambda b, i: (b, i, 0, 0)),
        out_shape=jax.ShapeDtypeStruct((n, h, w, cp), jnp.float32),
        compiler_params=_COMPILER_PARAMS,
    )(y, scale, shift)


def _fold_bn(stats, gamma_p, beta_p, count):
    """(2, C) sums -> per-channel scale/shift so bn(x) == x*scale + shift."""
    mean = stats[0] / count
    var = jnp.maximum(stats[1] / count - mean * mean, 0.0)   # biased variance
    inv = jax.lax.rsqrt(var + EPS)
    scale = gamma_p * inv
    shift = beta_p - mean * scale
    return scale.reshape(1, -1), shift.reshape(1, -1)


@functools.partial(jax.jit, static_argnames=("compute_dtype",))
def double_conv(x_nchw, w1, b1, g1, be1, w2, b2, g2, be2,
                compute_dtype=jnp.float32):
    """PyTorch DoubleConv forward (training-mode BN). x_nchw: (N, Cin, H, W) f32,
    conv weights in OIHW. compute_dtype controls MXU operand dtype
    (use jnp.bfloat16 on v6e/v7x; accumulation and all elementwise math stay f32)."""
    n, cin, h, w = x_nchw.shape
    cout = w1.shape[0]
    cpi = _round_up(cin, LANES)
    cpo = _round_up(cout, LANES)
    th = 8 if (h % 8 == 0 and h > 8) else h            # rows per grid step

    # ---- glue: NCHW -> NHWC, lane-dense channel padding, weight folding ----
    x = jnp.transpose(x_nchw, (0, 2, 3, 1))
    x = jnp.pad(x, ((0, 0), (0, 0), (0, 0), (0, cpi - cin)))

    def fold_w(wgt, ci, cpi_):
        co = wgt.shape[0]
        wt = jnp.transpose(wgt, (2, 3, 1, 0))          # (ky, kx, ci, co)
        wt = jnp.pad(wt, ((0, 0), (0, 0), (0, cpi_ - ci), (0, cpo - co)))
        return wt.reshape(9 * cpi_, cpo).astype(compute_dtype)

    w1_f = fold_w(w1, cin, cpi)
    w2_f = fold_w(w2, cout, cpo)
    pad_c = lambda v: jnp.pad(v, (0, cpo - cout))
    b1_c = pad_c(b1).reshape(1, cpo)
    b2_c = pad_c(b2).reshape(1, cpo)
    g1_p, be1_p = pad_c(g1), pad_c(be1)
    g2_p, be2_p = pad_c(g2), pad_c(be2)

    count = float(n * h * w)
    ones = jnp.ones((1, cpi), jnp.float32)
    zeros = jnp.zeros((1, cpi), jnp.float32)

    # conv1 (+ per-tile BN1 stats)
    y1, stats1 = _conv_block(x, ones, zeros, w1_f, b1_c,
                             th=th, apply_input_bn_relu=False)
    scale1, shift1 = _fold_bn(stats1, g1_p, be1_p, count)

    # BN1 + ReLU fused into conv2's front-end (+ per-tile BN2 stats)
    y2, stats2 = _conv_block(y1, scale1, shift1, w2_f, b2_c,
                             th=th, apply_input_bn_relu=True)
    scale2, shift2 = _fold_bn(stats2, g2_p, be2_p, count)

    # BN2 + ReLU epilogue
    out = _bn_relu(y2, scale2, shift2, th=th)

    return jnp.transpose(out[..., :cout], (0, 3, 1, 2))   # back to NCHW


# ----------------------------------------------------------------------------
# Pure-JAX reference (PyTorch training-mode BN semantics), NCHW.
# ----------------------------------------------------------------------------
def _reference(x, w1, b1, g1, be1, w2, b2, g2, be2):
    def block(hm, wgt, b, g, be):
        y = jax.lax.conv_general_dilated(
            hm, wgt, window_strides=(1, 1), padding=((1, 1), (1, 1)),
            dimension_numbers=("NCHW", "OIHW", "NCHW"))
        y = y + b[None, :, None, None]
        m = y.mean(axis=(0, 2, 3), keepdims=True)
        v = ((y - m) ** 2).mean(axis=(0, 2, 3), keepdims=True)
        y = (y - m) / jnp.sqrt(v + EPS)
        y = y * g[None, :, None, None] + be[None, :, None, None]
        return jnp.maximum(y, 0.0)

    return block(block(x, w1, b1, g1, be1), w2, b2, g2, be2)


if __name__ == "__main__":
    N, Cin, H, W, Cout = 2, 4, 16, 16, 8
    key = jax.random.PRNGKey(0)
    keys = jax.random.split(key, 10)

    x = jax.random.normal(keys[0], (N, Cin, H, W), jnp.float32)

    bound1 = (Cin * 9) ** -0.5
    w1 = jax.random.uniform(keys[1], (Cout, Cin, 3, 3), jnp.float32, -bound1, bound1)
    b1 = jax.random.uniform(keys[2], (Cout,), jnp.float32, -bound1, bound1)
    bound2 = (Cout * 9) ** -0.5
    w2 = jax.random.uniform(keys[3], (Cout, Cout, 3, 3), jnp.float32, -bound2, bound2)
    b2 = jax.random.uniform(keys[4], (Cout,), jnp.float32, -bound2, bound2)

    g1 = 1.0 + 0.1 * jax.random.normal(keys[5], (Cout,), jnp.float32)
    be1 = 0.1 * jax.random.normal(keys[6], (Cout,), jnp.float32)
    g2 = 1.0 + 0.1 * jax.random.normal(keys[7], (Cout,), jnp.float32)
    be2 = 0.1 * jax.random.normal(keys[8], (Cout,), jnp.float32)

    ref = _reference(x, w1, b1, g1, be1, w2, b2, g2, be2)

    # f32 MXU operands: tight check against the f32 XLA reference.
    out = double_conv(x, w1, b1, g1, be1, w2, b2, g2, be2)
    out = jax.block_until_ready(out)
    assert out.shape == (N, Cout, H, W)
    assert jnp.allclose(out, ref, atol=1e-3, rtol=1e-3), "f32 mismatch vs reference"

    # bf16 MXU operands (v6e/v7x fast path); accumulation & BN math stay f32.
    out_bf16 = double_conv(x, w1, b1, g1, be1, w2, b2, g2, be2,
                           compute_dtype=jnp.bfloat16)
    out_bf16 = jax.block_until_ready(out_bf16)
    assert jnp.allclose(out_bf16, ref, atol=5e-2, rtol=5e-2), "bf16 mismatch vs reference"

    print("KERNEL_OK")
</pallas_src>

<mosaic_0001>
module attributes {stable_mosaic.version = 11 : i64} {
  func.func @_conv_tile_kernel(%arg0: i32, %arg1: i32, %arg2: memref<1x1x10x18x128xf32, #tpu.memory_space<vmem>>, %arg3: memref<1x128xf32, #tpu.memory_space<vmem>>, %arg4: memref<1x128xf32, #tpu.memory_space<vmem>>, %arg5: memref<1152x128xf32, #tpu.memory_space<vmem>>, %arg6: memref<1x128xf32, #tpu.memory_space<vmem>>, %arg7: memref<1x8x16x128xf32, #tpu.memory_space<vmem>>, %arg8: memref<1x1x2x128xf32, #tpu.memory_space<vmem>>) attributes {dimension_semantics = [#tpu.dimension_semantics<parallel>, #tpu.dimension_semantics<parallel>], iteration_bounds = array<i64: 2, 2>, scalar_prefetch = 0 : i64, scratch_operands = 0 : i64, tpu.core_type = #tpu.core_type<tc>, window_params = [{transform_indices = @transform_0, window_bounds = array<i64: 1, 1, 10, 18, 128>}, {pipeline_mode = #tpu.pipeline_mode<synchronous>, transform_indices = @transform_1, window_bounds = array<i64: 1, 128>}, {pipeline_mode = #tpu.pipeline_mode<synchronous>, transform_indices = @transform_2, window_bounds = array<i64: 1, 128>}, {pipeline_mode = #tpu.pipeline_mode<synchronous>, transform_indices = @transform_3, window_bounds = array<i64: 1152, 128>}, {pipeline_mode = #tpu.pipeline_mode<synchronous>, transform_indices = @transform_4, window_bounds = array<i64: 1, 128>}, {transform_indices = @transform_5, window_bounds = array<i64: 1, 8, 16, 128>}, {transform_indices = @transform_6, window_bounds = array<i64: 1, 1, 2, 128>}]} {
    %c0 = arith.constant 0 : index
    %c0_0 = arith.constant 0 : index
    %c0_1 = arith.constant 0 : index
    %c0_2 = arith.constant 0 : index
    %c0_3 = arith.constant 0 : index
    %0 = vector.load %arg2[%c0, %c0_0, %c0_1, %c0_2, %c0_3] : memref<1x1x10x18x128xf32, #tpu.memory_space<vmem>>, vector<1x1x10x18x128xf32>
    %1 = vector.shape_cast %0 : vector<1x1x10x18x128xf32> to vector<10x18x128xf32>
    %2 = vector.extract_strided_slice %1 {offsets = [0, 0, 0], sizes = [8, 16, 128], strides = [1, 1, 1]} : vector<10x18x128xf32> to vector<8x16x128xf32>
    %3 = vector.extract_strided_slice %1 {offsets = [0, 1, 0], sizes = [8, 16, 128], strides = [1, 1, 1]} : vector<10x18x128xf32> to vector<8x16x128xf32>
    %4 = vector.extract_strided_slice %1 {offsets = [0, 2, 0], sizes = [8, 16, 128], strides = [1, 1, 1]} : vector<10x18x128xf32> to vector<8x16x128xf32>
    %5 = vector.extract_strided_slice %1 {offsets = [1, 0, 0], sizes = [8, 16, 128], strides = [1, 1, 1]} : vector<10x18x128xf32> to vector<8x16x128xf32>
    %6 = vector.extract_strided_slice %1 {offsets = [1, 1, 0], sizes = [8, 16, 128], strides = [1, 1, 1]} : vector<10x18x128xf32> to vector<8x16x128xf32>
    %7 = vector.extract_strided_slice %1 {offsets = [1, 2, 0], sizes = [8, 16, 128], strides = [1, 1, 1]} : vector<10x18x128xf32> to vector<8x16x128xf32>
    %8 = vector.extract_strided_slice %1 {offsets = [2, 0, 0], sizes = [8, 16, 128], strides = [1, 1, 1]} : vector<10x18x128xf32> to vector<8x16x128xf32>
    %9 = vector.extract_strided_slice %1 {offsets = [2, 1, 0], sizes = [8, 16, 128], strides = [1, 1, 1]} : vector<10x18x128xf32> to vector<8x16x128xf32>
    %10 = vector.extract_strided_slice %1 {offsets = [2, 2, 0], sizes = [8, 16, 128], strides = [1, 1, 1]} : vector<10x18x128xf32> to vector<8x16x128xf32>
    %11 = tpu.concatenate %2, %3, %4, %5, %6, %7, %8, %9, %10 in 2 : vector<8x16x128xf32>, vector<8x16x128xf32>, vector<8x16x128xf32>, vector<8x16x128xf32>, vector<8x16x128xf32>, vector<8x16x128xf32>, vector<8x16x128xf32>, vector<8x16x128xf32>, vector<8x16x128xf32> -> vector<8x16x1152xf32>
    %12 = vector.shape_cast %11 : vector<8x16x1152xf32> to vector<128x1152xf32>
    %c0_4 = arith.constant 0 : index
    %c0_5 = arith.constant 0 : index
    %13 = vector.load %arg5[%c0_4, %c0_5] : memref<1152x128xf32, #tpu.memory_space<vmem>>, vector<1152x128xf32>
    %cst = arith.constant dense<0.000000e+00> : vector<128x128xf32>
    %14 = tpu.matmul %12, %13, %cst {dimension_numbers = #tpu.dot_dimension_numbers<[1], [0], [0], [1], [0, 0, 1, 1], [], []>} : vector<128x1152xf32>, vector<1152x128xf32>, vector<128x128xf32> -> vector<128x128xf32>
    %c0_6 = arith.constant 0 : index
    %c0_7 = arith.constant 0 : index
    %15 = vector.load %arg6[%c0_6, %c0_7] : memref<1x128xf32, #tpu.memory_space<vmem>>, vector<1x128xf32>
    %16 = vector.broadcast %15 : vector<1x128xf32> to vector<128x128xf32>
    %17 = arith.addf %14, %16 : vector<128x128xf32>
    %18 = vector.shape_cast %17 : vector<128x128xf32> to vector<8x16x128xf32>
    %c0_8 = arith.constant 0 : index
    %c0_9 = arith.constant 0 : index
    %c0_10 = arith.constant 0 : index
    %c0_11 = arith.constant 0 : index
    %19 = vector.load %arg7[%c0_8, %c0_9, %c0_10, %c0_11] : memref<1x8x16x128xf32, #tpu.memory_space<vmem>>, vector<1x8x16x128xf32>
    %20 = vector.shape_cast %19 : vector<1x8x16x128xf32> to vector<8x16x128xf32>
    %21 = vector.shape_cast %18 : vector<8x16x128xf32> to vector<1x8x16x128xf32>
    tpu.vector_store %arg7[%c0_8, %c0_9, %c0_10, %c0_11], %21 {strides = array<i32>} : memref<1x8x16x128xf32, #tpu.memory_space<vmem>>, vector<1x8x16x128xf32>,
    %cst_12 = arith.constant dense<0.000000e+00> : vector<128xf32>
    %22 = vector.multi_reduction <add>, %17, %cst_12 [0] : vector<128x128xf32> to vector<128xf32>
    %23 = vector.shape_cast %22 : vector<128xf32> to vector<1x128xf32>
    %24 = arith.mulf %17, %17 : vector<128x128xf32>
    %cst_13 = arith.constant dense<0.000000e+00> : vector<128xf32>
    %25 = vector.multi_reduction <add>, %24, %cst_13 [0] : vector<128x128xf32> to vector<128xf32>
    %26 = vector.shape_cast %25 : vector<128xf32> to vector<1x128xf32>
    %27 = tpu.concatenate %23, %26 in 0 : vector<1x128xf32>, vector<1x128xf32> -> vector<2x128xf32>
    %c0_14 = arith.constant 0 : index
    %c0_15 = arith.constant 0 : index
    %c0_16 = arith.constant 0 : index
    %c0_17 = arith.constant 0 : index
    %28 = vector.load %arg8[%c0_14, %c0_15, %c0_16, %c0_17] : memref<1x1x2x128xf32, #tpu.memory_space<vmem>>, vector<1x1x2x128xf32>
    %29 = vector.shape_cast %28 : vector<1x1x2x128xf32> to vector<2x128xf32>
    %30 = vector.shape_cast %27 : vector<2x128xf32> to vector<1x1x2x128xf32>
    tpu.vector_store %arg8[%c0_14, %c0_15, %c0_16, %c0_17], %30 {strides = array<i32>} : memref<1x1x2x128xf32, #tpu.memory_space<vmem>>, vector<1x1x2x128xf32>,
    return
  }
  func.func @transform_0(%arg0: i32, %arg1: i32) -> (i32, i32, i32, i32, i32) {
    %c0_i32 = arith.constant 0 : i32
    %c0_i32_0 = arith.constant 0 : i32
    %c0_i32_1 = arith.constant 0 : i32
    %c0_i32_2 = arith.constant 0 : i32
    return %arg0, %arg1, %c0_i32, %c0_i32_0, %c0_i32_1 : i32, i32, i32, i32, i32
  }
  func.func @transform_1(%arg0: i32, %arg1: i32) -> (i32, i32) {
    %c0_i32 = arith.constant 0 : i32
    %c0_i32_0 = arith.constant 0 : i32
    %c0_i32_1 = arith.constant 0 : i32
    return %c0_i32, %c0_i32_0 : i32, i32
  }
  func.func @transform_2(%arg0: i32, %arg1: i32) -> (i32, i32) {
    %c0_i32 = arith.constant 0 : i32
    %c0_i32_0 = arith.constant 0 : i32
    %c0_i32_1 = arith.constant 0 : i32
    return %c0_i32, %c0_i32_0 : i32, i32
  }
  func.func @transform_3(%arg0: i32, %arg1: i32) -> (i32, i32) {
    %c0_i32 = arith.constant 0 : i32
    %c0_i32_0 = arith.constant 0 : i32
    %c0_i32_1 = arith.constant 0 : i32
    return %c0_i32, %c0_i32_0 : i32, i32
  }
  func.func @transform_4(%arg0: i32, %arg1: i32) -> (i32, i32) {
    %c0_i32 = arith.constant 0 : i32
    %c0_i32_0 = arith.constant 0 : i32
    %c0_i32_1 = arith.constant 0 : i32
    return %c0_i32, %c0_i32_0 : i32, i32
  }
  func.func @transform_5(%arg0: i32, %arg1: i32) -> (i32, i32, i32, i32) {
    %c0_i32 = arith.constant 0 : i32
    %c0_i32_0 = arith.constant 0 : i32
    %c0_i32_1 = arith.constant 0 : i32
    return %arg0, %arg1, %c0_i32, %c0_i32_0 : i32, i32, i32, i32
  }
  func.func @transform_6(%arg0: i32, %arg1: i32) -> (i32, i32, i32, i32) {
    %c0_i32 = arith.constant 0 : i32
    %c0_i32_0 = arith.constant 0 : i32
    %c0_i32_1 = arith.constant 0 : i32
    return %arg0, %arg1, %c0_i32, %c0_i32_0 : i32, i32, i32, i32
  }
}

module attributes {stable_mosaic.version = 11 : i64} {
  func.func @_conv_tile_kernel(%arg0: i32, %arg1: i32, %arg2: memref<1x1x10x18x128xf32, #tpu.memory_space<vmem>>, %arg3: memref<1x128xf32, #tpu.memory_space<vmem>>, %arg4: memref<1x128xf32, #tpu.memory_space<vmem>>, %arg5: memref<1152x128xf32, #tpu.memory_space<vmem>>, %arg6: memref<1x128xf32, #tpu.memory_space<vmem>>, %arg7: memref<1x8x16x128xf32, #tpu.memory_space<vmem>>, %arg8: memref<1x1x2x128xf32, #tpu.memory_space<vmem>>) attributes {dimension_semantics = [#tpu.dimension_semantics<parallel>, #tpu.dimension_semantics<parallel>], iteration_bounds = array<i64: 2, 2>, scalar_prefetch = 0 : i64, scratch_operands = 0 : i64, tpu.core_type = #tpu.core_type<tc>, window_params = [{transform_indices = @transform_0, window_bounds = array<i64: 1, 1, 10, 18, 128>}, {pipeline_mode = #tpu.pipeline_mode<synchronous>, transform_indices = @transform_1, window_bounds = array<i64: 1, 128>}, {pipeline_mode = #tpu.pipeline_mode<synchronous>, transform_indices = @transform_2, window_bounds = array<i64: 1, 128>}, {pipeline_mode = #tpu.pipeline_mode<synchronous>, transform_indices = @transform_3, window_bounds = array<i64: 1152, 128>}, {pipeline_mode = #tpu.pipeline_mode<synchronous>, transform_indices = @transform_4, window_bounds = array<i64: 1, 128>}, {transform_indices = @transform_5, window_bounds = array<i64: 1, 8, 16, 128>}, {transform_indices = @transform_6, window_bounds = array<i64: 1, 1, 2, 128>}]} {
    %c0 = arith.constant 0 : index
    %c0_0 = arith.constant 0 : index
    %c0_1 = arith.constant 0 : index
    %c0_2 = arith.constant 0 : index
    %c0_3 = arith.constant 0 : index
    %0 = vector.load %arg2[%c0, %c0_0, %c0_1, %c0_2, %c0_3] : memref<1x1x10x18x128xf32, #tpu.memory_space<vmem>>, vector<1x1x10x18x128xf32>
    %1 = vector.shape_cast %0 : vector<1x1x10x18x128xf32> to vector<10x18x128xf32>
    %c0_4 = arith.constant 0 : index
    %c0_5 = arith.constant 0 : index
    %2 = vector.load %arg3[%c0_4, %c0_5] : memref<1x128xf32, #tpu.memory_space<vmem>>, vector<1x128xf32>
    %3 = vector.shape_cast %2 : vector<1x128xf32> to vector<1x1x128xf32>
    %4 = vector.broadcast %3 : vector<1x1x128xf32> to vector<10x18x128xf32>
    %5 = arith.mulf %1, %4 : vector<10x18x128xf32>
    %c0_6 = arith.constant 0 : index
    %c0_7 = arith.constant 0 : index
    %6 = vector.load %arg4[%c0_6, %c0_7] : memref<1x128xf32, #tpu.memory_space<vmem>>, vector<1x128xf32>
    %7 = vector.shape_cast %6 : vector<1x128xf32> to vector<1x1x128xf32>
    %8 = vector.broadcast %7 : vector<1x1x128xf32> to vector<10x18x128xf32>
    %9 = arith.addf %5, %8 : vector<10x18x128xf32>
    %cst = arith.constant 0.000000e+00 : f32
    %10 = vector.broadcast %cst : f32 to vector<10x18x128xf32>
    %11 = arith.maximumf %9, %10 : vector<10x18x128xf32>
    %12 = tpu.iota {dimensions = array<i32: 0>} : vector<10x18x1xi32>
    %c8_i32 = arith.constant 8 : i32
    %13 = arith.muli %arg1, %c8_i32 : i32
    %14 = vector.broadcast %13 : i32 to vector<10x18x1xi32>
    %15 = arith.addi %12, %14 : vector<10x18x1xi32>
    %16 = tpu.iota {dimensions = array<i32: 1>} : vector<10x18x1xi32>
    %c1_i32 = arith.constant 1 : i32
    %17 = vector.broadcast %c1_i32 : i32 to vector<10x18x1xi32>
    %18 = arith.cmpi sge, %15, %17 : vector<10x18x1xi32>
    %c16_i32 = arith.constant 16 : i32
    %19 = vector.broadcast %c16_i32 : i32 to vector<10x18x1xi32>
    %20 = arith.cmpi sle, %15, %19 : vector<10x18x1xi32>
    %21 = arith.andi %18, %20 : vector<10x18x1xi1>
    %c1_i32_8 = arith.constant 1 : i32
    %22 = vector.broadcast %c1_i32_8 : i32 to vector<10x18x1xi32>
    %23 = arith.cmpi sge, %16, %22 : vector<10x18x1xi32>
    %24 = arith.andi %21, %23 : vector<10x18x1xi1>
    %c16_i32_9 = arith.constant 16 : i32
    %25 = vector.broadcast %c16_i32_9 : i32 to vector<10x18x1xi32>
    %26 = arith.cmpi sle, %16, %25 : vector<10x18x1xi32>
    %27 = arith.andi %24, %26 : vector<10x18x1xi1>
    %cst_10 = arith.constant 0.000000e+00 : f32
    %28 = vector.shape_cast %27 : vector<10x18x1xi1> to vector<10x18x1xi1>
    %29 = vector.broadcast %28 : vector<10x18x1xi1> to vector<10x18x128xi1>
    %30 = vector.broadcast %cst_10 : f32 to vector<10x18x128xf32>
    %31 = arith.select %29, %11, %30 : vector<10x18x128xi1>, vector<10x18x128xf32>
    %32 = vector.extract_strided_slice %31 {offsets = [0, 0, 0], sizes = [8, 16, 128], strides = [1, 1, 1]} : vector<10x18x128xf32> to vector<8x16x128xf32>
    %33 = vector.extract_strided_slice %31 {offsets = [0, 1, 0], sizes = [8, 16, 128], strides = [1, 1, 1]} : vector<10x18x128xf32> to vector<8x16x128xf32>
    %34 = vector.extract_strided_slice %31 {offsets = [0, 2, 0], sizes = [8, 16, 128], strides = [1, 1, 1]} : vector<10x18x128xf32> to vector<8x16x128xf32>
    %35 = vector.extract_strided_slice %31 {offsets = [1, 0, 0], sizes = [8, 16, 128], strides = [1, 1, 1]} : vector<10x18x128xf32> to vector<8x16x128xf32>
    %36 = vector.extract_strided_slice %31 {offsets = [1, 1, 0], sizes = [8, 16, 128], strides = [1, 1, 1]} : vector<10x18x128xf32> to vector<8x16x128xf32>
    %37 = vector.extract_strided_slice %31 {offsets = [1, 2, 0], sizes = [8, 16, 128], strides = [1, 1, 1]} : vector<10x18x128xf32> to vector<8x16x128xf32>
    %38 = vector.extract_strided_slice %31 {offsets = [2, 0, 0], sizes = [8, 16, 128], strides = [1, 1, 1]} : vector<10x18x128xf32> to vector<8x16x128xf32>
    %39 = vector.extract_strided_slice %31 {offsets = [2, 1, 0], sizes = [8, 16, 128], strides = [1, 1, 1]} : vector<10x18x128xf32> to vector<8x16x128xf32>
    %40 = vector.extract_strided_slice %31 {offsets = [2, 2, 0], sizes = [8, 16, 128], strides = [1, 1, 1]} : vector<10x18x128xf32> to vector<8x16x128xf32>
    %41 = tpu.concatenate %32, %33, %34, %35, %36, %37, %38, %39, %40 in 2 : vector<8x16x128xf32>, vector<8x16x128xf32>, vector<8x16x128xf32>, vector<8x16x128xf32>, vector<8x16x128xf32>, vector<8x16x128xf32>, vector<8x16x128xf32>, vector<8x16x128xf32>, vector<8x16x128xf32> -> vector<8x16x1152xf32>
    %42 = vector.shape_cast %41 : vector<8x16x1152xf32> to vector<128x1152xf32>
    %c0_11 = arith.constant 0 : index
    %c0_12 = arith.constant 0 : index
    %43 = vector.load %arg5[%c0_11, %c0_12] : memref<1152x128xf32, #tpu.memory_space<vmem>>, vector<1152x128xf32>
    %cst_13 = arith.constant dense<0.000000e+00> : vector<128x128xf32>
    %44 = tpu.matmul %42, %43, %cst_13 {dimension_numbers = #tpu.dot_dimension_numbers<[1], [0], [0], [1], [0, 0, 1, 1], [], []>} : vector<128x1152xf32>, vector<1152x128xf32>, vector<128x128xf32> -> vector<128x128xf32>
    %c0_14 = arith.constant 0 : index
    %c0_15 = arith.constant 0 : index
    %45 = vector.load %arg6[%c0_14, %c0_15] : memref<1x128xf32, #tpu.memory_space<vmem>>, vector<1x128xf32>
    %46 = vector.broadcast %45 : vector<1x128xf32> to vector<128x128xf32>
    %47 = arith.addf %44, %46 : vector<128x128xf32>
    %48 = vector.shape_cast %47 : vector<128x128xf32> to vector<8x16x128xf32>
    %c0_16 = arith.constant 0 : index
    %c0_17 = arith.constant 0 : index
    %c0_18 = arith.constant 0 : index
    %c0_19 = arith.constant 0 : index
    %49 = vector.load %arg7[%c0_16, %c0_17, %c0_18, %c0_19] : memref<1x8x16x128xf32, #tpu.memory_space<vmem>>, vector<1x8x16x128xf32>
    %50 = vector.shape_cast %49 : vector<1x8x16x128xf32> to vector<8x16x128xf32>
    %51 = vector.shape_cast %48 : vector<8x16x128xf32> to vector<1x8x16x128xf32>
    tpu.vector_store %arg7[%c0_16, %c0_17, %c0_18, %c0_19], %51 {strides = array<i32>} : memref<1x8x16x128xf32, #tpu.memory_space<vmem>>, vector<1x8x16x128xf32>,
    %cst_20 = arith.constant dense<0.000000e+00> : vector<128xf32>
    %52 = vector.multi_reduction <add>, %47, %cst_20 [0] : vector<128x128xf32> to vector<128xf32>
    %53 = vector.shape_cast %52 : vector<128xf32> to vector<1x128xf32>
    %54 = arith.mulf %47, %47 : vector<128x128xf32>
    %cst_21 = arith.constant dense<0.000000e+00> : vector<128xf32>
    %55 = vector.multi_reduction <add>, %54, %cst_21 [0] : vector<128x128xf32> to vector<128xf32>
    %56 = vector.shape_cast %55 : vector<128xf32> to vector<1x128xf32>
    %57 = tpu.concatenate %53, %56 in 0 : vector<1x128xf32>, vector<1x128xf32> -> vector<2x128xf32>
    %c0_22 = arith.constant 0 : index
    %c0_23 = arith.constant 0 : index
    %c0_24 = arith.constant 0 : index
    %c0_25 = arith.constant 0 : index
    %58 = vector.load %arg8[%c0_22, %c0_23, %c0_24, %c0_25] : memref<1x1x2x128xf32, #tpu.memory_space<vmem>>, vector<1x1x2x128xf32>
    %59 = vector.shape_cast %58 : vector<1x1x2x128xf32> to vector<2x128xf32>
    %60 = vector.shape_cast %57 : vector<2x128xf32> to vector<1x1x2x128xf32>
    tpu.vector_store %arg8[%c0_22, %c0_23, %c0_24, %c0_25], %60 {strides = array<i32>} : memref<1x1x2x128xf32, #tpu.memory_space<vmem>>, vector<1x1x2x128xf32>,
    return
  }
  func.func @transform_0(%arg0: i32, %arg1: i32) -> (i32, i32, i32, i32, i32) {
    %c0_i32 = arith.constant 0 : i32
    %c0_i32_0 = arith.constant 0 : i32
    %c0_i32_1 = arith.constant 0 : i32
    %c0_i32_2 = arith.constant 0 : i32
    return %arg0, %arg1, %c0_i32, %c0_i32_0, %c0_i32_1 : i32, i32, i32, i32, i32
  }
  func.func @transform_1(%arg0: i32, %arg1: i32) -> (i32, i32) {
    %c0_i32 = arith.constant 0 : i32
    %c0_i32_0 = arith.constant 0 : i32
    %c0_i32_1 = arith.constant 0 : i32
    return %c0_i32, %c0_i32_0 : i32, i32
  }
  func.func @transform_2(%arg0: i32, %arg1: i32) -> (i32, i32) {
    %c0_i32 = arith.constant 0 : i32
    %c0_i32_0 = arith.constant 0 : i32
    %c0_i32_1 = arith.constant 0 : i32
    return %c0_i32, %c0_i32_0 : i32, i32
  }
  func.func @transform_3(%arg0: i32, %arg1: i32) -> (i32, i32) {
    %c0_i32 = arith.constant 0 : i32
    %c0_i32_0 = arith.constant 0 : i32
    %c0_i32_1 = arith.constant 0 : i32
    return %c0_i32, %c0_i32_0 : i32, i32
  }
  func.func @transform_4(%arg0: i32, %arg1: i32) -> (i32, i32) {
    %c0_i32 = arith.constant 0 : i32
    %c0_i32_0 = arith.constant 0 : i32
    %c0_i32_1 = arith.constant 0 : i32
    return %c0_i32, %c0_i32_0 : i32, i32
  }
  func.func @transform_5(%arg0: i32, %arg1: i32) -> (i32, i32, i32, i32) {
    %c0_i32 = arith.constant 0 : i32
    %c0_i32_0 = arith.constant 0 : i32
    %c0_i32_1 = arith.constant 0 : i32
    return %arg0, %arg1, %c0_i32, %c0_i32_0 : i32, i32, i32, i32
  }
  func.func @transform_6(%arg0: i32, %arg1: i32) -> (i32, i32, i32, i32) {
    %c0_i32 = arith.constant 0 : i32
    %c0_i32_0 = arith.constant 0 : i32
    %c0_i32_1 = arith.constant 0 : i32
    return %arg0, %arg1, %c0_i32, %c0_i32_0 : i32, i32, i32, i32
  }
}

module attributes {stable_mosaic.version = 11 : i64} {
  func.func @_bn_relu_kernel(%arg0: i32, %arg1: i32, %arg2: memref<1x8x16x128xf32, #tpu.memory_space<vmem>>, %arg3: memref<1x128xf32, #tpu.memory_space<vmem>>, %arg4: memref<1x128xf32, #tpu.memory_space<vmem>>, %arg5: memref<1x8x16x128xf32, #tpu.memory_space<vmem>>) attributes {dimension_semantics = [#tpu.dimension_semantics<parallel>, #tpu.dimension_semantics<parallel>], iteration_bounds = array<i64: 2, 2>, scalar_prefetch = 0 : i64, scratch_operands = 0 : i64, tpu.core_type = #tpu.core_type<tc>, window_params = [{transform_indices = @transform_0, window_bounds = array<i64: 1, 8, 16, 128>}, {pipeline_mode = #tpu.pipeline_mode<synchronous>, transform_indices = @transform_1, window_bounds = array<i64: 1, 128>}, {pipeline_mode = #tpu.pipeline_mode<synchronous>, transform_indices = @transform_2, window_bounds = array<i64: 1, 128>}, {transform_indices = @transform_3, window_bounds = array<i64: 1, 8, 16, 128>}]} {
    %c0 = arith.constant 0 : index
    %c0_0 = arith.constant 0 : index
    %c0_1 = arith.constant 0 : index
    %c0_2 = arith.constant 0 : index
    %0 = vector.load %arg2[%c0, %c0_0, %c0_1, %c0_2] : memref<1x8x16x128xf32, #tpu.memory_space<vmem>>, vector<1x8x16x128xf32>
    %1 = vector.shape_cast %0 : vector<1x8x16x128xf32> to vector<8x16x128xf32>
    %c0_3 = arith.constant 0 : index
    %c0_4 = arith.constant 0 : index
    %2 = vector.load %arg3[%c0_3, %c0_4] : memref<1x128xf32, #tpu.memory_space<vmem>>, vector<1x128xf32>
    %3 = vector.shape_cast %2 : vector<1x128xf32> to vector<1x1x128xf32>
    %4 = vector.broadcast %3 : vector<1x1x128xf32> to vector<8x16x128xf32>
    %5 = arith.mulf %1, %4 : vector<8x16x128xf32>
    %c0_5 = arith.constant 0 : index
    %c0_6 = arith.constant 0 : index
    %6 = vector.load %arg4[%c0_5, %c0_6] : memref<1x128xf32, #tpu.memory_space<vmem>>, vector<1x128xf32>
    %7 = vector.shape_cast %6 : vector<1x128xf32> to vector<1x1x128xf32>
    %8 = vector.broadcast %7 : vector<1x1x128xf32> to vector<8x16x128xf32>
    %9 = arith.addf %5, %8 : vector<8x16x128xf32>
    %cst = arith.constant 0.000000e+00 : f32
    %10 = vector.broadcast %cst : f32 to vector<8x16x128xf32>
    %11 = arith.maximumf %9, %10 : vector<8x16x128xf32>
    %c0_7 = arith.constant 0 : index
    %c0_8 = arith.constant 0 : index
    %c0_9 = arith.constant 0 : index
    %c0_10 = arith.constant 0 : index
    %12 = vector.load %arg5[%c0_7, %c0_8, %c0_9, %c0_10] : memref<1x8x16x128xf32, #tpu.memory_space<vmem>>, vector<1x8x16x128xf32>
    %13 = vector.shape_cast %12 : vector<1x8x16x128xf32> to vector<8x16x128xf32>
    %14 = vector.shape_cast %11 : vector<8x16x128xf32> to vector<1x8x16x128xf32>
    tpu.vector_store %arg5[%c0_7, %c0_8, %c0_9, %c0_10], %14 {strides = array<i32>} : memref<1x8x16x128xf32, #tpu.memory_space<vmem>>, vector<1x8x16x128xf32>,
    return
  }
  func.func @transform_0(%arg0: i32, %arg1: i32) -> (i32, i32, i32, i32) {
    %c0_i32 = arith.constant 0 : i32
    %c0_i32_0 = arith.constant 0 : i32
    %c0_i32_1 = arith.constant 0 : i32
    return %arg0, %arg1, %c0_i32, %c0_i32_0 : i32, i32, i32, i32
  }
  func.func @transform_1(%arg0: i32, %arg1: i32) -> (i32, i32) {
    %c0_i32 = arith.constant 0 : i32
    %c0_i32_0 = arith.constant 0 : i32
    %c0_i32_1 = arith.constant 0 : i32
    return %c0_i32, %c0_i32_0 : i32, i32
  }
  func.func @transform_2(%arg0: i32, %arg1: i32) -> (i32, i32) {
    %c0_i32 = arith.constant 0 : i32
    %c0_i32_0 = arith.constant 0 : i32
    %c0_i32_1 = arith.constant 0 : i32
    return %c0_i32, %c0_i32_0 : i32, i32
  }
  func.func @transform_3(%arg0: i32, %arg1: i32) -> (i32, i32, i32, i32) {
    %c0_i32 = arith.constant 0 : i32
    %c0_i32_0 = arith.constant 0 : i32
    %c0_i32_1 = arith.constant 0 : i32
    return %arg0, %arg1, %c0_i32, %c0_i32_0 : i32, i32, i32, i32
  }
}

</mosaic_0001>

<llo_original>
// kernel: double_conv.3
$region0: #{double_conv.3}
  #allocation0 [shape = 'u32[]', space=smem, size = 0x4, offset = 0x4, fixed_abs, tag = 'smem constant byte address 0x4 - core index']
  #allocation1 [shape = 'u32[72,128]{1,0:T(1,128)}', space=vmem, size = 0x9000, scoped, tag = 'internal scratch']
  %s0 = inlined_call_operand.vmem [shape: f32[2,2,10,18,128], index: 0, kind: input, shape index: {}]
  %s1 = inlined_call_operand.vmem [shape: f32[1,128], index: 1, kind: input, shape index: {}]
  %s2 = inlined_call_operand.vmem [shape: f32[1,128], index: 2, kind: input, shape index: {}]
  %s3 = inlined_call_operand.vmem [shape: f32[1152,128], index: 3, kind: input, shape index: {}]
  %s4 = inlined_call_operand.vmem [shape: f32[1,128], index: 4, kind: input, shape index: {}]
  %s5 = inlined_call_operand.vmem [shape: f32[2,16,16,128], index: 5, kind: output, shape index: {0}]
  %s6 = inlined_call_operand.vmem [shape: f32[2,2,2,128], index: 6, kind: output, shape index: {1}]
  %7 = xla_tuple %s5, %s6
  %s8 = sld [smem:[#allocation0]]
  $region61: #{double_conv.3} parent=0
    _
  %s10 = ssub.s32 1, %s8
  %s11 = scalar_select 0, %s10, %s8
  loop: start=0, step=1, limit=6
  $region2: #{double_conv.3} parent=0 // loop_pre_header
    _
  $region3: #{double_conv.3} parent=0 // loop_header
    %s13 = sphi 0, %s17
    %p14 = scmp.ge.s32.totalorder %s13, 6
    %s20 = sphi 0, %s32
    %s21 = sphi 0, %s28
    %s22 = sphi 0, %s20
    %s23 = sphi 0, %s21
    %s24 = sphi 0, %s22
    %s25 = sphi 0, %s23
    %s37 = sphi 0, %s39
    %s40 = sphi 0, %s37
    %s41 = sphi 0, %s40
    %s57 = sphi 0, %s41
    %s61 = sphi 0, %s61
    %s63 = sphi 0, %s61
    %s64 = sphi 0, %s63
    %s78 = sphi 0, %s64
    %s82 = sphi 0, %s82
    %s84 = sphi 0, %s82
    %s85 = sphi 0, %s84
    %s99 = sphi 0, %s85
    %s103 = sphi 0, %s103
    %s105 = sphi 0, %s103
    %s106 = sphi 0, %s105
    %s120 = sphi 0, %s106
    %s124 = sphi 0, %s124
    %s126 = sphi 0, %s124
    %s127 = sphi 0, %s126
    %s141 = sphi 0, %s127
    %s149 = sphi 0, %s151
    %s152 = sphi 0, %s149
    %s153 = sphi 0, %s152
    %s169 = sphi 0, %s153
    %s177 = sphi 0, %s179
    %s180 = sphi 0, %s177
    %s181 = sphi 0, %s180
    %s197 = sphi 0, %s181
  $region4: #{double_conv.3} parent=0 // loop_header_branch
    %16 = sbr.rel (%p14) target = $region8
  $region5: #{double_conv.3} parent=0 // loop_body
    %s18 = ssub.s32 %s13, 1
    %s19 = ssub.s32 %s13, 2
    %s26 = sadd.s32 1, %s21
    %p27 = scmp.ge.s32.totalorder %s26, 2
    %s28 = scalar_select %p27, 0, %s26
    %s29 = sadd.s32 1, %s20
    %s30 = scalar_select %p27, %s29, %s20
    %p31 = scmp.ge.s32.totalorder %s30, 2
    %s32 = scalar_select %p31, 0, %s30
    %s33 = ssub.s32 %s20, %s32
    %s34 = ssub.s32 %s21, %s28
    %s35 = sor.u32 %s33, %s34
    %p36 = scmp.eq.s32.totalorder %s35, 0
    %s38 = sadd.s32 %s37, 1
    %s39 = scalar_select %p36, %s37, %s38
    %p42 = pneg %p36
    %p43 = scmp.eq.s32.totalorder %s13, 3
    %p44 = por %p42, %p43
    %p45 = scmp.ne.s32.totalorder %s37, %s40
    %p46 = scmp.eq.s32.totalorder %s13, 0
    %p47 = por %p45, %p46
    %p48 = scmp.ne.s32.totalorder %s37, %s40
    %p49 = scmp.eq.s32.totalorder %s18, 3
    %p50 = por %p48, %p49
    %p51 = scmp.ne.s32.totalorder %s40, %s41
    %p52 = scmp.eq.s32.totalorder %s18, 0
    %p53 = por %p51, %p52
    %p54 = scmp.ne.s32.totalorder %s40, %s41
    %p55 = scmp.eq.s32.totalorder %s19, 3
    %p56 = por %p54, %p55
    %p58 = scmp.ne.s32.totalorder %s41, %s57
    %p59 = scmp.eq.s32.totalorder %s19, 0
    %p60 = por %p58, %p59
    %s62 = sadd.s32 %s61, 1
    %p65 = scmp.eq.s32.totalorder %s13, 3
    %p66 = scmp.ne.s32.totalorder %s61, %s63
    %p67 = scmp.eq.s32.totalorder %s13, 0
    %p68 = por %p66, %p67
    %p69 = scmp.ne.s32.totalorder %s61, %s63
    %p70 = scmp.eq.s32.totalorder %s18, 3
    %p71 = por %p69, %p70
    %p72 = scmp.ne.s32.totalorder %s63, %s64
    %p73 = scmp.eq.s32.totalorder %s18, 0
    %p74 = por %p72, %p73
    %p75 = scmp.ne.s32.totalorder %s63, %s64
    %p76 = scmp.eq.s32.totalorder %s19, 3
    %p77 = por %p75, %p76
    %p79 = scmp.ne.s32.totalorder %s64, %s78
    %p80 = scmp.eq.s32.totalorder %s19, 0
    %p81 = por %p79, %p80
    %s83 = sadd.s32 %s82, 1
    %p86 = scmp.eq.s32.totalorder %s13, 3
    %p87 = scmp.ne.s32.totalorder %s82, %s84
    %p88 = scmp.eq.s32.totalorder %s13, 0
    %p89 = por %p87, %p88
    %p90 = scmp.ne.s32.totalorder %s82, %s84
    %p91 = scmp.eq.s32.totalorder %s18, 3
    %p92 = por %p90, %p91
    %p93 = scmp.ne.s32.totalorder %s84, %s85
    %p94 = scmp.eq.s32.totalorder %s18, 0
    %p95 = por %p93, %p94
    %p96 = scmp.ne.s32.totalorder %s84, %s85
    %p97 = scmp.eq.s32.totalorder %s19, 3
    %p98 = por %p96, %p97
    %p100 = scmp.ne.s32.totalorder %s85, %s99
    %p101 = scmp.eq.s32.totalorder %s19, 0
    %p102 = por %p100, %p101
    %s104 = sadd.s32 %s103, 1
    %p107 = scmp.eq.s32.totalorder %s13, 3
    %p108 = scmp.ne.s32.totalorder %s103, %s105
    %p109 = scmp.eq.s32.totalorder %s13, 0
    %p110 = por %p108, %p109
    %p111 = scmp.ne.s32.totalorder %s103, %s105
    %p112 = scmp.eq.s32.totalorder %s18, 3
    %p113 = por %p111, %p112
    %p114 = scmp.ne.s32.totalorder %s105, %s106
    %p115 = scmp.eq.s32.totalorder %s18, 0
    %p116 = por %p114, %p115
    %p117 = scmp.ne.s32.totalorder %s105, %s106
    %p118 = scmp.eq.s32.totalorder %s19, 3
    %p119 = por %p117, %p118
    %p121 = scmp.ne.s32.totalorder %s106, %s120
    %p122 = scmp.eq.s32.totalorder %s19, 0
    %p123 = por %p121, %p122
    %s125 = sadd.s32 %s124, 1
    %p128 = scmp.eq.s32.totalorder %s13, 3
    %p129 = scmp.ne.s32.totalorder %s124, %s126
    %p130 = scmp.eq.s32.totalorder %s13, 0
    %p131 = por %p129, %p130
    %p132 = scmp.ne.s32.totalorder %s124, %s126
    %p133 = scmp.eq.s32.totalorder %s18, 3
    %p134 = por %p132, %p133
    %p135 = scmp.ne.s32.totalorder %s126, %s127
    %p136 = scmp.eq.s32.totalorder %s18, 0
    %p137 = por %p135, %p136
    %p138 = scmp.ne.s32.totalorder %s126, %s127
    %p139 = scmp.eq.s32.totalorder %s19, 3
    %p140 = por %p138, %p139
    %p142 = scmp.ne.s32.totalorder %s127, %s141
    %p143 = scmp.eq.s32.totalorder %s19, 0
    %p144 = por %p142, %p143
    %s145 = ssub.s32 %s20, %s32
    %s146 = ssub.s32 %s21, %s28
    %s147 = sor.u32 %s145, %s146
    %p148 = scmp.eq.s32.totalorder %s147, 0
    %s150 = sadd.s32 %s149, 1
    %s151 = scalar_select %p148, %s149, %s150
    %p154 = pneg %p148
    %p155 = scmp.eq.s32.totalorder %s13, 3
    %p156 = por %p154, %p155
    %p157 = scmp.ne.s32.totalorder %s149, %s152
    %p158 = scmp.eq.s32.totalorder %s13, 0
    %p159 = por %p157, %p158
    %p160 = scmp.ne.s32.totalorder %s149, %s152
    %p161 = scmp.eq.s32.totalorder %s18, 3
    %p162 = por %p160, %p161
    %p163 = scmp.ne.s32.totalorder %s152, %s153
    %p164 = scmp.eq.s32.totalorder %s18, 0
    %p165 = por %p163, %p164
    %p166 = scmp.ne.s32.totalorder %s152, %s153
    %p167 = scmp.eq.s32.totalorder %s19, 3
    %p168 = por %p166, %p167
    %p170 = scmp.ne.s32.totalorder %s153, %s169
    %p171 = scmp.eq.s32.totalorder %s19, 0
    %p172 = por %p170, %p171
    %s173 = ssub.s32 %s20, %s32
    %s174 = ssub.s32 %s21, %s28
    %s175 = sor.u32 %s173, %s174
    %p176 = scmp.eq.s32.totalorder %s175, 0
    %s178 = sadd.s32 %s177, 1
    %s179 = scalar_select %p176, %s177, %s178
    %p182 = pneg %p176
    %p183 = scmp.eq.s32.totalorder %s13, 3
    %p184 = por %p182, %p183
    %p185 = scmp.ne.s32.totalorder %s177, %s180
    %p186 = scmp.eq.s32.totalorder %s13, 0
    %p187 = por %p185, %p186
    %p188 = scmp.ne.s32.totalorder %s177, %s180
    %p189 = scmp.eq.s32.totalorder %s18, 3
    %p190 = por %p188, %p189
    %p191 = scmp.ne.s32.totalorder %s180, %s181
    %p192 = scmp.eq.s32.totalorder %s18, 0
    %p193 = por %p191, %p192
    %p194 = scmp.ne.s32.totalorder %s180, %s181
    %p195 = scmp.eq.s32.totalorder %s19, 3
    %p196 = por %p194, %p195
    %p198 = scmp.ne.s32.totalorder %s181, %s197
    %p199 = scmp.eq.s32.totalorder %s19, 0
    %p200 = por %p198, %p199
    %p201 = scmp.le.s32.totalorder 1, %s13
    %p202 = scmp.lt.s32.totalorder %s13, 5
    %p203 = pnand %p201, %p202
    %p204 = pneg %p203
    // Predicated region
    $region9: #{double_conv.3} parent=5 // pred_check
      _
    $region10: #{double_conv.3} parent=5 // pred_check_branch
      %206 = sbr.rel (%p203) target = $region12
    $region11: #{double_conv.3} parent=5 // pred_region
      %s207 = ssub.s32 %s13, 1
      // Predicated region
      $region13: #{double_conv.3} parent=11 // pred_check
        %p208 = pneg %p74
      $region14: #{double_conv.3} parent=11 // pred_check_branch
        %210 = sbr.rel (%p208) target = $region16
      $region15: #{double_conv.3} parent=11 // pred_region
        _
      $region16: #{double_conv.3} parent=11 // pred_fallthru
        _
      // Predicated region
      $region17: #{double_conv.3} parent=11 // pred_check
        %p211 = pneg %p95
      $region18: #{double_conv.3} parent=11 // pred_check_branch
        %213 = sbr.rel (%p211) target = $region20
      $region19: #{double_conv.3} parent=11 // pred_region
        _
      $region20: #{double_conv.3} parent=11 // pred_fallthru
        _
      // Predicated region
      $region21: #{double_conv.3} parent=11 // pred_check
        %p214 = pneg %p116
      $region22: #{double_conv.3} parent=11 // pred_check_branch
        %216 = sbr.rel (%p214) target = $region24
      $region23: #{double_conv.3} parent=11 // pred_region
        _
      $region24: #{double_conv.3} parent=11 // pred_fallthru
        _
      // Predicated region
      $region25: #{double_conv.3} parent=11 // pred_check
        %p217 = pneg %p137
      $region26: #{double_conv.3} parent=11 // pred_check_branch
        %219 = sbr.rel (%p217) target = $region28
      $region27: #{double_conv.3} parent=11 // pred_region
        _
      $region28: #{double_conv.3} parent=11 // pred_fallthru
        _
    $region12: #{double_conv.3} parent=5 // pred_fallthru
      _
    %p220 = scmp.lt.s32.totalorder %s13, 4
    // Predicated region
    $region29: #{double_conv.3} parent=5 // pred_check
      %p221 = pneg %p220
    $region30: #{double_conv.3} parent=5 // pred_check_branch
      %223 = sbr.rel (%p221) target = $region32
    $region31: #{double_conv.3} parent=5 // pred_region
      // Predicated region
      $region33: #{double_conv.3} parent=31 // pred_check
        %p224 = pneg %p47
      $region34: #{double_conv.3} parent=31 // pred_check_branch
        %226 = sbr.rel (%p224) target = $region36
      $region35: #{double_conv.3} parent=31 // pred_region
        %p227 = scmp.lt.s32.totalorder %s20, 1
        %s228 = scalar_select %p227, %s20, 1
        %p229 = scmp.lt.s32.totalorder %s21, 1
        %s230 = scalar_select %p229, %s21, 1
        %s231 = smul.addr %s230, 30
        %s232 = smul.addr %s228, 60
        %s233 = sadd.s32 %s231, %s232
        %s234 = smul.addr %s233, 8
        %s235 = scalar_lea.vmem %s0, %s234
      $region36: #{double_conv.3} parent=31 // pred_fallthru
        _
    $region32: #{double_conv.3} parent=5 // pred_fallthru
      _
    %p236 = scmp.le.s32.totalorder 1, %s13
    %p237 = scmp.lt.s32.totalorder %s13, 5
    %p238 = pnand %p236, %p237
    %p239 = pneg %p238
    // Predicated region
    $region37: #{double_conv.3} parent=5 // pred_check
      _
    $region38: #{double_conv.3} parent=5 // pred_check_branch
      %241 = sbr.rel (%p238) target = $region40
    $region39: #{double_conv.3} parent=5 // pred_region
      %s242 = ssub.s32 %s13, 1
      %p243 = scmp.lt.s32.totalorder %s22, 1
      %s244 = scalar_select %p243, %s22, 1
      %p245 = scmp.lt.s32.totalorder %s23, 1
      %s246 = scalar_select %p245, %s23, 1
      %s247 = smul.addr %s246, 30
      %s248 = smul.addr %s244, 60
      %s249 = sadd.s32 %s247, %s248
      %s250 = smul.addr %s249, 8
      %s251 = scalar_lea.vmem %s0, %s250
      %p252 = pneg %p53
      %p253 = pneg %p50
      %p254 = pneg %p74
      %p255 = pneg %p71
      %p256 = pneg %p95
      %p257 = pneg %p92
      %p258 = pneg %p116
      %p259 = pneg %p113
      %p260 = pneg %p137
      %p261 = pneg %p134
      %p262 = pneg %p165
      %p263 = pneg %p162
      %s264 = smul.u32 8, %s23
      %p265 = scmp.lt.s32.totalorder %s22, 1
      %s266 = scalar_select %p265, %s22, 1
      %p267 = scmp.lt.s32.totalorder %s264, 15
      %s268 = scalar_select %p267, %s264, 15
      %s269 = smul.addr %s268, 2
      %s270 = smul.addr %s266, 32
      %s271 = sadd.s32 %s269, %s270
      %s272 = smul.addr %s271, 8
      %s273 = scalar_lea.vmem %s5, %s272
      %p274 = pneg %p193
      %p275 = pneg %p190
      %p276 = scmp.lt.s32.totalorder %s22, 1
      %s277 = scalar_select %p276, %s22, 1
      %p278 = scmp.lt.s32.totalorder %s23, 1
      %s279 = scalar_select %p278, %s23, 1
      %s280 = smul.addr %s277, 2
      %s281 = sadd.s32 %s279, %s280
      %s282 = smul.addr %s281, 2
      %s283 = scalar_lea.vmem %s6, %s282
      %p284 = scmp.lt.s32.totalorder %s22, 1
      %s285 = scalar_select %p284, %s22, 1
      %p286 = scmp.lt.s32.totalorder %s23, 1
      %s287 = scalar_select %p286, %s23, 1
      %s288 = smul.addr %s287, 30
      %s289 = smul.addr %s285, 60
      %s290 = sadd.s32 %s288, %s289
      %s291 = smul.addr %s290, 8
      %s292 = scalar_lea.vmem %s0, %s291
      %s293 = smul.u32 8, %s23
      %p294 = scmp.lt.s32.totalorder %s22, 1
      %s295 = scalar_select %p294, %s22, 1
      %p296 = scmp.lt.s32.totalorder %s293, 15
      %s297 = scalar_select %p296, %s293, 15
      %s298 = smul.addr %s297, 2
      %s299 = smul.addr %s295, 32
      %s300 = sadd.s32 %s298, %s299
      %s301 = smul.addr %s300, 8
      %s302 = scalar_lea.vmem %s5, %s301
      %s303 = smul.u32 8, %s23
      %p304 = scmp.lt.s32.totalorder %s22, 1
      %s305 = scalar_select %p304, %s22, 1
      %p306 = scmp.lt.s32.totalorder %s23, 1
      %s307 = scalar_select %p306, %s23, 1
      %s308 = smul.addr %s305, 2
      %s309 = sadd.s32 %s307, %s308
      %s310 = smul.addr %s309, 2
      %s311 = scalar_lea.vmem %s6, %s310
      %v312 = vld [vmem:[%s292] sm:$0xff]
      %v313 = vld [vmem:[%s292 + $0x8] sm:$0xff]
      %v314 = vld [vmem:[%s292 + $0x10] sm:$0x3]
      %v315 = vld [vmem:[%s292 + $0x18] sm:$0xff]
      %v316 = vld [vmem:[%s292 + $0x20] sm:$0xff]
      %v317 = vld [vmem:[%s292 + $0x28] sm:$0x3]
      %v318 = vld [vmem:[%s292 + $0x30] sm:$0xff]
      %v319 = vld [vmem:[%s292 + $0x38] sm:$0xff]
      %v320 = vld [vmem:[%s292 + $0x40] sm:$0x3]
      %v321 = vld [vmem:[%s292 + $0x48] sm:$0xff]
      %v322 = vld [vmem:[%s292 + $0x50] sm:$0xff]
      %v323 = vld [vmem:[%s292 + $0x58] sm:$0x3]
      %v324 = vld [vmem:[%s292 + $0x60] sm:$0xff]
      %v325 = vld [vmem:[%s292 + $0x68] sm:$0xff]
      %v326 = vld [vmem:[%s292 + $0x70] sm:$0x3]
      %v327 = vld [vmem:[%s292 + $0x78] sm:$0xff]
      %v328 = vld [vmem:[%s292 + $0x80] sm:$0xff]
      %v329 = vld [vmem:[%s292 + $0x88] sm:$0x3]
      %v330 = vld [vmem:[%s292 + $0x90] sm:$0xff]
      %v331 = vld [vmem:[%s292 + $0x98] sm:$0xff]
      %v332 = vld [vmem:[%s292 + $0xa0] sm:$0x3]
      %v333 = vld [vmem:[%s292 + $0xa8] sm:$0xff]
      %v334 = vld [vmem:[%s292 + $0xb0] sm:$0xff]
      %v335 = vld [vmem:[%s292 + $0xb8] sm:$0x3]
      %v336 = vld [vmem:[%s292 + $0xc0] sm:$0xff]
      %v337 = vld [vmem:[%s292 + $0xc8] sm:$0xff]
      %v338 = vld [vmem:[%s292 + $0xd0] sm:$0x3]
      %v339 = vld [vmem:[%s292 + $0xd8] sm:$0xff]
      %v340 = vld [vmem:[%s292 + $0xe0] sm:$0xff]
      %v341 = vld [vmem:[%s292 + $0xe8] sm:$0x3]
      %vm366 = vcmask 1046528
      %v367 = vrot.slane %v312, 1
      %v368 = vrot.slane %v313, 1
      %v369 = vsel %vm366, %v367, %v368
      %v370 = vrot.slane %v314, 1
      %v371 = vsel %vm366, %v368, %v370
      %v372 = vrot.slane %v315, 1
      %v373 = vrot.slane %v316, 1
      %v374 = vsel %vm366, %v372, %v373
      %v375 = vrot.slane %v317, 1
      %v376 = vsel %vm366, %v373, %v375
      %v377 = vrot.slane %v318, 1
      %v378 = vrot.slane %v319, 1
      %v379 = vsel %vm366, %v377, %v378
      %v380 = vrot.slane %v320, 1
      %v381 = vsel %vm366, %v378, %v380
      %v382 = vrot.slane %v321, 1
      %v383 = vrot.slane %v322, 1
      %v384 = vsel %vm366, %v382, %v383
      %v385 = vrot.slane %v323, 1
      %v386 = vsel %vm366, %v383, %v385
      %v387 = vrot.slane %v324, 1
      %v388 = vrot.slane %v325, 1
      %v389 = vsel %vm366, %v387, %v388
      %v390 = vrot.slane %v326, 1
      %v391 = vsel %vm366, %v388, %v390
      %v392 = vrot.slane %v327, 1
      %v393 = vrot.slane %v328, 1
      %v394 = vsel %vm366, %v392, %v393
      %v395 = vrot.slane %v329, 1
      %v396 = vsel %vm366, %v393, %v395
      %v397 = vrot.slane %v330, 1
      %v398 = vrot.slane %v331, 1
      %v399 = vsel %vm366, %v397, %v398
      %v400 = vrot.slane %v332, 1
      %v401 = vsel %vm366, %v398, %v400
      %v402 = vrot.slane %v333, 1
      %v403 = vrot.slane %v334, 1
      %v404 = vsel %vm366, %v402, %v403
      %v405 = vrot.slane %v335, 1
      %v406 = vsel %vm366, %v403, %v405
      %vm423 = vcmask 1045504
      %v424 = vrot.slane %v312, 2
      %v425 = vrot.slane %v313, 2
      %v426 = vsel %vm423, %v424, %v425
      %v427 = vrot.slane %v314, 2
      %v428 = vsel %vm423, %v425, %v427
      %v429 = vrot.slane %v315, 2
      %v430 = vrot.slane %v316, 2
      %v431 = vsel %vm423, %v429, %v430
      %v432 = vrot.slane %v317, 2
      %v433 = vsel %vm423, %v430, %v432
      %v434 = vrot.slane %v318, 2
      %v435 = vrot.slane %v319, 2
      %v436 = vsel %vm423, %v434, %v435
      %v437 = vrot.slane %v320, 2
      %v438 = vsel %vm423, %v435, %v437
      %v439 = vrot.slane %v321, 2
      %v440 = vrot.slane %v322, 2
      %v441 = vsel %vm423, %v439, %v440
      %v442 = vrot.slane %v323, 2
      %v443 = vsel %vm423, %v440, %v442
      %v444 = vrot.slane %v324, 2
      %v445 = vrot.slane %v325, 2
      %v446 = vsel %vm423, %v444, %v445
      %v447 = vrot.slane %v326, 2
      %v448 = vsel %vm423, %v445, %v447
      %v449 = vrot.slane %v327, 2
      %v450 = vrot.slane %v328, 2
      %v451 = vsel %vm423, %v449, %v450
      %v452 = vrot.slane %v329, 2
      %v453 = vsel %vm423, %v450, %v452
      %v454 = vrot.slane %v330, 2
      %v455 = vrot.slane %v331, 2
      %v456 = vsel %vm423, %v454, %v455
      %v457 = vrot.slane %v332, 2
      %v458 = vsel %vm423, %v455, %v457
      %v459 = vrot.slane %v333, 2
      %v460 = vrot.slane %v334, 2
      %v461 = vsel %vm423, %v459, %v460
      %v462 = vrot.slane %v335, 2
      %v463 = vsel %vm423, %v460, %v462
      %v483 = vrot.slane %v336, 1
      %v484 = vrot.slane %v337, 1
      %v485 = vsel %vm366, %v483, %v484
      %v486 = vrot.slane %v338, 1
      %v487 = vsel %vm366, %v484, %v486
      %v490 = vrot.slane %v336, 2
      %v491 = vrot.slane %v337, 2
      %v492 = vsel %vm423, %v490, %v491
      %v493 = vrot.slane %v338, 2
      %v494 = vsel %vm423, %v491, %v493
      %v500 = vrot.slane %v339, 1
      %v501 = vrot.slane %v340, 1
      %v502 = vsel %vm366, %v500, %v501
      %v503 = vrot.slane %v341, 1
      %v504 = vsel %vm366, %v501, %v503
      %v507 = vrot.slane %v339, 2
      %v508 = vrot.slane %v340, 2
      %v509 = vsel %vm423, %v507, %v508
      %v510 = vrot.slane %v341, 2
      %v511 = vsel %vm423, %v508, %v510
      %v514 = vld [vmem:[%s3] sm:$0xff]
      %v515 = vld [vmem:[%s3 + $0x8] sm:$0xff]
      %v516 = vld [vmem:[%s3 + $0x10] sm:$0xff]
      %v517 = vld [vmem:[%s3 + $0x18] sm:$0xff]
      %v518 = vld [vmem:[%s3 + $0x20] sm:$0xff]
      %v519 = vld [vmem:[%s3 + $0x28] sm:$0xff]
      %v520 = vld [vmem:[%s3 + $0x30] sm:$0xff]
      %v521 = vld [vmem:[%s3 + $0x38] sm:$0xff]
      %v522 = vld [vmem:[%s3 + $0x40] sm:$0xff]
      %v523 = vld [vmem:[%s3 + $0x48] sm:$0xff]
      %v524 = vld [vmem:[%s3 + $0x50] sm:$0xff]
      %v525 = vld [vmem:[%s3 + $0x58] sm:$0xff]
      %v526 = vld [vmem:[%s3 + $0x60] sm:$0xff]
      %v527 = vld [vmem:[%s3 + $0x68] sm:$0xff]
      %v528 = vld [vmem:[%s3 + $0x70] sm:$0xff]
      %v529 = vld [vmem:[%s3 + $0x78] sm:$0xff]
      %v530 = vld [vmem:[%s3 + $0x80] sm:$0xff]
      %v531 = vld [vmem:[%s3 + $0x88] sm:$0xff]
      %v532 = vld [vmem:[%s3 + $0x90] sm:$0xff]
      %v533 = vld [vmem:[%s3 + $0x98] sm:$0xff]
      %v534 = vld [vmem:[%s3 + $0xa0] sm:$0xff]
      %v535 = vld [vmem:[%s3 + $0xa8] sm:$0xff]
      %v536 = vld [vmem:[%s3 + $0xb0] sm:$0xff]
      %v537 = vld [vmem:[%s3 + $0xb8] sm:$0xff]
      %v538 = vld [vmem:[%s3 + $0xc0] sm:$0xff]
      %v539 = vld [vmem:[%s3 + $0xc8] sm:$0xff]
      %v540 = vld [vmem:[%s3 + $0xd0] sm:$0xff]
      %v541 = vld [vmem:[%s3 + $0xd8] sm:$0xff]
      %v542 = vld [vmem:[%s3 + $0xe0] sm:$0xff]
      %v543 = vld [vmem:[%s3 + $0xe8] sm:$0xff]
      %v544 = vld [vmem:[%s3 + $0xf0] sm:$0xff]
      %v545 = vld [vmem:[%s3 + $0xf8] sm:$0xff]
      %v546 = vld [vmem:[%s3 + $0x100] sm:$0xff]
      %v547 = vld [vmem:[%s3 + $0x108] sm:$0xff]
      %v548 = vld [vmem:[%s3 + $0x110] sm:$0xff]
      %v549 = vld [vmem:[%s3 + $0x118] sm:$0xff]
      %v550 = vld [vmem:[%s3 + $0x120] sm:$0xff]
      %v551 = vld [vmem:[%s3 + $0x128] sm:$0xff]
      %v552 = vld [vmem:[%s3 + $0x130] sm:$0xff]
      %v553 = vld [vmem:[%s3 + $0x138] sm:$0xff]
      %v554 = vld [vmem:[%s3 + $0x140] sm:$0xff]
      %v555 = vld [vmem:[%s3 + $0x148] sm:$0xff]
      %v556 = vld [vmem:[%s3 + $0x150] sm:$0xff]
      %v557 = vld [vmem:[%s3 + $0x158] sm:$0xff]
      %v558 = vld [vmem:[%s3 + $0x160] sm:$0xff]
      %v559 = vld [vmem:[%s3 + $0x168] sm:$0xff]
      %v560 = vld [vmem:[%s3 + $0x170] sm:$0xff]
      %v561 = vld [vmem:[%s3 + $0x178] sm:$0xff]
      %v562 = vld [vmem:[%s3 + $0x180] sm:$0xff]
      %v563 = vld [vmem:[%s3 + $0x188] sm:$0xff]
      %v564 = vld [vmem:[%s3 + $0x190] sm:$0xff]
      %v565 = vld [vmem:[%s3 + $0x198] sm:$0xff]
      %v566 = vld [vmem:[%s3 + $0x1a0] sm:$0xff]
      %v567 = vld [vmem:[%s3 + $0x1a8] sm:$0xff]
      %v568 = vld [vmem:[%s3 + $0x1b0] sm:$0xff]
      %v569 = vld [vmem:[%s3 + $0x1b8] sm:$0xff]
      %v570 = vld [vmem:[%s3 + $0x1c0] sm:$0xff]
      %v571 = vld [vmem:[%s3 + $0x1c8] sm:$0xff]
      %v572 = vld [vmem:[%s3 + $0x1d0] sm:$0xff]
      %v573 = vld [vmem:[%s3 + $0x1d8] sm:$0xff]
      %v574 = vld [vmem:[%s3 + $0x1e0] sm:$0xff]
      %v575 = vld [vmem:[%s3 + $0x1e8] sm:$0xff]
      %v576 = vld [vmem:[%s3 + $0x1f0] sm:$0xff]
      %v577 = vld [vmem:[%s3 + $0x1f8] sm:$0xff]
      %v578 = vld [vmem:[%s3 + $0x200] sm:$0xff]
      %v579 = vld [vmem:[%s3 + $0x208] sm:$0xff]
      %v580 = vld [vmem:[%s3 + $0x210] sm:$0xff]
      %v581 = vld [vmem:[%s3 + $0x218] sm:$0xff]
      %v582 = vld [vmem:[%s3 + $0x220] sm:$0xff]
      %v583 = vld [vmem:[%s3 + $0x228] sm:$0xff]
      %v584 = vld [vmem:[%s3 + $0x230] sm:$0xff]
      %v585 = vld [vmem:[%s3 + $0x238] sm:$0xff]
      %v586 = vld [vmem:[%s3 + $0x240] sm:$0xff]
      %v587 = vld [vmem:[%s3 + $0x248] sm:$0xff]
      %v588 = vld [vmem:[%s3 + $0x250] sm:$0xff]
      %v589 = vld [vmem:[%s3 + $0x258] sm:$0xff]
      %v590 = vld [vmem:[%s3 + $0x260] sm:$0xff]
      %v591 = vld [vmem:[%s3 + $0x268] sm:$0xff]
      %v592 = vld [vmem:[%s3 + $0x270] sm:$0xff]
      %v593 = vld [vmem:[%s3 + $0x278] sm:$0xff]
      %v594 = vld [vmem:[%s3 + $0x280] sm:$0xff]
      %v595 = vld [vmem:[%s3 + $0x288] sm:$0xff]
      %v596 = vld [vmem:[%s3 + $0x290] sm:$0xff]
      %v597 = vld [vmem:[%s3 + $0x298] sm:$0xff]
      %v598 = vld [vmem:[%s3 + $0x2a0] sm:$0xff]
      %v599 = vld [vmem:[%s3 + $0x2a8] sm:$0xff]
      %v600 = vld [vmem:[%s3 + $0x2b0] sm:$0xff]
      %v601 = vld [vmem:[%s3 + $0x2b8] sm:$0xff]
      %v602 = vld [vmem:[%s3 + $0x2c0] sm:$0xff]
      %v603 = vld [vmem:[%s3 + $0x2c8] sm:$0xff]
      %v604 = vld [vmem:[%s3 + $0x2d0] sm:$0xff]
      %v605 = vld [vmem:[%s3 + $0x2d8] sm:$0xff]
      %v606 = vld [vmem:[%s3 + $0x2e0] sm:$0xff]
      %v607 = vld [vmem:[%s3 + $0x2e8] sm:$0xff]
      %v608 = vld [vmem:[%s3 + $0x2f0] sm:$0xff]
      %v609 = vld [vmem:[%s3 + $0x2f8] sm:$0xff]
      %v610 = vld [vmem:[%s3 + $0x300] sm:$0xff]
      %v611 = vld [vmem:[%s3 + $0x308] sm:$0xff]
      %v612 = vld [vmem:[%s3 + $0x310] sm:$0xff]
      %v613 = vld [vmem:[%s3 + $0x318] sm:$0xff]
      %v614 = vld [vmem:[%s3 + $0x320] sm:$0xff]
      %v615 = vld [vmem:[%s3 + $0x328] sm:$0xff]
      %v616 = vld [vmem:[%s3 + $0x330] sm:$0xff]
      %v617 = vld [vmem:[%s3 + $0x338] sm:$0xff]
      %v618 = vld [vmem:[%s3 + $0x340] sm:$0xff]
      %v619 = vld [vmem:[%s3 + $0x348] sm:$0xff]
      %v620 = vld [vmem:[%s3 + $0x350] sm:$0xff]
      %v621 = vld [vmem:[%s3 + $0x358] sm:$0xff]
      %v622 = vld [vmem:[%s3 + $0x360] sm:$0xff]
      %v623 = vld [vmem:[%s3 + $0x368] sm:$0xff]
      %v624 = vld [vmem:[%s3 + $0x370] sm:$0xff]
      %v625 = vld [vmem:[%s3 + $0x378] sm:$0xff]
      %v626 = vld [vmem:[%s3 + $0x380] sm:$0xff]
      %v627 = vld [vmem:[%s3 + $0x388] sm:$0xff]
      %v628 = vld [vmem:[%s3 + $0x390] sm:$0xff]
      %v629 = vld [vmem:[%s3 + $0x398] sm:$0xff]
      %v630 = vld [vmem:[%s3 + $0x3a0] sm:$0xff]
      %v631 = vld [vmem:[%s3 + $0x3a8] sm:$0xff]
      %v632 = vld [vmem:[%s3 + $0x3b0] sm:$0xff]
      %v633 = vld [vmem:[%s3 + $0x3b8] sm:$0xff]
      %v634 = vld [vmem:[%s3 + $0x3c0] sm:$0xff]
      %v635 = vld [vmem:[%s3 + $0x3c8] sm:$0xff]
      %v636 = vld [vmem:[%s3 + $0x3d0] sm:$0xff]
      %v637 = vld [vmem:[%s3 + $0x3d8] sm:$0xff]
      %v638 = vld [vmem:[%s3 + $0x3e0] sm:$0xff]
      %v639 = vld [vmem:[%s3 + $0x3e8] sm:$0xff]
      %v640 = vld [vmem:[%s3 + $0x3f0] sm:$0xff]
      %v641 = vld [vmem:[%s3 + $0x3f8] sm:$0xff]
      %v642 = vld [vmem:[%s3 + $0x400] sm:$0xff]
      %v643 = vld [vmem:[%s3 + $0x408] sm:$0xff]
      %v644 = vld [vmem:[%s3 + $0x410] sm:$0xff]
      %v645 = vld [vmem:[%s3 + $0x418] sm:$0xff]
      %v646 = vld [vmem:[%s3 + $0x420] sm:$0xff]
      %v647 = vld [vmem:[%s3 + $0x428] sm:$0xff]
      %v648 = vld [vmem:[%s3 + $0x430] sm:$0xff]
      %v649 = vld [vmem:[%s3 + $0x438] sm:$0xff]
      %v650 = vld [vmem:[%s3 + $0x440] sm:$0xff]
      %v651 = vld [vmem:[%s3 + $0x448] sm:$0xff]
      %v652 = vld [vmem:[%s3 + $0x450] sm:$0xff]
      %v653 = vld [vmem:[%s3 + $0x458] sm:$0xff]
      %v654 = vld [vmem:[%s3 + $0x460] sm:$0xff]
      %v655 = vld [vmem:[%s3 + $0x468] sm:$0xff]
      %v656 = vld [vmem:[%s3 + $0x470] sm:$0xff]
      %v657 = vld [vmem:[%s3 + $0x478] sm:$0xff]
      %v658 = vld [vmem:[%s4] sm:$0x1]
      %v660 = vperm.slane %v658, 0
      %662 = vmatpush.msra.mxu0 %v529
      %663 = vmatpush.msra.mxu0 %v528
      %664 = vmatpush.msra.mxu0 %v527
      %665 = vmatpush.msra.mxu0 %v526
      %666 = vmatpush.msra.mxu0 %v525
      %667 = vmatpush.msra.mxu0 %v524
      %668 = vmatpush.msra.mxu0 %v523
      %669 = vmatpush.msra.mxu0 %v522
      %670 = vmatpush.msra.mxu0 %v521
      %671 = vmatpush.msra.mxu0 %v520
      %672 = vmatpush.msra.mxu0 %v519
      %673 = vmatpush.msra.mxu0 %v518
      %674 = vmatpush.msra.mxu0 %v517
      %675 = vmatpush.msra.mxu0 %v516
      %676 = vmatpush.msra.mxu0 %v515
      %677 = vmatpush.msra.mxu0 %v514
      %678 = vmatmul.f32.gmra.mxu0 %v312
      %v679 = vpop.f32.mrf.mxu0
      %v680 = vadd.f32 %v660, %v679
      %681 = vmatmul.f32.gmra.mxu0 %v313
      %v682 = vpop.f32.mrf.mxu0
      %v683 = vadd.f32 %v660, %v682
      %684 = vmatmul.f32.gmra.mxu0 %v315
      %v685 = vpop.f32.mrf.mxu0
      %v686 = vadd.f32 %v660, %v685
      %687 = vmatmul.f32.gmra.mxu0 %v316
      %v688 = vpop.f32.mrf.mxu0
      %v689 = vadd.f32 %v660, %v688
      %690 = vmatmul.f32.gmra.mxu0 %v318
      %v691 = vpop.f32.mrf.mxu0
      %v692 = vadd.f32 %v660, %v691
      %693 = vmatmul.f32.gmra.mxu0 %v319
      %v694 = vpop.f32.mrf.mxu0
      %v695 = vadd.f32 %v660, %v694
      %696 = vmatmul.f32.gmra.mxu0 %v321
      %v697 = vpop.f32.mrf.mxu0
      %v698 = vadd.f32 %v660, %v697
      %699 = vmatmul.f32.gmra.mxu0 %v322
      %v700 = vpop.f32.mrf.mxu0
      %v701 = vadd.f32 %v660, %v700
      %702 = vmatmul.f32.gmra.mxu0 %v324
      %v703 = vpop.f32.mrf.mxu0
      %v704 = vadd.f32 %v660, %v703
      %705 = vmatmul.f32.gmra.mxu0 %v325
      %v706 = vpop.f32.mrf.mxu0
      %v707 = vadd.f32 %v660, %v706
      %708 = vmatmul.f32.gmra.mxu0 %v327
      %v709 = vpop.f32.mrf.mxu0
      %v710 = vadd.f32 %v660, %v709
      %711 = vmatmul.f32.gmra.mxu0 %v328
      %v712 = vpop.f32.mrf.mxu0
      %v713 = vadd.f32 %v660, %v712
      %714 = vmatmul.f32.gmra.mxu0 %v330
      %v715 = vpop.f32.mrf.mxu0
      %v716 = vadd.f32 %v660, %v715
      %717 = vmatmul.f32.gmra.mxu0 %v331
      %v718 = vpop.f32.mrf.mxu0
      %v719 = vadd.f32 %v660, %v718
      %720 = vmatmul.f32.gmra.mxu0 %v333
      %v721 = vpop.f32.mrf.mxu0
      %v722 = vadd.f32 %v660, %v721
      %723 = vmatmul.f32.gmra.mxu0 %v334
      %v724 = vpop.f32.mrf.mxu0
      %v725 = vadd.f32 %v660, %v724
      %726 = vdwg.mxu0
      %727 = vmatpush.msra.mxu0 %v545
      %728 = vmatpush.msra.mxu0 %v544
      %729 = vmatpush.msra.mxu0 %v543
      %730 = vmatpush.msra.mxu0 %v542
      %731 = vmatpush.msra.mxu0 %v541
      %732 = vmatpush.msra.mxu0 %v540
      %733 = vmatpush.msra.mxu0 %v539
      %734 = vmatpush.msra.mxu0 %v538
      %735 = vmatpush.msra.mxu0 %v537
      %736 = vmatpush.msra.mxu0 %v536
      %737 = vmatpush.msra.mxu0 %v535
      %738 = vmatpush.msra.mxu0 %v534
      %739 = vmatpush.msra.mxu0 %v533
      %740 = vmatpush.msra.mxu0 %v532
      %741 = vmatpush.msra.mxu0 %v531
      %742 = vmatpush.msra.mxu0 %v530
      %743 = vmatmul.f32.gmra.mxu0 %v369
      %v744 = vpop.f32.mrf.mxu0
      %v745 = vadd.f32 %v680, %v744
      %746 = vmatmul.f32.gmra.mxu0 %v371
      %v747 = vpop.f32.mrf.mxu0
      %v748 = vadd.f32 %v683, %v747
      %749 = vmatmul.f32.gmra.mxu0 %v374
      %v750 = vpop.f32.mrf.mxu0
      %v751 = vadd.f32 %v686, %v750
      %752 = vmatmul.f32.gmra.mxu0 %v376
      %v753 = vpop.f32.mrf.mxu0
      %v754 = vadd.f32 %v689, %v753
      %755 = vmatmul.f32.gmra.mxu0 %v379
      %v756 = vpop.f32.mrf.mxu0
      %v757 = vadd.f32 %v692, %v756
      %758 = vmatmul.f32.gmra.mxu0 %v381
      %v759 = vpop.f32.mrf.mxu0
      %v760 = vadd.f32 %v695, %v759
      %761 = vmatmul.f32.gmra.mxu0 %v384
      %v762 = vpop.f32.mrf.mxu0
      %v763 = vadd.f32 %v698, %v762
      %764 = vmatmul.f32.gmra.mxu0 %v386
      %v765 = vpop.f32.mrf.mxu0
      %v766 = vadd.f32 %v701, %v765
      %767 = vmatmul.f32.gmra.mxu0 %v389
      %v768 = vpop.f32.mrf.mxu0
      %v769 = vadd.f32 %v704, %v768
      %770 = vmatmul.f32.gmra.mxu0 %v391
      %v771 = vpop.f32.mrf.mxu0
      %v772 = vadd.f32 %v707, %v771
      %773 = vmatmul.f32.gmra.mxu0 %v394
      %v774 = vpop.f32.mrf.mxu0
      %v775 = vadd.f32 %v710, %v774
      %776 = vmatmul.f32.gmra.mxu0 %v396
      %v777 = vpop.f32.mrf.mxu0
      %v778 = vadd.f32 %v713, %v777
      %779 = vmatmul.f32.gmra.mxu0 %v399
      %v780 = vpop.f32.mrf.mxu0
      %v781 = vadd.f32 %v716, %v780
      %782 = vmatmul.f32.gmra.mxu0 %v401
      %v783 = vpop.f32.mrf.mxu0
      %v784 = vadd.f32 %v719, %v783
      %785 = vmatmul.f32.gmra.mxu0 %v404
      %v786 = vpop.f32.mrf.mxu0
      %v787 = vadd.f32 %v722, %v786
      %788 = vmatmul.f32.gmra.mxu0 %v406
      %v789 = vpop.f32.mrf.mxu0
      %v790 = vadd.f32 %v725, %v789
      %791 = vdwg.mxu0
      %792 = vmatpush.msra.mxu0 %v561
      %793 = vmatpush.msra.mxu0 %v560
      %794 = vmatpush.msra.mxu0 %v559
      %795 = vmatpush.msra.mxu0 %v558
      %796 = vmatpush.msra.mxu0 %v557
      %797 = vmatpush.msra.mxu0 %v556
      %798 = vmatpush.msra.mxu0 %v555
      %799 = vmatpush.msra.mxu0 %v554
      %800 = vmatpush.msra.mxu0 %v553
      %801 = vmatpush.msra.mxu0 %v552
      %802 = vmatpush.msra.mxu0 %v551
      %803 = vmatpush.msra.mxu0 %v550
      %804 = vmatpush.msra.mxu0 %v549
      %805 = vmatpush.msra.mxu0 %v548
      %806 = vmatpush.msra.mxu0 %v547
      %807 = vmatpush.msra.mxu0 %v546
      %808 = vmatmul.f32.gmra.mxu0 %v426
      %v809 = vpop.f32.mrf.mxu0
      %v810 = vadd.f32 %v745, %v809
      %811 = vmatmul.f32.gmra.mxu0 %v428
      %v812 = vpop.f32.mrf.mxu0
      %v813 = vadd.f32 %v748, %v812
      %814 = vmatmul.f32.gmra.mxu0 %v431
      %v815 = vpop.f32.mrf.mxu0
      %v816 = vadd.f32 %v751, %v815
      %817 = vmatmul.f32.gmra.mxu0 %v433
      %v818 = vpop.f32.mrf.mxu0
      %v819 = vadd.f32 %v754, %v818
      %820 = vmatmul.f32.gmra.mxu0 %v436
      %v821 = vpop.f32.mrf.mxu0
      %v822 = vadd.f32 %v757, %v821
      %823 = vmatmul.f32.gmra.mxu0 %v438
      %v824 = vpop.f32.mrf.mxu0
      %v825 = vadd.f32 %v760, %v824
      %826 = vmatmul.f32.gmra.mxu0 %v441
      %v827 = vpop.f32.mrf.mxu0
      %v828 = vadd.f32 %v763, %v827
      %829 = vmatmul.f32.gmra.mxu0 %v443
      %v830 = vpop.f32.mrf.mxu0
      %v831 = vadd.f32 %v766, %v830
      %832 = vmatmul.f32.gmra.mxu0 %v446
      %v833 = vpop.f32.mrf.mxu0
      %v834 = vadd.f32 %v769, %v833
      %835 = vmatmul.f32.gmra.mxu0 %v448
      %v836 = vpop.f32.mrf.mxu0
      %v837 = vadd.f32 %v772, %v836
      %838 = vmatmul.f32.gmra.mxu0 %v451
      %v839 = vpop.f32.mrf.mxu0
      %v840 = vadd.f32 %v775, %v839
      %841 = vmatmul.f32.gmra.mxu0 %v453
      %v842 = vpop.f32.mrf.mxu0
      %v843 = vadd.f32 %v778, %v842
      %844 = vmatmul.f32.gmra.mxu0 %v456
      %v845 = vpop.f32.mrf.mxu0
      %v846 = vadd.f32 %v781, %v845
      %847 = vmatmul.f32.gmra.mxu0 %v458
      %v848 = vpop.f32.mrf.mxu0
      %v849 = vadd.f32 %v784, %v848
      %850 = vmatmul.f32.gmra.mxu0 %v461
      %v851 = vpop.f32.mrf.mxu0
      %v852 = vadd.f32 %v787, %v851
      %853 = vmatmul.f32.gmra.mxu0 %v463
      %v854 = vpop.f32.mrf.mxu0
      %v855 = vadd.f32 %v790, %v854
      %856 = vdwg.mxu0
      %857 = vmatpush.msra.mxu0 %v577
      %858 = vmatpush.msra.mxu0 %v576
      %859 = vmatpush.msra.mxu0 %v575
      %860 = vmatpush.msra.mxu0 %v574
      %861 = vmatpush.msra.mxu0 %v573
      %862 = vmatpush.msra.mxu0 %v572
      %863 = vmatpush.msra.mxu0 %v571
      %864 = vmatpush.msra.mxu0 %v570
      %865 = vmatpush.msra.mxu0 %v569
      %866 = vmatpush.msra.mxu0 %v568
      %867 = vmatpush.msra.mxu0 %v567
      %868 = vmatpush.msra.mxu0 %v566
      %869 = vmatpush.msra.mxu0 %v565
      %870 = vmatpush.msra.mxu0 %v564
      %871 = vmatpush.msra.mxu0 %v563
      %872 = vmatpush.msra.mxu0 %v562
      %873 = vmatmul.f32.gmra.mxu0 %v315
      %v874 = vpop.f32.mrf.mxu0
      %v875 = vadd.f32 %v810, %v874
      %876 = vmatmul.f32.gmra.mxu0 %v316
      %v877 = vpop.f32.mrf.mxu0
      %v878 = vadd.f32 %v813, %v877
      %879 = vmatmul.f32.gmra.mxu0 %v318
      %v880 = vpop.f32.mrf.mxu0
      %v881 = vadd.f32 %v816, %v880
      %882 = vmatmul.f32.gmra.mxu0 %v319
      %v883 = vpop.f32.mrf.mxu0
      %v884 = vadd.f32 %v819, %v883
      %885 = vmatmul.f32.gmra.mxu0 %v321
      %v886 = vpop.f32.mrf.mxu0
      %v887 = vadd.f32 %v822, %v886
      %888 = vmatmul.f32.gmra.mxu0 %v322
      %v889 = vpop.f32.mrf.mxu0
      %v890 = vadd.f32 %v825, %v889
      %891 = vmatmul.f32.gmra.mxu0 %v324
      %v892 = vpop.f32.mrf.mxu0
      %v893 = vadd.f32 %v828, %v892
      %894 = vmatmul.f32.gmra.mxu0 %v325
      %v895 = vpop.f32.mrf.mxu0
      %v896 = vadd.f32 %v831, %v895
      %897 = vmatmul.f32.gmra.mxu0 %v327
      %v898 = vpop.f32.mrf.mxu0
      %v899 = vadd.f32 %v834, %v898
      %900 = vmatmul.f32.gmra.mxu0 %v328
      %v901 = vpop.f32.mrf.mxu0
      %v902 = vadd.f32 %v837, %v901
      %903 = vmatmul.f32.gmra.mxu0 %v330
      %v904 = vpop.f32.mrf.mxu0
      %v905 = vadd.f32 %v840, %v904
      %906 = vmatmul.f32.gmra.mxu0 %v331
      %v907 = vpop.f32.mrf.mxu0
      %v908 = vadd.f32 %v843, %v907
      %909 = vmatmul.f32.gmra.mxu0 %v333
      %v910 = vpop.f32.mrf.mxu0
      %v911 = vadd.f32 %v846, %v910
      %912 = vmatmul.f32.gmra.mxu0 %v334
      %v913 = vpop.f32.mrf.mxu0
      %v914 = vadd.f32 %v849, %v913
      %915 = vmatmul.f32.gmra.mxu0 %v336
      %v916 = vpop.f32.mrf.mxu0
      %v917 = vadd.f32 %v852, %v916
      %918 = vmatmul.f32.gmra.mxu0 %v337
      %v919 = vpop.f32.mrf.mxu0
      %v920 = vadd.f32 %v855, %v919
      %921 = vdwg.mxu0
      %922 = vmatpush.msra.mxu0 %v593
      %923 = vmatpush.msra.mxu0 %v592
      %924 = vmatpush.msra.mxu0 %v591
      %925 = vmatpush.msra.mxu0 %v590
      %926 = vmatpush.msra.mxu0 %v589
      %927 = vmatpush.msra.mxu0 %v588
      %928 = vmatpush.msra.mxu0 %v587
      %929 = vmatpush.msra.mxu0 %v586
      %930 = vmatpush.msra.mxu0 %v585
      %931 = vmatpush.msra.mxu0 %v584
      %932 = vmatpush.msra.mxu0 %v583
      %933 = vmatpush.msra.mxu0 %v582
      %934 = vmatpush.msra.mxu0 %v581
      %935 = vmatpush.msra.mxu0 %v580
      %936 = vmatpush.msra.mxu0 %v579
      %937 = vmatpush.msra.mxu0 %v578
      %938 = vmatmul.f32.gmra.mxu0 %v374
      %v939 = vpop.f32.mrf.mxu0
      %v940 = vadd.f32 %v875, %v939
      %941 = vmatmul.f32.gmra.mxu0 %v376
      %v942 = vpop.f32.mrf.mxu0
      %v943 = vadd.f32 %v878, %v942
      %944 = vmatmul.f32.gmra.mxu0 %v379
      %v945 = vpop.f32.mrf.mxu0
      %v946 = vadd.f32 %v881, %v945
      %947 = vmatmul.f32.gmra.mxu0 %v381
      %v948 = vpop.f32.mrf.mxu0
      %v949 = vadd.f32 %v884, %v948
      %950 = vmatmul.f32.gmra.mxu0 %v384
      %v951 = vpop.f32.mrf.mxu0
      %v952 = vadd.f32 %v887, %v951
      %953 = vmatmul.f32.gmra.mxu0 %v386
      %v954 = vpop.f32.mrf.mxu0
      %v955 = vadd.f32 %v890, %v954
      %956 = vmatmul.f32.gmra.mxu0 %v389
      %v957 = vpop.f32.mrf.mxu0
      %v958 = vadd.f32 %v893, %v957
      %959 = vmatmul.f32.gmra.mxu0 %v391
      %v960 = vpop.f32.mrf.mxu0
      %v961 = vadd.f32 %v896, %v960
      %962 = vmatmul.f32.gmra.mxu0 %v394
      %v963 = vpop.f32.mrf.mxu0
      %v964 = vadd.f32 %v899, %v963
      %965 = vmatmul.f32.gmra.mxu0 %v396
      %v966 = vpop.f32.mrf.mxu0
      %v967 = vadd.f32 %v902, %v966
      %968 = vmatmul.f32.gmra.mxu0 %v399
      %v969 = vpop.f32.mrf.mxu0
      %v970 = vadd.f32 %v905, %v969
      %971 = vmatmul.f32.gmra.mxu0 %v401
      %v972 = vpop.f32.mrf.mxu0
      %v973 = vadd.f32 %v908, %v972
      %974 = vmatmul.f32.gmra.mxu0 %v404
      %v975 = vpop.f32.mrf.mxu0
      %v976 = vadd.f32 %v911, %v975
      %977 = vmatmul.f32.gmra.mxu0 %v406
      %v978 = vpop.f32.mrf.mxu0
      %v979 = vadd.f32 %v914, %v978
      %980 = vmatmul.f32.gmra.mxu0 %v485
      %v981 = vpop.f32.mrf.mxu0
      %v982 = vadd.f32 %v917, %v981
      %983 = vmatmul.f32.gmra.mxu0 %v487
      %v984 = vpop.f32.mrf.mxu0
      %v985 = vadd.f32 %v920, %v984
      %986 = vdwg.mxu0
      %987 = vmatpush.msra.mxu0 %v609
      %988 = vmatpush.msra.mxu0 %v608
      %989 = vmatpush.msra.mxu0 %v607
      %990 = vmatpush.msra.mxu0 %v606
      %991 = vmatpush.msra.mxu0 %v605
      %992 = vmatpush.msra.mxu0 %v604
      %993 = vmatpush.msra.mxu0 %v603
      %994 = vmatpush.msra.mxu0 %v602
      %995 = vmatpush.msra.mxu0 %v601
      %996 = vmatpush.msra.mxu0 %v600
      %997 = vmatpush.msra.mxu0 %v599
      %998 = vmatpush.msra.mxu0 %v598
      %999 = vmatpush.msra.mxu0 %v597
      %1000 = vmatpush.msra.mxu0 %v596
      %1001 = vmatpush.msra.mxu0 %v595
      %1002 = vmatpush.msra.mxu0 %v594
      %1003 = vmatmul.f32.gmra.mxu0 %v431
      %v1004 = vpop.f32.mrf.mxu0
      %v1005 = vadd.f32 %v940, %v1004
      %1006 = vmatmul.f32.gmra.mxu0 %v433
      %v1007 = vpop.f32.mrf.mxu0
      %v1008 = vadd.f32 %v943, %v1007
      %1009 = vmatmul.f32.gmra.mxu0 %v436
      %v1010 = vpop.f32.mrf.mxu0
      %v1011 = vadd.f32 %v946, %v1010
      %1012 = vmatmul.f32.gmra.mxu0 %v438
      %v1013 = vpop.f32.mrf.mxu0
      %v1014 = vadd.f32 %v949, %v1013
      %1015 = vmatmul.f32.gmra.mxu0 %v441
      %v1016 = vpop.f32.mrf.mxu0
      %v1017 = vadd.f32 %v952, %v1016
      %1018 = vmatmul.f32.gmra.mxu0 %v443
      %v1019 = vpop.f32.mrf.mxu0
      %v1020 = vadd.f32 %v955, %v1019
      %1021 = vmatmul.f32.gmra.mxu0 %v446
      %v1022 = vpop.f32.mrf.mxu0
      %v1023 = vadd.f32 %v958, %v1022
      %1024 = vmatmul.f32.gmra.mxu0 %v448
      %v1025 = vpop.f32.mrf.mxu0
      %v1026 = vadd.f32 %v961, %v1025
      %1027 = vmatmul.f32.gmra.mxu0 %v451
      %v1028 = vpop.f32.mrf.mxu0
      %v1029 = vadd.f32 %v964, %v1028
      %1030 = vmatmul.f32.gmra.mxu0 %v453
      %v1031 = vpop.f32.mrf.mxu0
      %v1032 = vadd.f32 %v967, %v1031
      %1033 = vmatmul.f32.gmra.mxu0 %v456
      %v1034 = vpop.f32.mrf.mxu0
      %v1035 = vadd.f32 %v970, %v1034
      %1036 = vmatmul.f32.gmra.mxu0 %v458
      %v1037 = vpop.f32.mrf.mxu0
      %v1038 = vadd.f32 %v973, %v1037
      %1039 = vmatmul.f32.gmra.mxu0 %v461
      %v1040 = vpop.f32.mrf.mxu0
      %v1041 = vadd.f32 %v976, %v1040
      %1042 = vmatmul.f32.gmra.mxu0 %v463
      %v1043 = vpop.f32.mrf.mxu0
      %v1044 = vadd.f32 %v979, %v1043
      %1045 = vmatmul.f32.gmra.mxu0 %v492
      %v1046 = vpop.f32.mrf.mxu0
      %v1047 = vadd.f32 %v982, %v1046
      %1048 = vmatmul.f32.gmra.mxu0 %v494
      %v1049 = vpop.f32.mrf.mxu0
      %v1050 = vadd.f32 %v985, %v1049
      %1051 = vdwg.mxu0
      %1052 = vmatpush.msra.mxu0 %v625
      %1053 = vmatpush.msra.mxu0 %v624
      %1054 = vmatpush.msra.mxu0 %v623
      %1055 = vmatpush.msra.mxu0 %v622
      %1056 = vmatpush.msra.mxu0 %v621
      %1057 = vmatpush.msra.mxu0 %v620
      %1058 = vmatpush.msra.mxu0 %v619
      %1059 = vmatpush.msra.mxu0 %v618
      %1060 = vmatpush.msra.mxu0 %v617
      %1061 = vmatpush.msra.mxu0 %v616
      %1062 = vmatpush.msra.mxu0 %v615
      %1063 = vmatpush.msra.mxu0 %v614
      %1064 = vmatpush.msra.mxu0 %v613
      %1065 = vmatpush.msra.mxu0 %v612
      %1066 = vmatpush.msra.mxu0 %v611
      %1067 = vmatpush.msra.mxu0 %v610
      %1068 = vmatmul.f32.gmra.mxu0 %v318
      %v1069 = vpop.f32.mrf.mxu0
      %v1070 = vadd.f32 %v1005, %v1069
      %1071 = vmatmul.f32.gmra.mxu0 %v319
      %v1072 = vpop.f32.mrf.mxu0
      %v1073 = vadd.f32 %v1008, %v1072
      %1074 = vmatmul.f32.gmra.mxu0 %v321
      %v1075 = vpop.f32.mrf.mxu0
      %v1076 = vadd.f32 %v1011, %v1075
      %1077 = vmatmul.f32.gmra.mxu0 %v322
      %v1078 = vpop.f32.mrf.mxu0
      %v1079 = vadd.f32 %v1014, %v1078
      %1080 = vmatmul.f32.gmra.mxu0 %v324
      %v1081 = vpop.f32.mrf.mxu0
      %v1082 = vadd.f32 %v1017, %v1081
      %1083 = vmatmul.f32.gmra.mxu0 %v325
      %v1084 = vpop.f32.mrf.mxu0
      %v1085 = vadd.f32 %v1020, %v1084
      %1086 = vmatmul.f32.gmra.mxu0 %v327
      %v1087 = vpop.f32.mrf.mxu0
      %v1088 = vadd.f32 %v1023, %v1087
      %1089 = vmatmul.f32.gmra.mxu0 %v328
      %v1090 = vpop.f32.mrf.mxu0
      %v1091 = vadd.f32 %v1026, %v1090
      %1092 = vmatmul.f32.gmra.mxu0 %v330
      %v1093 = vpop.f32.mrf.mxu0
      %v1094 = vadd.f32 %v1029, %v1093
      %1095 = vmatmul.f32.gmra.mxu0 %v331
      %v1096 = vpop.f32.mrf.mxu0
      %v1097 = vadd.f32 %v1032, %v1096
      %1098 = vmatmul.f32.gmra.mxu0 %v333
      %v1099 = vpop.f32.mrf.mxu0
      %v1100 = vadd.f32 %v1035, %v1099
      %1101 = vmatmul.f32.gmra.mxu0 %v334
      %v1102 = vpop.f32.mrf.mxu0
      %v1103 = vadd.f32 %v1038, %v1102
      %1104 = vmatmul.f32.gmra.mxu0 %v336
      %v1105 = vpop.f32.mrf.mxu0
      %v1106 = vadd.f32 %v1041, %v1105
      %1107 = vmatmul.f32.gmra.mxu0 %v337
      %v1108 = vpop.f32.mrf.mxu0
      %v1109 = vadd.f32 %v1044, %v1108
      %1110 = vmatmul.f32.gmra.mxu0 %v339
      %v1111 = vpop.f32.mrf.mxu0
      %v1112 = vadd.f32 %v1047, %v1111
      %1113 = vmatmul.f32.gmra.mxu0 %v340
      %v1114 = vpop.f32.mrf.mxu0
      %v1115 = vadd.f32 %v1050, %v1114
      %1116 = vdwg.mxu0
      %1117 = vmatpush.msra.mxu0 %v641
      %1118 = vmatpush.msra.mxu0 %v640
      %1119 = vmatpush.msra.mxu0 %v639
      %1120 = vmatpush.msra.mxu0 %v638
      %1121 = vmatpush.msra.mxu0 %v637
      %1122 = vmatpush.msra.mxu0 %v636
      %1123 = vmatpush.msra.mxu0 %v635
      %1124 = vmatpush.msra.mxu0 %v634
      %1125 = vmatpush.msra.mxu0 %v633
      %1126 = vmatpush.msra.mxu0 %v632
      %1127 = vmatpush.msra.mxu0 %v631
      %1128 = vmatpush.msra.mxu0 %v630
      %1129 = vmatpush.msra.mxu0 %v629
      %1130 = vmatpush.msra.mxu0 %v628
      %1131 = vmatpush.msra.mxu0 %v627
      %1132 = vmatpush.msra.mxu0 %v626
      %1133 = vmatmul.f32.gmra.mxu0 %v379
      %v1134 = vpop.f32.mrf.mxu0
      %v1135 = vadd.f32 %v1070, %v1134
      %1136 = vmatmul.f32.gmra.mxu0 %v381
      %v1137 = vpop.f32.mrf.mxu0
      %v1138 = vadd.f32 %v1073, %v1137
      %1139 = vmatmul.f32.gmra.mxu0 %v384
      %v1140 = vpop.f32.mrf.mxu0
      %v1141 = vadd.f32 %v1076, %v1140
      %1142 = vmatmul.f32.gmra.mxu0 %v386
      %v1143 = vpop.f32.mrf.mxu0
      %v1144 = vadd.f32 %v1079, %v1143
      %1145 = vmatmul.f32.gmra.mxu0 %v389
      %v1146 = vpop.f32.mrf.mxu0
      %v1147 = vadd.f32 %v1082, %v1146
      %1148 = vmatmul.f32.gmra.mxu0 %v391
      %v1149 = vpop.f32.mrf.mxu0
      %v1150 = vadd.f32 %v1085, %v1149
      %1151 = vmatmul.f32.gmra.mxu0 %v394
      %v1152 = vpop.f32.mrf.mxu0
      %v1153 = vadd.f32 %v1088, %v1152
      %1154 = vmatmul.f32.gmra.mxu0 %v396
      %v1155 = vpop.f32.mrf.mxu0
      %v1156 = vadd.f32 %v1091, %v1155
      %1157 = vmatmul.f32.gmra.mxu0 %v399
      %v1158 = vpop.f32.mrf.mxu0
      %v1159 = vadd.f32 %v1094, %v1158
      %1160 = vmatmul.f32.gmra.mxu0 %v401
      %v1161 = vpop.f32.mrf.mxu0
      %v1162 = vadd.f32 %v1097, %v1161
      %1163 = vmatmul.f32.gmra.mxu0 %v404
      %v1164 = vpop.f32.mrf.mxu0
      %v1165 = vadd.f32 %v1100, %v1164
      %1166 = vmatmul.f32.gmra.mxu0 %v406
      %v1167 = vpop.f32.mrf.mxu0
      %v1168 = vadd.f32 %v1103, %v1167
      %1169 = vmatmul.f32.gmra.mxu0 %v485
      %v1170 = vpop.f32.mrf.mxu0
      %v1171 = vadd.f32 %v1106, %v1170
      %1172 = vmatmul.f32.gmra.mxu0 %v487
      %v1173 = vpop.f32.mrf.mxu0
      %v1174 = vadd.f32 %v1109, %v1173
      %1175 = vmatmul.f32.gmra.mxu0 %v502
      %v1176 = vpop.f32.mrf.mxu0
      %v1177 = vadd.f32 %v1112, %v1176
      %1178 = vmatmul.f32.gmra.mxu0 %v504
      %v1179 = vpop.f32.mrf.mxu0
      %v1180 = vadd.f32 %v1115, %v1179
      %1181 = vdwg.mxu0
      %1182 = vmatpush.msra.mxu0 %v657
      %1183 = vmatpush.msra.mxu0 %v656
      %1184 = vmatpush.msra.mxu0 %v655
      %1185 = vmatpush.msra.mxu0 %v654
      %1186 = vmatpush.msra.mxu0 %v653
      %1187 = vmatpush.msra.mxu0 %v652
      %1188 = vmatpush.msra.mxu0 %v651
      %1189 = vmatpush.msra.mxu0 %v650
      %1190 = vmatpush.msra.mxu0 %v649
      %1191 = vmatpush.msra.mxu0 %v648
      %1192 = vmatpush.msra.mxu0 %v647
      %1193 = vmatpush.msra.mxu0 %v646
      %1194 = vmatpush.msra.mxu0 %v645
      %1195 = vmatpush.msra.mxu0 %v644
      %1196 = vmatpush.msra.mxu0 %v643
      %1197 = vmatpush.msra.mxu0 %v642
      %1198 = vmatmul.f32.gmra.mxu0 %v436
      %v1199 = vpop.f32.mrf.mxu0
      %v1200 = vadd.f32 %v1135, %v1199
      %1201 = vmatmul.f32.gmra.mxu0 %v438
      %v1202 = vpop.f32.mrf.mxu0
      %v1203 = vadd.f32 %v1138, %v1202
      %1204 = vmatmul.f32.gmra.mxu0 %v441
      %v1205 = vpop.f32.mrf.mxu0
      %v1206 = vadd.f32 %v1141, %v1205
      %1207 = vmatmul.f32.gmra.mxu0 %v443
      %v1208 = vpop.f32.mrf.mxu0
      %v1209 = vadd.f32 %v1144, %v1208
      %1210 = vmatmul.f32.gmra.mxu0 %v446
      %v1211 = vpop.f32.mrf.mxu0
      %v1212 = vadd.f32 %v1147, %v1211
      %1213 = vmatmul.f32.gmra.mxu0 %v448
      %v1214 = vpop.f32.mrf.mxu0
      %v1215 = vadd.f32 %v1150, %v1214
      %1216 = vmatmul.f32.gmra.mxu0 %v451
      %v1217 = vpop.f32.mrf.mxu0
      %v1218 = vadd.f32 %v1153, %v1217
      %1219 = vmatmul.f32.gmra.mxu0 %v453
      %v1220 = vpop.f32.mrf.mxu0
      %v1221 = vadd.f32 %v1156, %v1220
      %1222 = vmatmul.f32.gmra.mxu0 %v456
      %v1223 = vpop.f32.mrf.mxu0
      %v1224 = vadd.f32 %v1159, %v1223
      %1225 = vmatmul.f32.gmra.mxu0 %v458
      %v1226 = vpop.f32.mrf.mxu0
      %v1227 = vadd.f32 %v1162, %v1226
      %1228 = vmatmul.f32.gmra.mxu0 %v461
      %v1229 = vpop.f32.mrf.mxu0
      %v1230 = vadd.f32 %v1165, %v1229
      %1231 = vmatmul.f32.gmra.mxu0 %v463
      %v1232 = vpop.f32.mrf.mxu0
      %v1233 = vadd.f32 %v1168, %v1232
      %1234 = vmatmul.f32.gmra.mxu0 %v492
      %v1235 = vpop.f32.mrf.mxu0
      %v1236 = vadd.f32 %v1171, %v1235
      %1237 = vmatmul.f32.gmra.mxu0 %v494
      %v1238 = vpop.f32.mrf.mxu0
      %v1239 = vadd.f32 %v1174, %v1238
      %1240 = vmatmul.f32.gmra.mxu0 %v509
      %v1241 = vpop.f32.mrf.mxu0
      %v1242 = vadd.f32 %v1177, %v1241
      %1243 = vmatmul.f32.gmra.mxu0 %v511
      %v1244 = vpop.f32.mrf.mxu0
      %v1245 = vadd.f32 %v1180, %v1244
      %1246 = vdwg.mxu0
      %1247 = vst [vmem:[%s302] sm:$0xff] %v1200
      %1248 = vst [vmem:[%s302 + $0x8] sm:$0xff] %v1203
      %1249 = vst [vmem:[%s302 + $0x10] sm:$0xff] %v1206
      %1250 = vst [vmem:[%s302 + $0x18] sm:$0xff] %v1209
      %1251 = vst [vmem:[%s302 + $0x20] sm:$0xff] %v1212
      %1252 = vst [vmem:[%s302 + $0x28] sm:$0xff] %v1215
      %1253 = vst [vmem:[%s302 + $0x30] sm:$0xff] %v1218
      %1254 = vst [vmem:[%s302 + $0x38] sm:$0xff] %v1221
      %1255 = vst [vmem:[%s302 + $0x40] sm:$0xff] %v1224
      %1256 = vst [vmem:[%s302 + $0x48] sm:$0xff] %v1227
      %1257 = vst [vmem:[%s302 + $0x50] sm:$0xff] %v1230
      %1258 = vst [vmem:[%s302 + $0x58] sm:$0xff] %v1233
      %1259 = vst [vmem:[%s302 + $0x60] sm:$0xff] %v1236
      %1260 = vst [vmem:[%s302 + $0x68] sm:$0xff] %v1239
      %1261 = vst [vmem:[%s302 + $0x70] sm:$0xff] %v1242
      %1262 = vst [vmem:[%s302 + $0x78] sm:$0xff] %v1245
      %v1263 = vadd.f32 %v1200, %v1203
      %v1264 = vadd.f32 %v1263, %v1206
      %v1265 = vadd.f32 %v1264, %v1209
      %v1266 = vadd.f32 %v1265, %v1212
      %v1267 = vadd.f32 %v1266, %v1215
      %v1268 = vadd.f32 %v1267, %v1218
      %v1269 = vadd.f32 %v1268, %v1221
      %v1270 = vadd.f32 %v1269, %v1224
      %v1271 = vadd.f32 %v1270, %v1227
      %v1272 = vadd.f32 %v1271, %v1230
      %v1273 = vadd.f32 %v1272, %v1233
      %v1274 = vadd.f32 %v1273, %v1236
      %v1275 = vadd.f32 %v1274, %v1239
      %v1276 = vadd.f32 %v1275, %v1242
      %v1277 = vadd.f32 %v1276, %v1245
      %v1278 = vrot.slane %v1277, 4
      %v1279 = vadd.f32 %v1277, %v1278
      %v1280 = vrot.slane %v1279, 2
      %v1281 = vadd.f32 %v1279, %v1280
      %v1282 = vrot.slane %v1281, 1
      %v1283 = vadd.f32 %v1281, %v1282
      %v1284 = vmul.f32 %v1200, %v1200
      %v1285 = vmul.f32 %v1203, %v1203
      %v1286 = vmul.f32 %v1206, %v1206
      %v1287 = vmul.f32 %v1209, %v1209
      %v1288 = vmul.f32 %v1212, %v1212
      %v1289 = vmul.f32 %v1215, %v1215
      %v1290 = vmul.f32 %v1218, %v1218
      %v1291 = vmul.f32 %v1221, %v1221
      %v1292 = vmul.f32 %v1224, %v1224
      %v1293 = vmul.f32 %v1227, %v1227
      %v1294 = vmul.f32 %v1230, %v1230
      %v1295 = vmul.f32 %v1233, %v1233
      %v1296 = vmul.f32 %v1236, %v1236
      %v1297 = vmul.f32 %v1239, %v1239
      %v1298 = vmul.f32 %v1242, %v1242
      %v1299 = vmul.f32 %v1245, %v1245
      %v1300 = vadd.f32 %v1284, %v1285
      %v1301 = vadd.f32 %v1300, %v1286
      %v1302 = vadd.f32 %v1301, %v1287
      %v1303 = vadd.f32 %v1302, %v1288
      %v1304 = vadd.f32 %v1303, %v1289
      %v1305 = vadd.f32 %v1304, %v1290
      %v1306 = vadd.f32 %v1305, %v1291
      %v1307 = vadd.f32 %v1306, %v1292
      %v1308 = vadd.f32 %v1307, %v1293
      %v1309 = vadd.f32 %v1308, %v1294
      %v1310 = vadd.f32 %v1309, %v1295
      %v1311 = vadd.f32 %v1310, %v1296
      %v1312 = vadd.f32 %v1311, %v1297
      %v1313 = vadd.f32 %v1312, %v1298
      %v1314 = vadd.f32 %v1313, %v1299
      %v1315 = vrot.slane %v1314, 4
      %v1316 = vadd.f32 %v1314, %v1315
      %v1317 = vrot.slane %v1316, 2
      %v1318 = vadd.f32 %v1316, %v1317
      %v1319 = vrot.slane %v1318, 1
      %v1320 = vadd.f32 %v1318, %v1319
      %vm1321 = vcmask 1040384
      %v1322 = vsel %vm1321, %v1283, %v1320
      %1323 = vst [vmem:[%s311] sm:$0x3] %v1322
      %s1324 = smul.u32 8, %s23
      %p1325 = scmp.lt.s32.totalorder %s22, 1
      %s1326 = scalar_select %p1325, %s22, 1
      %p1327 = scmp.lt.s32.totalorder %s1324, 15
      %s1328 = scalar_select %p1327, %s1324, 15
      %s1329 = smul.addr %s1328, 2
      %s1330 = smul.addr %s1326, 32
      %s1331 = sadd.s32 %s1329, %s1330
      %s1332 = smul.addr %s1331, 8
      %s1333 = scalar_lea.vmem %s5, %s1332
      %p1334 = scmp.lt.s32.totalorder %s22, 1
      %s1335 = scalar_select %p1334, %s22, 1
      %p1336 = scmp.lt.s32.totalorder %s23, 1
      %s1337 = scalar_select %p1336, %s23, 1
      %s1338 = smul.addr %s1335, 2
      %s1339 = sadd.s32 %s1337, %s1338
      %s1340 = smul.addr %s1339, 2
      %s1341 = scalar_lea.vmem %s6, %s1340
      // Predicated region
      $region41: #{double_conv.3} parent=39 // pred_check
        %p1342 = pneg %p162
      $region42: #{double_conv.3} parent=39 // pred_check_branch
        %1344 = sbr.rel (%p1342) target = $region44
      $region43: #{double_conv.3} parent=39 // pred_region
        %s1345 = smul.u32 8, %s23
      $region44: #{double_conv.3} parent=39 // pred_fallthru
        _
      // Predicated region
      $region45: #{double_conv.3} parent=39 // pred_check
        %p1346 = pneg %p190
      $region46: #{double_conv.3} parent=39 // pred_check_branch
        %1348 = sbr.rel (%p1346) target = $region48
      $region47: #{double_conv.3} parent=39 // pred_region
        _
      $region48: #{double_conv.3} parent=39 // pred_fallthru
        _
    $region40: #{double_conv.3} parent=5 // pred_fallthru
      _
    %p1349 = scmp.le.s32.totalorder 2, %s13
    // Predicated region
    $region49: #{double_conv.3} parent=5 // pred_check
      %p1350 = pneg %p1349
    $region50: #{double_conv.3} parent=5 // pred_check_branch
      %1352 = sbr.rel (%p1350) target = $region52
    $region51: #{double_conv.3} parent=5 // pred_region
      %s1353 = ssub.s32 %s13, 2
      // Predicated region
      $region53: #{double_conv.3} parent=51 // pred_check
        %p1354 = pneg %p168
      $region54: #{double_conv.3} parent=51 // pred_check_branch
        %1356 = sbr.rel (%p1354) target = $region56
      $region55: #{double_conv.3} parent=51 // pred_region
        %s1357 = smul.u32 8, %s25
        %p1358 = scmp.lt.s32.totalorder %s24, 1
        %s1359 = scalar_select %p1358, %s24, 1
        %p1360 = scmp.lt.s32.totalorder %s1357, 15
        %s1361 = scalar_select %p1360, %s1357, 15
        %s1362 = smul.addr %s1361, 2
        %s1363 = smul.addr %s1359, 32
        %s1364 = sadd.s32 %s1362, %s1363
        %s1365 = smul.addr %s1364, 8
        %s1366 = scalar_lea.vmem %s5, %s1365
      $region56: #{double_conv.3} parent=51 // pred_fallthru
        _
      // Predicated region
      $region57: #{double_conv.3} parent=51 // pred_check
        %p1367 = pneg %p196
      $region58: #{double_conv.3} parent=51 // pred_check_branch
        %1369 = sbr.rel (%p1367) target = $region60
      $region59: #{double_conv.3} parent=51 // pred_region
        %p1370 = scmp.lt.s32.totalorder %s24, 1
        %s1371 = scalar_select %p1370, %s24, 1
        %p1372 = scmp.lt.s32.totalorder %s25, 1
        %s1373 = scalar_select %p1372, %s25, 1
        %s1374 = smul.addr %s1371, 2
        %s1375 = sadd.s32 %s1373, %s1374
        %s1376 = smul.addr %s1375, 2
        %s1377 = scalar_lea.vmem %s6, %s1376
      $region60: #{double_conv.3} parent=51 // pred_fallthru
        _
    $region52: #{double_conv.3} parent=5 // pred_fallthru
      _
  $region6: #{double_conv.3} parent=0 // loop_footer
    %s17 = sadd.s32 1, %s13
  $region7: #{double_conv.3} parent=0 // loop_footer_branch
    %12 = sbr.rel target = $region3
  $region8: #{double_conv.3} parent=0 // loop_exit
    _

// kernel: double_conv.5
$region0: #{double_conv.5}
  #allocation0 [shape = 'u32[]', space=smem, size = 0x4, offset = 0x4, fixed_abs, tag = 'smem constant byte address 0x4 - core index']
  #allocation1 [shape = 'u32[72,128]{1,0:T(1,128)}', space=vmem, size = 0x9000, scoped, tag = 'internal scratch']
  %s0 = inlined_call_operand.vmem [shape: f32[2,16,16,128], index: 0, kind: input, shape index: {}]
  %s1 = inlined_call_operand.vmem [shape: f32[1,128], index: 1, kind: input, shape index: {}]
  %s2 = inlined_call_operand.vmem [shape: f32[1,128], index: 2, kind: input, shape index: {}]
  %s3 = inlined_call_operand.vmem [shape: f32[2,16,16,128], index: 3, kind: output, shape index: {}]
  %s4 = sld [smem:[#allocation0]]
  $region45: #{double_conv.5} parent=0
    _
  %s6 = ssub.s32 1, %s4
  %s7 = scalar_select 0, %s6, %s4
  loop: start=0, step=1, limit=6
  $region2: #{double_conv.5} parent=0 // loop_pre_header
    _
  $region3: #{double_conv.5} parent=0 // loop_header
    %s9 = sphi 0, %s13
    %p10 = scmp.ge.s32.totalorder %s9, 6
    %s16 = sphi 0, %s28
    %s17 = sphi 0, %s24
    %s18 = sphi 0, %s16
    %s19 = sphi 0, %s17
    %s20 = sphi 0, %s18
    %s21 = sphi 0, %s19
    %s33 = sphi 0, %s35
    %s36 = sphi 0, %s33
    %s37 = sphi 0, %s36
    %s53 = sphi 0, %s37
    %s57 = sphi 0, %s57
    %s59 = sphi 0, %s57
    %s60 = sphi 0, %s59
    %s74 = sphi 0, %s60
    %s78 = sphi 0, %s78
    %s80 = sphi 0, %s78
    %s81 = sphi 0, %s80
    %s95 = sphi 0, %s81
    %s103 = sphi 0, %s105
    %s106 = sphi 0, %s103
    %s107 = sphi 0, %s106
    %s123 = sphi 0, %s107
  $region4: #{double_conv.5} parent=0 // loop_header_branch
    %12 = sbr.rel (%p10) target = $region8
  $region5: #{double_conv.5} parent=0 // loop_body
    %s14 = ssub.s32 %s9, 1
    %s15 = ssub.s32 %s9, 2
    %s22 = sadd.s32 1, %s17
    %p23 = scmp.ge.s32.totalorder %s22, 2
    %s24 = scalar_select %p23, 0, %s22
    %s25 = sadd.s32 1, %s16
    %s26 = scalar_select %p23, %s25, %s16
    %p27 = scmp.ge.s32.totalorder %s26, 2
    %s28 = scalar_select %p27, 0, %s26
    %s29 = ssub.s32 %s16, %s28
    %s30 = ssub.s32 %s17, %s24
    %s31 = sor.u32 %s29, %s30
    %p32 = scmp.eq.s32.totalorder %s31, 0
    %s34 = sadd.s32 %s33, 1
    %s35 = scalar_select %p32, %s33, %s34
    %p38 = pneg %p32
    %p39 = scmp.eq.s32.totalorder %s9, 3
    %p40 = por %p38, %p39
    %p41 = scmp.ne.s32.totalorder %s33, %s36
    %p42 = scmp.eq.s32.totalorder %s9, 0
    %p43 = por %p41, %p42
    %p44 = scmp.ne.s32.totalorder %s33, %s36
    %p45 = scmp.eq.s32.totalorder %s14, 3
    %p46 = por %p44, %p45
    %p47 = scmp.ne.s32.totalorder %s36, %s37
    %p48 = scmp.eq.s32.totalorder %s14, 0
    %p49 = por %p47, %p48
    %p50 = scmp.ne.s32.totalorder %s36, %s37
    %p51 = scmp.eq.s32.totalorder %s15, 3
    %p52 = por %p50, %p51
    %p54 = scmp.ne.s32.totalorder %s37, %s53
    %p55 = scmp.eq.s32.totalorder %s15, 0
    %p56 = por %p54, %p55
    %s58 = sadd.s32 %s57, 1
    %p61 = scmp.eq.s32.totalorder %s9, 3
    %p62 = scmp.ne.s32.totalorder %s57, %s59
    %p63 = scmp.eq.s32.totalorder %s9, 0
    %p64 = por %p62, %p63
    %p65 = scmp.ne.s32.totalorder %s57, %s59
    %p66 = scmp.eq.s32.totalorder %s14, 3
    %p67 = por %p65, %p66
    %p68 = scmp.ne.s32.totalorder %s59, %s60
    %p69 = scmp.eq.s32.totalorder %s14, 0
    %p70 = por %p68, %p69
    %p71 = scmp.ne.s32.totalorder %s59, %s60
    %p72 = scmp.eq.s32.totalorder %s15, 3
    %p73 = por %p71, %p72
    %p75 = scmp.ne.s32.totalorder %s60, %s74
    %p76 = scmp.eq.s32.totalorder %s15, 0
    %p77 = por %p75, %p76
    %s79 = sadd.s32 %s78, 1
    %p82 = scmp.eq.s32.totalorder %s9, 3
    %p83 = scmp.ne.s32.totalorder %s78, %s80
    %p84 = scmp.eq.s32.totalorder %s9, 0
    %p85 = por %p83, %p84
    %p86 = scmp.ne.s32.totalorder %s78, %s80
    %p87 = scmp.eq.s32.totalorder %s14, 3
    %p88 = por %p86, %p87
    %p89 = scmp.ne.s32.totalorder %s80, %s81
    %p90 = scmp.eq.s32.totalorder %s14, 0
    %p91 = por %p89, %p90
    %p92 = scmp.ne.s32.totalorder %s80, %s81
    %p93 = scmp.eq.s32.totalorder %s15, 3
    %p94 = por %p92, %p93
    %p96 = scmp.ne.s32.totalorder %s81, %s95
    %p97 = scmp.eq.s32.totalorder %s15, 0
    %p98 = por %p96, %p97
    %s99 = ssub.s32 %s16, %s28
    %s100 = ssub.s32 %s17, %s24
    %s101 = sor.u32 %s99, %s100
    %p102 = scmp.eq.s32.totalorder %s101, 0
    %s104 = sadd.s32 %s103, 1
    %s105 = scalar_select %p102, %s103, %s104
    %p108 = pneg %p102
    %p109 = scmp.eq.s32.totalorder %s9, 3
    %p110 = por %p108, %p109
    %p111 = scmp.ne.s32.totalorder %s103, %s106
    %p112 = scmp.eq.s32.totalorder %s9, 0
    %p113 = por %p111, %p112
    %p114 = scmp.ne.s32.totalorder %s103, %s106
    %p115 = scmp.eq.s32.totalorder %s14, 3
    %p116 = por %p114, %p115
    %p117 = scmp.ne.s32.totalorder %s106, %s107
    %p118 = scmp.eq.s32.totalorder %s14, 0
    %p119 = por %p117, %p118
    %p120 = scmp.ne.s32.totalorder %s106, %s107
    %p121 = scmp.eq.s32.totalorder %s15, 3
    %p122 = por %p120, %p121
    %p124 = scmp.ne.s32.totalorder %s107, %s123
    %p125 = scmp.eq.s32.totalorder %s15, 0
    %p126 = por %p124, %p125
    %p127 = scmp.le.s32.totalorder 1, %s9
    %p128 = scmp.lt.s32.totalorder %s9, 5
    %p129 = pnand %p127, %p128
    %p130 = pneg %p129
    // Predicated region
    $region9: #{double_conv.5} parent=5 // pred_check
      _
    $region10: #{double_conv.5} parent=5 // pred_check_branch
      %132 = sbr.rel (%p129) target = $region12
    $region11: #{double_conv.5} parent=5 // pred_region
      %s133 = ssub.s32 %s9, 1
      // Predicated region
      $region13: #{double_conv.5} parent=11 // pred_check
        %p134 = pneg %p70
      $region14: #{double_conv.5} parent=11 // pred_check_branch
        %136 = sbr.rel (%p134) target = $region16
      $region15: #{double_conv.5} parent=11 // pred_region
        _
      $region16: #{double_conv.5} parent=11 // pred_fallthru
        _
      // Predicated region
      $region17: #{double_conv.5} parent=11 // pred_check
        %p137 = pneg %p91
      $region18: #{double_conv.5} parent=11 // pred_check_branch
        %139 = sbr.rel (%p137) target = $region20
      $region19: #{double_conv.5} parent=11 // pred_region
        _
      $region20: #{double_conv.5} parent=11 // pred_fallthru
        _
    $region12: #{double_conv.5} parent=5 // pred_fallthru
      _
    %p140 = scmp.lt.s32.totalorder %s9, 4
    // Predicated region
    $region21: #{double_conv.5} parent=5 // pred_check
      %p141 = pneg %p140
    $region22: #{double_conv.5} parent=5 // pred_check_branch
      %143 = sbr.rel (%p141) target = $region24
    $region23: #{double_conv.5} parent=5 // pred_region
      // Predicated region
      $region25: #{double_conv.5} parent=23 // pred_check
        %p144 = pneg %p43
      $region26: #{double_conv.5} parent=23 // pred_check_branch
        %146 = sbr.rel (%p144) target = $region28
      $region27: #{double_conv.5} parent=23 // pred_region
        %s147 = smul.u32 8, %s17
        %p148 = scmp.lt.s32.totalorder %s16, 1
        %s149 = scalar_select %p148, %s16, 1
        %p150 = scmp.lt.s32.totalorder %s147, 15
        %s151 = scalar_select %p150, %s147, 15
        %s152 = smul.addr %s151, 2
        %s153 = smul.addr %s149, 32
        %s154 = sadd.s32 %s152, %s153
        %s155 = smul.addr %s154, 8
        %s156 = scalar_lea.vmem %s0, %s155
        %s157 = smul.u32 8, %s17
      $region28: #{double_conv.5} parent=23 // pred_fallthru
        _
    $region24: #{double_conv.5} parent=5 // pred_fallthru
      _
    %p158 = scmp.le.s32.totalorder 1, %s9
    %p159 = scmp.lt.s32.totalorder %s9, 5
    %p160 = pnand %p158, %p159
    %p161 = pneg %p160
    // Predicated region
    $region29: #{double_conv.5} parent=5 // pred_check
      _
    $region30: #{double_conv.5} parent=5 // pred_check_branch
      %163 = sbr.rel (%p160) target = $region32
    $region31: #{double_conv.5} parent=5 // pred_region
      %s164 = ssub.s32 %s9, 1
      %s165 = smul.u32 8, %s19
      %p166 = scmp.lt.s32.totalorder %s18, 1
      %s167 = scalar_select %p166, %s18, 1
      %p168 = scmp.lt.s32.totalorder %s165, 15
      %s169 = scalar_select %p168, %s165, 15
      %s170 = smul.addr %s169, 2
      %s171 = smul.addr %s167, 32
      %s172 = sadd.s32 %s170, %s171
      %s173 = smul.addr %s172, 8
      %s174 = scalar_lea.vmem %s0, %s173
      %p175 = pneg %p49
      %p176 = pneg %p46
      %p177 = pneg %p70
      %p178 = pneg %p67
      %p179 = pneg %p91
      %p180 = pneg %p88
      %p181 = pneg %p119
      %p182 = pneg %p116
      %s183 = smul.u32 8, %s19
      %p184 = scmp.lt.s32.totalorder %s18, 1
      %s185 = scalar_select %p184, %s18, 1
      %p186 = scmp.lt.s32.totalorder %s183, 15
      %s187 = scalar_select %p186, %s183, 15
      %s188 = smul.addr %s187, 2
      %s189 = smul.addr %s185, 32
      %s190 = sadd.s32 %s188, %s189
      %s191 = smul.addr %s190, 8
      %s192 = scalar_lea.vmem %s3, %s191
      %s193 = smul.u32 8, %s19
      %p194 = scmp.lt.s32.totalorder %s18, 1
      %s195 = scalar_select %p194, %s18, 1
      %p196 = scmp.lt.s32.totalorder %s193, 15
      %s197 = scalar_select %p196, %s193, 15
      %s198 = smul.addr %s197, 2
      %s199 = smul.addr %s195, 32
      %s200 = sadd.s32 %s198, %s199
      %s201 = smul.addr %s200, 8
      %s202 = scalar_lea.vmem %s0, %s201
      %s203 = smul.u32 8, %s19
      %s204 = smul.u32 8, %s19
      %p205 = scmp.lt.s32.totalorder %s18, 1
      %s206 = scalar_select %p205, %s18, 1
      %p207 = scmp.lt.s32.totalorder %s204, 15
      %s208 = scalar_select %p207, %s204, 15
      %s209 = smul.addr %s208, 2
      %s210 = smul.addr %s206, 32
      %s211 = sadd.s32 %s209, %s210
      %s212 = smul.addr %s211, 8
      %s213 = scalar_lea.vmem %s3, %s212
      %s214 = smul.u32 8, %s19
      %v215 = vld [vmem:[%s202] sm:$0xff]
      %v216 = vld [vmem:[%s202 + $0x8] sm:$0xff]
      %v217 = vld [vmem:[%s202 + $0x10] sm:$0xff]
      %v218 = vld [vmem:[%s202 + $0x18] sm:$0xff]
      %v219 = vld [vmem:[%s202 + $0x20] sm:$0xff]
      %v220 = vld [vmem:[%s202 + $0x28] sm:$0xff]
      %v221 = vld [vmem:[%s202 + $0x30] sm:$0xff]
      %v222 = vld [vmem:[%s202 + $0x38] sm:$0xff]
      %v223 = vld [vmem:[%s202 + $0x40] sm:$0xff]
      %v224 = vld [vmem:[%s202 + $0x48] sm:$0xff]
      %v225 = vld [vmem:[%s202 + $0x50] sm:$0xff]
      %v226 = vld [vmem:[%s202 + $0x58] sm:$0xff]
      %v227 = vld [vmem:[%s202 + $0x60] sm:$0xff]
      %v228 = vld [vmem:[%s202 + $0x68] sm:$0xff]
      %v229 = vld [vmem:[%s202 + $0x70] sm:$0xff]
      %v230 = vld [vmem:[%s202 + $0x78] sm:$0xff]
      %v231 = vld [vmem:[%s1] sm:$0x1]
      %v233 = vperm.slane %v231, 0
      %v235 = vmul.f32 %v215, %v233
      %v236 = vmul.f32 %v216, %v233
      %v237 = vmul.f32 %v217, %v233
      %v238 = vmul.f32 %v218, %v233
      %v239 = vmul.f32 %v219, %v233
      %v240 = vmul.f32 %v220, %v233
      %v241 = vmul.f32 %v221, %v233
      %v242 = vmul.f32 %v222, %v233
      %v243 = vmul.f32 %v223, %v233
      %v244 = vmul.f32 %v224, %v233
      %v245 = vmul.f32 %v225, %v233
      %v246 = vmul.f32 %v226, %v233
      %v247 = vmul.f32 %v227, %v233
      %v248 = vmul.f32 %v228, %v233
      %v249 = vmul.f32 %v229, %v233
      %v250 = vmul.f32 %v230, %v233
      %v251 = vld [vmem:[%s2] sm:$0x1]
      %v253 = vperm.slane %v251, 0
      %v255 = vadd.f32 %v235, %v253
      %v256 = vadd.f32 %v236, %v253
      %v257 = vadd.f32 %v237, %v253
      %v258 = vadd.f32 %v238, %v253
      %v259 = vadd.f32 %v239, %v253
      %v260 = vadd.f32 %v240, %v253
      %v261 = vadd.f32 %v241, %v253
      %v262 = vadd.f32 %v242, %v253
      %v263 = vadd.f32 %v243, %v253
      %v264 = vadd.f32 %v244, %v253
      %v265 = vadd.f32 %v245, %v253
      %v266 = vadd.f32 %v246, %v253
      %v267 = vadd.f32 %v247, %v253
      %v268 = vadd.f32 %v248, %v253
      %v269 = vadd.f32 %v249, %v253
      %v270 = vadd.f32 %v250, %v253
      %v271 = vmax.f32 %v255, 0.0
      %v272 = vmax.f32 %v256, 0.0
      %v273 = vmax.f32 %v257, 0.0
      %v274 = vmax.f32 %v258, 0.0
      %v275 = vmax.f32 %v259, 0.0
      %v276 = vmax.f32 %v260, 0.0
      %v277 = vmax.f32 %v261, 0.0
      %v278 = vmax.f32 %v262, 0.0
      %v279 = vmax.f32 %v263, 0.0
      %v280 = vmax.f32 %v264, 0.0
      %v281 = vmax.f32 %v265, 0.0
      %v282 = vmax.f32 %v266, 0.0
      %v283 = vmax.f32 %v267, 0.0
      %v284 = vmax.f32 %v268, 0.0
      %v285 = vmax.f32 %v269, 0.0
      %v286 = vmax.f32 %v270, 0.0
      %287 = vst [vmem:[%s213] sm:$0xff] %v271
      %288 = vst [vmem:[%s213 + $0x8] sm:$0xff] %v272
      %289 = vst [vmem:[%s213 + $0x10] sm:$0xff] %v273
      %290 = vst [vmem:[%s213 + $0x18] sm:$0xff] %v274
      %291 = vst [vmem:[%s213 + $0x20] sm:$0xff] %v275
      %292 = vst [vmem:[%s213 + $0x28] sm:$0xff] %v276
      %293 = vst [vmem:[%s213 + $0x30] sm:$0xff] %v277
      %294 = vst [vmem:[%s213 + $0x38] sm:$0xff] %v278
      %295 = vst [vmem:[%s213 + $0x40] sm:$0xff] %v279
      %296 = vst [vmem:[%s213 + $0x48] sm:$0xff] %v280
      %297 = vst [vmem:[%s213 + $0x50] sm:$0xff] %v281
      %298 = vst [vmem:[%s213 + $0x58] sm:$0xff] %v282
      %299 = vst [vmem:[%s213 + $0x60] sm:$0xff] %v283
      %300 = vst [vmem:[%s213 + $0x68] sm:$0xff] %v284
      %301 = vst [vmem:[%s213 + $0x70] sm:$0xff] %v285
      %302 = vst [vmem:[%s213 + $0x78] sm:$0xff] %v286
      %s303 = smul.u32 8, %s19
      %p304 = scmp.lt.s32.totalorder %s18, 1
      %s305 = scalar_select %p304, %s18, 1
      %p306 = scmp.lt.s32.totalorder %s303, 15
      %s307 = scalar_select %p306, %s303, 15
      %s308 = smul.addr %s307, 2
      %s309 = smul.addr %s305, 32
      %s310 = sadd.s32 %s308, %s309
      %s311 = smul.addr %s310, 8
      %s312 = scalar_lea.vmem %s3, %s311
      // Predicated region
      $region33: #{double_conv.5} parent=31 // pred_check
        %p313 = pneg %p116
      $region34: #{double_conv.5} parent=31 // pred_check_branch
        %315 = sbr.rel (%p313) target = $region36
      $region35: #{double_conv.5} parent=31 // pred_region
        %s316 = smul.u32 8, %s19
      $region36: #{double_conv.5} parent=31 // pred_fallthru
        _
    $region32: #{double_conv.5} parent=5 // pred_fallthru
      _
    %p317 = scmp.le.s32.totalorder 2, %s9
    // Predicated region
    $region37: #{double_conv.5} parent=5 // pred_check
      %p318 = pneg %p317
    $region38: #{double_conv.5} parent=5 // pred_check_branch
      %320 = sbr.rel (%p318) target = $region40
    $region39: #{double_conv.5} parent=5 // pred_region
      %s321 = ssub.s32 %s9, 2
      // Predicated region
      $region41: #{double_conv.5} parent=39 // pred_check
        %p322 = pneg %p122
      $region42: #{double_conv.5} parent=39 // pred_check_branch
        %324 = sbr.rel (%p322) target = $region44
      $region43: #{double_conv.5} parent=39 // pred_region
        %s325 = smul.u32 8, %s21
        %p326 = scmp.lt.s32.totalorder %s20, 1
        %s327 = scalar_select %p326, %s20, 1
        %p328 = scmp.lt.s32.totalorder %s325, 15
        %s329 = scalar_select %p328, %s325, 15
        %s330 = smul.addr %s329, 2
        %s331 = smul.addr %s327, 32
        %s332 = sadd.s32 %s330, %s331
        %s333 = smul.addr %s332, 8
        %s334 = scalar_lea.vmem %s3, %s333
      $region44: #{double_conv.5} parent=39 // pred_fallthru
        _
    $region40: #{double_conv.5} parent=5 // pred_fallthru
      _
  $region6: #{double_conv.5} parent=0 // loop_footer
    %s13 = sadd.s32 1, %s9
  $region7: #{double_conv.5} parent=0 // loop_footer_branch
    %8 = sbr.rel target = $region3
  $region8: #{double_conv.5} parent=0 // loop_exit
    _

// kernel: double_conv.4
$region0: #{double_conv.4}
  #allocation0 [shape = 'u32[]', space=smem, size = 0x4, offset = 0x4, fixed_abs, tag = 'smem constant byte address 0x4 - core index']
  #allocation1 [shape = 'u32[72,128]{1,0:T(1,128)}', space=vmem, size = 0x9000, scoped, tag = 'internal scratch']
  %s0 = inlined_call_operand.vmem [shape: f32[2,2,10,18,128], index: 0, kind: input, shape index: {}]
  %s1 = inlined_call_operand.vmem [shape: f32[1,128], index: 1, kind: input, shape index: {}]
  %s2 = inlined_call_operand.vmem [shape: f32[1,128], index: 2, kind: input, shape index: {}]
  %s3 = inlined_call_operand.vmem [shape: f32[1152,128], index: 3, kind: input, shape index: {}]
  %s4 = inlined_call_operand.vmem [shape: f32[1,128], index: 4, kind: input, shape index: {}]
  %s5 = inlined_call_operand.vmem [shape: f32[2,16,16,128], index: 5, kind: output, shape index: {0}]
  %s6 = inlined_call_operand.vmem [shape: f32[2,2,2,128], index: 6, kind: output, shape index: {1}]
  %7 = xla_tuple %s5, %s6
  %s8 = sld [smem:[#allocation0]]
  $region61: #{double_conv.4} parent=0
    _
  %s10 = ssub.s32 1, %s8
  %s11 = scalar_select 0, %s10, %s8
  loop: start=0, step=1, limit=6
  $region2: #{double_conv.4} parent=0 // loop_pre_header
    _
  $region3: #{double_conv.4} parent=0 // loop_header
    %s13 = sphi 0, %s17
    %p14 = scmp.ge.s32.totalorder %s13, 6
    %s20 = sphi 0, %s32
    %s21 = sphi 0, %s28
    %s22 = sphi 0, %s20
    %s23 = sphi 0, %s21
    %s24 = sphi 0, %s22
    %s25 = sphi 0, %s23
    %s37 = sphi 0, %s39
    %s40 = sphi 0, %s37
    %s41 = sphi 0, %s40
    %s57 = sphi 0, %s41
    %s61 = sphi 0, %s61
    %s63 = sphi 0, %s61
    %s64 = sphi 0, %s63
    %s78 = sphi 0, %s64
    %s82 = sphi 0, %s82
    %s84 = sphi 0, %s82
    %s85 = sphi 0, %s84
    %s99 = sphi 0, %s85
    %s103 = sphi 0, %s103
    %s105 = sphi 0, %s103
    %s106 = sphi 0, %s105
    %s120 = sphi 0, %s106
    %s124 = sphi 0, %s124
    %s126 = sphi 0, %s124
    %s127 = sphi 0, %s126
    %s141 = sphi 0, %s127
    %s149 = sphi 0, %s151
    %s152 = sphi 0, %s149
    %s153 = sphi 0, %s152
    %s169 = sphi 0, %s153
    %s177 = sphi 0, %s179
    %s180 = sphi 0, %s177
    %s181 = sphi 0, %s180
    %s197 = sphi 0, %s181
  $region4: #{double_conv.4} parent=0 // loop_header_branch
    %16 = sbr.rel (%p14) target = $region8
  $region5: #{double_conv.4} parent=0 // loop_body
    %s18 = ssub.s32 %s13, 1
    %s19 = ssub.s32 %s13, 2
    %s26 = sadd.s32 1, %s21
    %p27 = scmp.ge.s32.totalorder %s26, 2
    %s28 = scalar_select %p27, 0, %s26
    %s29 = sadd.s32 1, %s20
    %s30 = scalar_select %p27, %s29, %s20
    %p31 = scmp.ge.s32.totalorder %s30, 2
    %s32 = scalar_select %p31, 0, %s30
    %s33 = ssub.s32 %s20, %s32
    %s34 = ssub.s32 %s21, %s28
    %s35 = sor.u32 %s33, %s34
    %p36 = scmp.eq.s32.totalorder %s35, 0
    %s38 = sadd.s32 %s37, 1
    %s39 = scalar_select %p36, %s37, %s38
    %p42 = pneg %p36
    %p43 = scmp.eq.s32.totalorder %s13, 3
    %p44 = por %p42, %p43
    %p45 = scmp.ne.s32.totalorder %s37, %s40
    %p46 = scmp.eq.s32.totalorder %s13, 0
    %p47 = por %p45, %p46
    %p48 = scmp.ne.s32.totalorder %s37, %s40
    %p49 = scmp.eq.s32.totalorder %s18, 3
    %p50 = por %p48, %p49
    %p51 = scmp.ne.s32.totalorder %s40, %s41
    %p52 = scmp.eq.s32.totalorder %s18, 0
    %p53 = por %p51, %p52
    %p54 = scmp.ne.s32.totalorder %s40, %s41
    %p55 = scmp.eq.s32.totalorder %s19, 3
    %p56 = por %p54, %p55
    %p58 = scmp.ne.s32.totalorder %s41, %s57
    %p59 = scmp.eq.s32.totalorder %s19, 0
    %p60 = por %p58, %p59
    %s62 = sadd.s32 %s61, 1
    %p65 = scmp.eq.s32.totalorder %s13, 3
    %p66 = scmp.ne.s32.totalorder %s61, %s63
    %p67 = scmp.eq.s32.totalorder %s13, 0
    %p68 = por %p66, %p67
    %p69 = scmp.ne.s32.totalorder %s61, %s63
    %p70 = scmp.eq.s32.totalorder %s18, 3
    %p71 = por %p69, %p70
    %p72 = scmp.ne.s32.totalorder %s63, %s64
    %p73 = scmp.eq.s32.totalorder %s18, 0
    %p74 = por %p72, %p73
    %p75 = scmp.ne.s32.totalorder %s63, %s64
    %p76 = scmp.eq.s32.totalorder %s19, 3
    %p77 = por %p75, %p76
    %p79 = scmp.ne.s32.totalorder %s64, %s78
    %p80 = scmp.eq.s32.totalorder %s19, 0
    %p81 = por %p79, %p80
    %s83 = sadd.s32 %s82, 1
    %p86 = scmp.eq.s32.totalorder %s13, 3
    %p87 = scmp.ne.s32.totalorder %s82, %s84
    %p88 = scmp.eq.s32.totalorder %s13, 0
    %p89 = por %p87, %p88
    %p90 = scmp.ne.s32.totalorder %s82, %s84
    %p91 = scmp.eq.s32.totalorder %s18, 3
    %p92 = por %p90, %p91
    %p93 = scmp.ne.s32.totalorder %s84, %s85
    %p94 = scmp.eq.s32.totalorder %s18, 0
    %p95 = por %p93, %p94
    %p96 = scmp.ne.s32.totalorder %s84, %s85
    %p97 = scmp.eq.s32.totalorder %s19, 3
    %p98 = por %p96, %p97
    %p100 = scmp.ne.s32.totalorder %s85, %s99
    %p101 = scmp.eq.s32.totalorder %s19, 0
    %p102 = por %p100, %p101
    %s104 = sadd.s32 %s103, 1
    %p107 = scmp.eq.s32.totalorder %s13, 3
    %p108 = scmp.ne.s32.totalorder %s103, %s105
    %p109 = scmp.eq.s32.totalorder %s13, 0
    %p110 = por %p108, %p109
    %p111 = scmp.ne.s32.totalorder %s103, %s105
    %p112 = scmp.eq.s32.totalorder %s18, 3
    %p113 = por %p111, %p112
    %p114 = scmp.ne.s32.totalorder %s105, %s106
    %p115 = scmp.eq.s32.totalorder %s18, 0
    %p116 = por %p114, %p115
    %p117 = scmp.ne.s32.totalorder %s105, %s106
    %p118 = scmp.eq.s32.totalorder %s19, 3
    %p119 = por %p117, %p118
    %p121 = scmp.ne.s32.totalorder %s106, %s120
    %p122 = scmp.eq.s32.totalorder %s19, 0
    %p123 = por %p121, %p122
    %s125 = sadd.s32 %s124, 1
    %p128 = scmp.eq.s32.totalorder %s13, 3
    %p129 = scmp.ne.s32.totalorder %s124, %s126
    %p130 = scmp.eq.s32.totalorder %s13, 0
    %p131 = por %p129, %p130
    %p132 = scmp.ne.s32.totalorder %s124, %s126
    %p133 = scmp.eq.s32.totalorder %s18, 3
    %p134 = por %p132, %p133
    %p135 = scmp.ne.s32.totalorder %s126, %s127
    %p136 = scmp.eq.s32.totalorder %s18, 0
    %p137 = por %p135, %p136
    %p138 = scmp.ne.s32.totalorder %s126, %s127
    %p139 = scmp.eq.s32.totalorder %s19, 3
    %p140 = por %p138, %p139
    %p142 = scmp.ne.s32.totalorder %s127, %s141
    %p143 = scmp.eq.s32.totalorder %s19, 0
    %p144 = por %p142, %p143
    %s145 = ssub.s32 %s20, %s32
    %s146 = ssub.s32 %s21, %s28
    %s147 = sor.u32 %s145, %s146
    %p148 = scmp.eq.s32.totalorder %s147, 0
    %s150 = sadd.s32 %s149, 1
    %s151 = scalar_select %p148, %s149, %s150
    %p154 = pneg %p148
    %p155 = scmp.eq.s32.totalorder %s13, 3
    %p156 = por %p154, %p155
    %p157 = scmp.ne.s32.totalorder %s149, %s152
    %p158 = scmp.eq.s32.totalorder %s13, 0
    %p159 = por %p157, %p158
    %p160 = scmp.ne.s32.totalorder %s149, %s152
    %p161 = scmp.eq.s32.totalorder %s18, 3
    %p162 = por %p160, %p161
    %p163 = scmp.ne.s32.totalorder %s152, %s153
    %p164 = scmp.eq.s32.totalorder %s18, 0
    %p165 = por %p163, %p164
    %p166 = scmp.ne.s32.totalorder %s152, %s153
    %p167 = scmp.eq.s32.totalorder %s19, 3
    %p168 = por %p166, %p167
    %p170 = scmp.ne.s32.totalorder %s153, %s169
    %p171 = scmp.eq.s32.totalorder %s19, 0
    %p172 = por %p170, %p171
    %s173 = ssub.s32 %s20, %s32
    %s174 = ssub.s32 %s21, %s28
    %s175 = sor.u32 %s173, %s174
    %p176 = scmp.eq.s32.totalorder %s175, 0
    %s178 = sadd.s32 %s177, 1
    %s179 = scalar_select %p176, %s177, %s178
    %p182 = pneg %p176
    %p183 = scmp.eq.s32.totalorder %s13, 3
    %p184 = por %p182, %p183
    %p185 = scmp.ne.s32.totalorder %s177, %s180
    %p186 = scmp.eq.s32.totalorder %s13, 0
    %p187 = por %p185, %p186
    %p188 = scmp.ne.s32.totalorder %s177, %s180
    %p189 = scmp.eq.s32.totalorder %s18, 3
    %p190 = por %p188, %p189
    %p191 = scmp.ne.s32.totalorder %s180, %s181
    %p192 = scmp.eq.s32.totalorder %s18, 0
    %p193 = por %p191, %p192
    %p194 = scmp.ne.s32.totalorder %s180, %s181
    %p195 = scmp.eq.s32.totalorder %s19, 3
    %p196 = por %p194, %p195
    %p198 = scmp.ne.s32.totalorder %s181, %s197
    %p199 = scmp.eq.s32.totalorder %s19, 0
    %p200 = por %p198, %p199
    %p201 = scmp.le.s32.totalorder 1, %s13
    %p202 = scmp.lt.s32.totalorder %s13, 5
    %p203 = pnand %p201, %p202
    %p204 = pneg %p203
    // Predicated region
    $region9: #{double_conv.4} parent=5 // pred_check
      _
    $region10: #{double_conv.4} parent=5 // pred_check_branch
      %206 = sbr.rel (%p203) target = $region12
    $region11: #{double_conv.4} parent=5 // pred_region
      %s207 = ssub.s32 %s13, 1
      // Predicated region
      $region13: #{double_conv.4} parent=11 // pred_check
        %p208 = pneg %p74
      $region14: #{double_conv.4} parent=11 // pred_check_branch
        %210 = sbr.rel (%p208) target = $region16
      $region15: #{double_conv.4} parent=11 // pred_region
        _
      $region16: #{double_conv.4} parent=11 // pred_fallthru
        _
      // Predicated region
      $region17: #{double_conv.4} parent=11 // pred_check
        %p211 = pneg %p95
      $region18: #{double_conv.4} parent=11 // pred_check_branch
        %213 = sbr.rel (%p211) target = $region20
      $region19: #{double_conv.4} parent=11 // pred_region
        _
      $region20: #{double_conv.4} parent=11 // pred_fallthru
        _
      // Predicated region
      $region21: #{double_conv.4} parent=11 // pred_check
        %p214 = pneg %p116
      $region22: #{double_conv.4} parent=11 // pred_check_branch
        %216 = sbr.rel (%p214) target = $region24
      $region23: #{double_conv.4} parent=11 // pred_region
        _
      $region24: #{double_conv.4} parent=11 // pred_fallthru
        _
      // Predicated region
      $region25: #{double_conv.4} parent=11 // pred_check
        %p217 = pneg %p137
      $region26: #{double_conv.4} parent=11 // pred_check_branch
        %219 = sbr.rel (%p217) target = $region28
      $region27: #{double_conv.4} parent=11 // pred_region
        _
      $region28: #{double_conv.4} parent=11 // pred_fallthru
        _
    $region12: #{double_conv.4} parent=5 // pred_fallthru
      _
    %p220 = scmp.lt.s32.totalorder %s13, 4
    // Predicated region
    $region29: #{double_conv.4} parent=5 // pred_check
      %p221 = pneg %p220
    $region30: #{double_conv.4} parent=5 // pred_check_branch
      %223 = sbr.rel (%p221) target = $region32
    $region31: #{double_conv.4} parent=5 // pred_region
      // Predicated region
      $region33: #{double_conv.4} parent=31 // pred_check
        %p224 = pneg %p47
      $region34: #{double_conv.4} parent=31 // pred_check_branch
        %226 = sbr.rel (%p224) target = $region36
      $region35: #{double_conv.4} parent=31 // pred_region
        %p227 = scmp.lt.s32.totalorder %s20, 1
        %s228 = scalar_select %p227, %s20, 1
        %p229 = scmp.lt.s32.totalorder %s21, 1
        %s230 = scalar_select %p229, %s21, 1
        %s231 = smul.addr %s230, 30
        %s232 = smul.addr %s228, 60
        %s233 = sadd.s32 %s231, %s232
        %s234 = smul.addr %s233, 8
        %s235 = scalar_lea.vmem %s0, %s234
      $region36: #{double_conv.4} parent=31 // pred_fallthru
        _
    $region32: #{double_conv.4} parent=5 // pred_fallthru
      _
    %p236 = scmp.le.s32.totalorder 1, %s13
    %p237 = scmp.lt.s32.totalorder %s13, 5
    %p238 = pnand %p236, %p237
    %p239 = pneg %p238
    // Predicated region
    $region37: #{double_conv.4} parent=5 // pred_check
      _
    $region38: #{double_conv.4} parent=5 // pred_check_branch
      %241 = sbr.rel (%p238) target = $region40
    $region39: #{double_conv.4} parent=5 // pred_region
      %s242 = ssub.s32 %s13, 1
      %p243 = scmp.lt.s32.totalorder %s22, 1
      %s244 = scalar_select %p243, %s22, 1
      %p245 = scmp.lt.s32.totalorder %s23, 1
      %s246 = scalar_select %p245, %s23, 1
      %s247 = smul.addr %s246, 30
      %s248 = smul.addr %s244, 60
      %s249 = sadd.s32 %s247, %s248
      %s250 = smul.addr %s249, 8
      %s251 = scalar_lea.vmem %s0, %s250
      %p252 = pneg %p53
      %p253 = pneg %p50
      %p254 = pneg %p74
      %p255 = pneg %p71
      %p256 = pneg %p95
      %p257 = pneg %p92
      %p258 = pneg %p116
      %p259 = pneg %p113
      %p260 = pneg %p137
      %p261 = pneg %p134
      %p262 = pneg %p165
      %p263 = pneg %p162
      %s264 = smul.u32 8, %s23
      %p265 = scmp.lt.s32.totalorder %s22, 1
      %s266 = scalar_select %p265, %s22, 1
      %p267 = scmp.lt.s32.totalorder %s264, 15
      %s268 = scalar_select %p267, %s264, 15
      %s269 = smul.addr %s268, 2
      %s270 = smul.addr %s266, 32
      %s271 = sadd.s32 %s269, %s270
      %s272 = smul.addr %s271, 8
      %s273 = scalar_lea.vmem %s5, %s272
      %p274 = pneg %p193
      %p275 = pneg %p190
      %p276 = scmp.lt.s32.totalorder %s22, 1
      %s277 = scalar_select %p276, %s22, 1
      %p278 = scmp.lt.s32.totalorder %s23, 1
      %s279 = scalar_select %p278, %s23, 1
      %s280 = smul.addr %s277, 2
      %s281 = sadd.s32 %s279, %s280
      %s282 = smul.addr %s281, 2
      %s283 = scalar_lea.vmem %s6, %s282
      %p284 = scmp.lt.s32.totalorder %s22, 1
      %s285 = scalar_select %p284, %s22, 1
      %p286 = scmp.lt.s32.totalorder %s23, 1
      %s287 = scalar_select %p286, %s23, 1
      %s288 = smul.addr %s287, 30
      %s289 = smul.addr %s285, 60
      %s290 = sadd.s32 %s288, %s289
      %s291 = smul.addr %s290, 8
      %s292 = scalar_lea.vmem %s0, %s291
      %s293 = smul.u32 8, %s23
      %p294 = scmp.lt.s32.totalorder %s22, 1
      %s295 = scalar_select %p294, %s22, 1
      %p296 = scmp.lt.s32.totalorder %s293, 15
      %s297 = scalar_select %p296, %s293, 15
      %s298 = smul.addr %s297, 2
      %s299 = smul.addr %s295, 32
      %s300 = sadd.s32 %s298, %s299
      %s301 = smul.addr %s300, 8
      %s302 = scalar_lea.vmem %s5, %s301
      %s303 = smul.u32 8, %s23
      %p304 = scmp.lt.s32.totalorder %s22, 1
      %s305 = scalar_select %p304, %s22, 1
      %p306 = scmp.lt.s32.totalorder %s23, 1
      %s307 = scalar_select %p306, %s23, 1
      %s308 = smul.addr %s305, 2
      %s309 = sadd.s32 %s307, %s308
      %s310 = smul.addr %s309, 2
      %s311 = scalar_lea.vmem %s6, %s310
      %v312 = vld [vmem:[%s292] sm:$0xff]
      %v313 = vld [vmem:[%s292 + $0x8] sm:$0xff]
      %v314 = vld [vmem:[%s292 + $0x10] sm:$0x3]
      %v315 = vld [vmem:[%s292 + $0x18] sm:$0xff]
      %v316 = vld [vmem:[%s292 + $0x20] sm:$0xff]
      %v317 = vld [vmem:[%s292 + $0x28] sm:$0x3]
      %v318 = vld [vmem:[%s292 + $0x30] sm:$0xff]
      %v319 = vld [vmem:[%s292 + $0x38] sm:$0xff]
      %v320 = vld [vmem:[%s292 + $0x40] sm:$0x3]
      %v321 = vld [vmem:[%s292 + $0x48] sm:$0xff]
      %v322 = vld [vmem:[%s292 + $0x50] sm:$0xff]
      %v323 = vld [vmem:[%s292 + $0x58] sm:$0x3]
      %v324 = vld [vmem:[%s292 + $0x60] sm:$0xff]
      %v325 = vld [vmem:[%s292 + $0x68] sm:$0xff]
      %v326 = vld [vmem:[%s292 + $0x70] sm:$0x3]
      %v327 = vld [vmem:[%s292 + $0x78] sm:$0xff]
      %v328 = vld [vmem:[%s292 + $0x80] sm:$0xff]
      %v329 = vld [vmem:[%s292 + $0x88] sm:$0x3]
      %v330 = vld [vmem:[%s292 + $0x90] sm:$0xff]
      %v331 = vld [vmem:[%s292 + $0x98] sm:$0xff]
      %v332 = vld [vmem:[%s292 + $0xa0] sm:$0x3]
      %v333 = vld [vmem:[%s292 + $0xa8] sm:$0xff]
      %v334 = vld [vmem:[%s292 + $0xb0] sm:$0xff]
      %v335 = vld [vmem:[%s292 + $0xb8] sm:$0x3]
      %v336 = vld [vmem:[%s292 + $0xc0] sm:$0xff]
      %v337 = vld [vmem:[%s292 + $0xc8] sm:$0xff]
      %v338 = vld [vmem:[%s292 + $0xd0] sm:$0x3]
      %v339 = vld [vmem:[%s292 + $0xd8] sm:$0xff]
      %v340 = vld [vmem:[%s292 + $0xe0] sm:$0xff]
      %v341 = vld [vmem:[%s292 + $0xe8] sm:$0x3]
      %v342 = vld [vmem:[%s1] sm:$0x1]
      %v344 = vperm.slane %v342, 0
      %v346 = vmul.f32 %v312, %v344
      %v347 = vmul.f32 %v313, %v344
      %v348 = vmul.f32 %v314, %v344
      %v349 = vmul.f32 %v315, %v344
      %v350 = vmul.f32 %v316, %v344
      %v351 = vmul.f32 %v317, %v344
      %v352 = vmul.f32 %v318, %v344
      %v353 = vmul.f32 %v319, %v344
      %v354 = vmul.f32 %v320, %v344
      %v355 = vmul.f32 %v321, %v344
      %v356 = vmul.f32 %v322, %v344
      %v357 = vmul.f32 %v323, %v344
      %v358 = vmul.f32 %v324, %v344
      %v359 = vmul.f32 %v325, %v344
      %v360 = vmul.f32 %v326, %v344
      %v361 = vmul.f32 %v327, %v344
      %v362 = vmul.f32 %v328, %v344
      %v363 = vmul.f32 %v329, %v344
      %v364 = vmul.f32 %v330, %v344
      %v365 = vmul.f32 %v331, %v344
      %v366 = vmul.f32 %v332, %v344
      %v367 = vmul.f32 %v333, %v344
      %v368 = vmul.f32 %v334, %v344
      %v369 = vmul.f32 %v335, %v344
      %v370 = vmul.f32 %v336, %v344
      %v371 = vmul.f32 %v337, %v344
      %v372 = vmul.f32 %v338, %v344
      %v373 = vmul.f32 %v339, %v344
      %v374 = vmul.f32 %v340, %v344
      %v375 = vmul.f32 %v341, %v344
      %v376 = vld [vmem:[%s2] sm:$0x1]
      %v378 = vperm.slane %v376, 0
      %v380 = vadd.f32 %v346, %v378
      %v381 = vadd.f32 %v347, %v378
      %v382 = vadd.f32 %v348, %v378
      %v383 = vadd.f32 %v349, %v378
      %v384 = vadd.f32 %v350, %v378
      %v385 = vadd.f32 %v351, %v378
      %v386 = vadd.f32 %v352, %v378
      %v387 = vadd.f32 %v353, %v378
      %v388 = vadd.f32 %v354, %v378
      %v389 = vadd.f32 %v355, %v378
      %v390 = vadd.f32 %v356, %v378
      %v391 = vadd.f32 %v357, %v378
      %v392 = vadd.f32 %v358, %v378
      %v393 = vadd.f32 %v359, %v378
      %v394 = vadd.f32 %v360, %v378
      %v395 = vadd.f32 %v361, %v378
      %v396 = vadd.f32 %v362, %v378
      %v397 = vadd.f32 %v363, %v378
      %v398 = vadd.f32 %v364, %v378
      %v399 = vadd.f32 %v365, %v378
      %v400 = vadd.f32 %v366, %v378
      %v401 = vadd.f32 %v367, %v378
      %v402 = vadd.f32 %v368, %v378
      %v403 = vadd.f32 %v369, %v378
      %v404 = vadd.f32 %v370, %v378
      %v405 = vadd.f32 %v371, %v378
      %v406 = vadd.f32 %v372, %v378
      %v407 = vadd.f32 %v373, %v378
      %v408 = vadd.f32 %v374, %v378
      %v409 = vadd.f32 %v375, %v378
      %v410 = vmax.f32 %v380, 0.0
      %v411 = vmax.f32 %v381, 0.0
      %v412 = vmax.f32 %v382, 0.0
      %v413 = vmax.f32 %v383, 0.0
      %v414 = vmax.f32 %v384, 0.0
      %v415 = vmax.f32 %v385, 0.0
      %v416 = vmax.f32 %v386, 0.0
      %v417 = vmax.f32 %v387, 0.0
      %v418 = vmax.f32 %v388, 0.0
      %v419 = vmax.f32 %v389, 0.0
      %v420 = vmax.f32 %v390, 0.0
      %v421 = vmax.f32 %v391, 0.0
      %v422 = vmax.f32 %v392, 0.0
      %v423 = vmax.f32 %v393, 0.0
      %v424 = vmax.f32 %v394, 0.0
      %v425 = vmax.f32 %v395, 0.0
      %v426 = vmax.f32 %v396, 0.0
      %v427 = vmax.f32 %v397, 0.0
      %v428 = vmax.f32 %v398, 0.0
      %v429 = vmax.f32 %v399, 0.0
      %v430 = vmax.f32 %v400, 0.0
      %v431 = vmax.f32 %v401, 0.0
      %v432 = vmax.f32 %v402, 0.0
      %v433 = vmax.f32 %v403, 0.0
      %v434 = vmax.f32 %v404, 0.0
      %v435 = vmax.f32 %v405, 0.0
      %v436 = vmax.f32 %v406, 0.0
      %v437 = vmax.f32 %v407, 0.0
      %v438 = vmax.f32 %v408, 0.0
      %v439 = vmax.f32 %v409, 0.0
      %s440 = smul.u32 %s23, 8
      %v441 = vstv %s440
      %v442 = vadd.s32 %v441, 1
      %v443 = vadd.s32 %v441, 2
      %v444 = vadd.s32 %v441, 3
      %v445 = vadd.s32 %v441, 4
      %v446 = vadd.s32 %v441, 5
      %v447 = vadd.s32 %v441, 6
      %v448 = vadd.s32 %v441, 7
      %v449 = vadd.s32 %v441, 8
      %v450 = vadd.s32 %v441, 9
      %v451 = vlaneseq
      %v452 = vshrl.u32 %v451, 7
      %v453 = vadd.s32 %v452, 8
      %v454 = vadd.s32 %v452, 16
      %vm455 = vcmp.ge.s32.totalorder %v441, 1
      %vm456 = vcmp.ge.s32.totalorder %v442, 1
      %vm457 = vcmp.ge.s32.totalorder %v443, 1
      %vm458 = vcmp.ge.s32.totalorder %v444, 1
      %vm459 = vcmp.ge.s32.totalorder %v445, 1
      %vm460 = vcmp.ge.s32.totalorder %v446, 1
      %vm461 = vcmp.ge.s32.totalorder %v447, 1
      %vm462 = vcmp.ge.s32.totalorder %v448, 1
      %vm463 = vcmp.ge.s32.totalorder %v449, 1
      %vm464 = vcmp.ge.s32.totalorder %v450, 1
      %vm465 = vcmp.le.s32.totalorder %v441, 16
      %vm466 = vcmp.le.s32.totalorder %v442, 16
      %vm467 = vcmp.le.s32.totalorder %v443, 16
      %vm468 = vcmp.le.s32.totalorder %v444, 16
      %vm469 = vcmp.le.s32.totalorder %v445, 16
      %vm470 = vcmp.le.s32.totalorder %v446, 16
      %vm471 = vcmp.le.s32.totalorder %v447, 16
      %vm472 = vcmp.le.s32.totalorder %v448, 16
      %vm473 = vcmp.le.s32.totalorder %v449, 16
      %vm474 = vcmp.le.s32.totalorder %v450, 16
      %vm475 = vmand %vm455, %vm465
      %vm476 = vmand %vm456, %vm466
      %vm477 = vmand %vm457, %vm467
      %vm478 = vmand %vm458, %vm468
      %vm479 = vmand %vm459, %vm469
      %vm480 = vmand %vm460, %vm470
      %vm481 = vmand %vm461, %vm471
      %vm482 = vmand %vm462, %vm472
      %vm483 = vmand %vm463, %vm473
      %vm484 = vmand %vm464, %vm474
      %vm485 = vcmp.ge.s32.totalorder %v452, 1
      %vm486 = vcmp.ge.s32.totalorder %v453, 1
      %vm487 = vcmp.ge.s32.totalorder %v454, 1
      %vm488 = vmand %vm475, %vm485
      %vm489 = vmand %vm475, %vm486
      %vm490 = vmand %vm475, %vm487
      %vm491 = vmand %vm476, %vm485
      %vm492 = vmand %vm476, %vm486
      %vm493 = vmand %vm476, %vm487
      %vm494 = vmand %vm477, %vm485
      %vm495 = vmand %vm477, %vm486
      %vm496 = vmand %vm477, %vm487
      %vm497 = vmand %vm478, %vm485
      %vm498 = vmand %vm478, %vm486
      %vm499 = vmand %vm478, %vm487
      %vm500 = vmand %vm479, %vm485
      %vm501 = vmand %vm479, %vm486
      %vm502 = vmand %vm479, %vm487
      %vm503 = vmand %vm480, %vm485
      %vm504 = vmand %vm480, %vm486
      %vm505 = vmand %vm480, %vm487
      %vm506 = vmand %vm481, %vm485
      %vm507 = vmand %vm481, %vm486
      %vm508 = vmand %vm481, %vm487
      %vm509 = vmand %vm482, %vm485
      %vm510 = vmand %vm482, %vm486
      %vm511 = vmand %vm482, %vm487
      %vm512 = vmand %vm483, %vm485
      %vm513 = vmand %vm483, %vm486
      %vm514 = vmand %vm483, %vm487
      %vm515 = vmand %vm484, %vm485
      %vm516 = vmand %vm484, %vm486
      %vm517 = vmand %vm484, %vm487
      %vm518 = vcmp.le.s32.totalorder %v452, 16
      %vm519 = vcmp.le.s32.totalorder %v453, 16
      %vm520 = vcmp.le.s32.totalorder %v454, 16
      %vm521 = vmand %vm488, %vm518
      %vm522 = vmand %vm489, %vm519
      %vm523 = vmand %vm490, %vm520
      %vm524 = vmand %vm491, %vm518
      %vm525 = vmand %vm492, %vm519
      %vm526 = vmand %vm493, %vm520
      %vm527 = vmand %vm494, %vm518
      %vm528 = vmand %vm495, %vm519
      %vm529 = vmand %vm496, %vm520
      %vm530 = vmand %vm497, %vm518
      %vm531 = vmand %vm498, %vm519
      %vm532 = vmand %vm499, %vm520
      %vm533 = vmand %vm500, %vm518
      %vm534 = vmand %vm501, %vm519
      %vm535 = vmand %vm502, %vm520
      %vm536 = vmand %vm503, %vm518
      %vm537 = vmand %vm504, %vm519
      %vm538 = vmand %vm505, %vm520
      %vm539 = vmand %vm506, %vm518
      %vm540 = vmand %vm507, %vm519
      %vm541 = vmand %vm508, %vm520
      %vm542 = vmand %vm509, %vm518
      %vm543 = vmand %vm510, %vm519
      %vm544 = vmand %vm511, %vm520
      %vm545 = vmand %vm512, %vm518
      %vm546 = vmand %vm513, %vm519
      %vm547 = vmand %vm514, %vm520
      %vm548 = vmand %vm515, %vm518
      %vm549 = vmand %vm516, %vm519
      %vm550 = vmand %vm517, %vm520
      %v551 = vsel %vm521, 1, 0
      %v552 = vsel %vm522, 1, 0
      %v553 = vsel %vm523, 1, 0
      %v554 = vsel %vm524, 1, 0
      %v555 = vsel %vm525, 1, 0
      %v556 = vsel %vm526, 1, 0
      %v557 = vsel %vm527, 1, 0
      %v558 = vsel %vm528, 1, 0
      %v559 = vsel %vm529, 1, 0
      %v560 = vsel %vm530, 1, 0
      %v561 = vsel %vm531, 1, 0
      %v562 = vsel %vm532, 1, 0
      %v563 = vsel %vm533, 1, 0
      %v564 = vsel %vm534, 1, 0
      %v565 = vsel %vm535, 1, 0
      %v566 = vsel %vm536, 1, 0
      %v567 = vsel %vm537, 1, 0
      %v568 = vsel %vm538, 1, 0
      %v569 = vsel %vm539, 1, 0
      %v570 = vsel %vm540, 1, 0
      %v571 = vsel %vm541, 1, 0
      %v572 = vsel %vm542, 1, 0
      %v573 = vsel %vm543, 1, 0
      %v574 = vsel %vm544, 1, 0
      %v575 = vsel %vm545, 1, 0
      %v576 = vsel %vm546, 1, 0
      %v577 = vsel %vm547, 1, 0
      %v578 = vsel %vm548, 1, 0
      %v579 = vsel %vm549, 1, 0
      %v580 = vsel %vm550, 1, 0
      %vm581 = vcmp.eq.s32.totalorder %v551, 1
      %vm582 = vcmp.eq.s32.totalorder %v552, 1
      %vm583 = vcmp.eq.s32.totalorder %v553, 1
      %vm584 = vcmp.eq.s32.totalorder %v554, 1
      %vm585 = vcmp.eq.s32.totalorder %v555, 1
      %vm586 = vcmp.eq.s32.totalorder %v556, 1
      %vm587 = vcmp.eq.s32.totalorder %v557, 1
      %vm588 = vcmp.eq.s32.totalorder %v558, 1
      %vm589 = vcmp.eq.s32.totalorder %v559, 1
      %vm590 = vcmp.eq.s32.totalorder %v560, 1
      %vm591 = vcmp.eq.s32.totalorder %v561, 1
      %vm592 = vcmp.eq.s32.totalorder %v562, 1
      %vm593 = vcmp.eq.s32.totalorder %v563, 1
      %vm594 = vcmp.eq.s32.totalorder %v564, 1
      %vm595 = vcmp.eq.s32.totalorder %v565, 1
      %vm596 = vcmp.eq.s32.totalorder %v566, 1
      %vm597 = vcmp.eq.s32.totalorder %v567, 1
      %vm598 = vcmp.eq.s32.totalorder %v568, 1
      %vm599 = vcmp.eq.s32.totalorder %v569, 1
      %vm600 = vcmp.eq.s32.totalorder %v570, 1
      %vm601 = vcmp.eq.s32.totalorder %v571, 1
      %vm602 = vcmp.eq.s32.totalorder %v572, 1
      %vm603 = vcmp.eq.s32.totalorder %v573, 1
      %vm604 = vcmp.eq.s32.totalorder %v574, 1
      %vm605 = vcmp.eq.s32.totalorder %v575, 1
      %vm606 = vcmp.eq.s32.totalorder %v576, 1
      %vm607 = vcmp.eq.s32.totalorder %v577, 1
      %vm608 = vcmp.eq.s32.totalorder %v578, 1
      %vm609 = vcmp.eq.s32.totalorder %v579, 1
      %vm610 = vcmp.eq.s32.totalorder %v580, 1
      %v611 = vsel %vm581, %v410, 0.0
      %v612 = vsel %vm582, %v411, 0.0
      %v613 = vsel %vm583, %v412, 0.0
      %v614 = vsel %vm584, %v413, 0.0
      %v615 = vsel %vm585, %v414, 0.0
      %v616 = vsel %vm586, %v415, 0.0
      %v617 = vsel %vm587, %v416, 0.0
      %v618 = vsel %vm588, %v417, 0.0
      %v619 = vsel %vm589, %v418, 0.0
      %v620 = vsel %vm590, %v419, 0.0
      %v621 = vsel %vm591, %v420, 0.0
      %v622 = vsel %vm592, %v421, 0.0
      %v623 = vsel %vm593, %v422, 0.0
      %v624 = vsel %vm594, %v423, 0.0
      %v625 = vsel %vm595, %v424, 0.0
      %v626 = vsel %vm596, %v425, 0.0
      %v627 = vsel %vm597, %v426, 0.0
      %v628 = vsel %vm598, %v427, 0.0
      %v629 = vsel %vm599, %v428, 0.0
      %v630 = vsel %vm600, %v429, 0.0
      %v631 = vsel %vm601, %v430, 0.0
      %v632 = vsel %vm602, %v431, 0.0
      %v633 = vsel %vm603, %v432, 0.0
      %v634 = vsel %vm604, %v433, 0.0
      %v635 = vsel %vm605, %v434, 0.0
      %v636 = vsel %vm606, %v435, 0.0
      %v637 = vsel %vm607, %v436, 0.0
      %v638 = vsel %vm608, %v437, 0.0
      %v639 = vsel %vm609, %v438, 0.0
      %v640 = vsel %vm610, %v439, 0.0
      %vm665 = vcmask 1046528
      %v666 = vrot.slane %v611, 1
      %v667 = vrot.slane %v612, 1
      %v668 = vsel %vm665, %v666, %v667
      %v669 = vrot.slane %v613, 1
      %v670 = vsel %vm665, %v667, %v669
      %v671 = vrot.slane %v614, 1
      %v672 = vrot.slane %v615, 1
      %v673 = vsel %vm665, %v671, %v672
      %v674 = vrot.slane %v616, 1
      %v675 = vsel %vm665, %v672, %v674
      %v676 = vrot.slane %v617, 1
      %v677 = vrot.slane %v618, 1
      %v678 = vsel %vm665, %v676, %v677
      %v679 = vrot.slane %v619, 1
      %v680 = vsel %vm665, %v677, %v679
      %v681 = vrot.slane %v620, 1
      %v682 = vrot.slane %v621, 1
      %v683 = vsel %vm665, %v681, %v682
      %v684 = vrot.slane %v622, 1
      %v685 = vsel %vm665, %v682, %v684
      %v686 = vrot.slane %v623, 1
      %v687 = vrot.slane %v624, 1
      %v688 = vsel %vm665, %v686, %v687
      %v689 = vrot.slane %v625, 1
      %v690 = vsel %vm665, %v687, %v689
      %v691 = vrot.slane %v626, 1
      %v692 = vrot.slane %v627, 1
      %v693 = vsel %vm665, %v691, %v692
      %v694 = vrot.slane %v628, 1
      %v695 = vsel %vm665, %v692, %v694
      %v696 = vrot.slane %v629, 1
      %v697 = vrot.slane %v630, 1
      %v698 = vsel %vm665, %v696, %v697
      %v699 = vrot.slane %v631, 1
      %v700 = vsel %vm665, %v697, %v699
      %v701 = vrot.slane %v632, 1
      %v702 = vrot.slane %v633, 1
      %v703 = vsel %vm665, %v701, %v702
      %v704 = vrot.slane %v634, 1
      %v705 = vsel %vm665, %v702, %v704
      %vm722 = vcmask 1045504
      %v723 = vrot.slane %v611, 2
      %v724 = vrot.slane %v612, 2
      %v725 = vsel %vm722, %v723, %v724
      %v726 = vrot.slane %v613, 2
      %v727 = vsel %vm722, %v724, %v726
      %v728 = vrot.slane %v614, 2
      %v729 = vrot.slane %v615, 2
      %v730 = vsel %vm722, %v728, %v729
      %v731 = vrot.slane %v616, 2
      %v732 = vsel %vm722, %v729, %v731
      %v733 = vrot.slane %v617, 2
      %v734 = vrot.slane %v618, 2
      %v735 = vsel %vm722, %v733, %v734
      %v736 = vrot.slane %v619, 2
      %v737 = vsel %vm722, %v734, %v736
      %v738 = vrot.slane %v620, 2
      %v739 = vrot.slane %v621, 2
      %v740 = vsel %vm722, %v738, %v739
      %v741 = vrot.slane %v622, 2
      %v742 = vsel %vm722, %v739, %v741
      %v743 = vrot.slane %v623, 2
      %v744 = vrot.slane %v624, 2
      %v745 = vsel %vm722, %v743, %v744
      %v746 = vrot.slane %v625, 2
      %v747 = vsel %vm722, %v744, %v746
      %v748 = vrot.slane %v626, 2
      %v749 = vrot.slane %v627, 2
      %v750 = vsel %vm722, %v748, %v749
      %v751 = vrot.slane %v628, 2
      %v752 = vsel %vm722, %v749, %v751
      %v753 = vrot.slane %v629, 2
      %v754 = vrot.slane %v630, 2
      %v755 = vsel %vm722, %v753, %v754
      %v756 = vrot.slane %v631, 2
      %v757 = vsel %vm722, %v754, %v756
      %v758 = vrot.slane %v632, 2
      %v759 = vrot.slane %v633, 2
      %v760 = vsel %vm722, %v758, %v759
      %v761 = vrot.slane %v634, 2
      %v762 = vsel %vm722, %v759, %v761
      %v782 = vrot.slane %v635, 1
      %v783 = vrot.slane %v636, 1
      %v784 = vsel %vm665, %v782, %v783
      %v785 = vrot.slane %v637, 1
      %v786 = vsel %vm665, %v783, %v785
      %v789 = vrot.slane %v635, 2
      %v790 = vrot.slane %v636, 2
      %v791 = vsel %vm722, %v789, %v790
      %v792 = vrot.slane %v637, 2
      %v793 = vsel %vm722, %v790, %v792
      %v799 = vrot.slane %v638, 1
      %v800 = vrot.slane %v639, 1
      %v801 = vsel %vm665, %v799, %v800
      %v802 = vrot.slane %v640, 1
      %v803 = vsel %vm665, %v800, %v802
      %v806 = vrot.slane %v638, 2
      %v807 = vrot.slane %v639, 2
      %v808 = vsel %vm722, %v806, %v807
      %v809 = vrot.slane %v640, 2
      %v810 = vsel %vm722, %v807, %v809
      %v813 = vld [vmem:[%s3] sm:$0xff]
      %v814 = vld [vmem:[%s3 + $0x8] sm:$0xff]
      %v815 = vld [vmem:[%s3 + $0x10] sm:$0xff]
      %v816 = vld [vmem:[%s3 + $0x18] sm:$0xff]
      %v817 = vld [vmem:[%s3 + $0x20] sm:$0xff]
      %v818 = vld [vmem:[%s3 + $0x28] sm:$0xff]
      %v819 = vld [vmem:[%s3 + $0x30] sm:$0xff]
      %v820 = vld [vmem:[%s3 + $0x38] sm:$0xff]
      %v821 = vld [vmem:[%s3 + $0x40] sm:$0xff]
      %v822 = vld [vmem:[%s3 + $0x48] sm:$0xff]
      %v823 = vld [vmem:[%s3 + $0x50] sm:$0xff]
      %v824 = vld [vmem:[%s3 + $0x58] sm:$0xff]
      %v825 = vld [vmem:[%s3 + $0x60] sm:$0xff]
      %v826 = vld [vmem:[%s3 + $0x68] sm:$0xff]
      %v827 = vld [vmem:[%s3 + $0x70] sm:$0xff]
      %v828 = vld [vmem:[%s3 + $0x78] sm:$0xff]
      %v829 = vld [vmem:[%s3 + $0x80] sm:$0xff]
      %v830 = vld [vmem:[%s3 + $0x88] sm:$0xff]
      %v831 = vld [vmem:[%s3 + $0x90] sm:$0xff]
      %v832 = vld [vmem:[%s3 + $0x98] sm:$0xff]
      %v833 = vld [vmem:[%s3 + $0xa0] sm:$0xff]
      %v834 = vld [vmem:[%s3 + $0xa8] sm:$0xff]
      %v835 = vld [vmem:[%s3 + $0xb0] sm:$0xff]
      %v836 = vld [vmem:[%s3 + $0xb8] sm:$0xff]
      %v837 = vld [vmem:[%s3 + $0xc0] sm:$0xff]
      %v838 = vld [vmem:[%s3 + $0xc8] sm:$0xff]
      %v839 = vld [vmem:[%s3 + $0xd0] sm:$0xff]
      %v840 = vld [vmem:[%s3 + $0xd8] sm:$0xff]
      %v841 = vld [vmem:[%s3 + $0xe0] sm:$0xff]
      %v842 = vld [vmem:[%s3 + $0xe8] sm:$0xff]
      %v843 = vld [vmem:[%s3 + $0xf0] sm:$0xff]
      %v844 = vld [vmem:[%s3 + $0xf8] sm:$0xff]
      %v845 = vld [vmem:[%s3 + $0x100] sm:$0xff]
      %v846 = vld [vmem:[%s3 + $0x108] sm:$0xff]
      %v847 = vld [vmem:[%s3 + $0x110] sm:$0xff]
      %v848 = vld [vmem:[%s3 + $0x118] sm:$0xff]
      %v849 = vld [vmem:[%s3 + $0x120] sm:$0xff]
      %v850 = vld [vmem:[%s3 + $0x128] sm:$0xff]
      %v851 = vld [vmem:[%s3 + $0x130] sm:$0xff]
      %v852 = vld [vmem:[%s3 + $0x138] sm:$0xff]
      %v853 = vld [vmem:[%s3 + $0x140] sm:$0xff]
      %v854 = vld [vmem:[%s3 + $0x148] sm:$0xff]
      %v855 = vld [vmem:[%s3 + $0x150] sm:$0xff]
      %v856 = vld [vmem:[%s3 + $0x158] sm:$0xff]
      %v857 = vld [vmem:[%s3 + $0x160] sm:$0xff]
      %v858 = vld [vmem:[%s3 + $0x168] sm:$0xff]
      %v859 = vld [vmem:[%s3 + $0x170] sm:$0xff]
      %v860 = vld [vmem:[%s3 + $0x178] sm:$0xff]
      %v861 = vld [vmem:[%s3 + $0x180] sm:$0xff]
      %v862 = vld [vmem:[%s3 + $0x188] sm:$0xff]
      %v863 = vld [vmem:[%s3 + $0x190] sm:$0xff]
      %v864 = vld [vmem:[%s3 + $0x198] sm:$0xff]
      %v865 = vld [vmem:[%s3 + $0x1a0] sm:$0xff]
      %v866 = vld [vmem:[%s3 + $0x1a8] sm:$0xff]
      %v867 = vld [vmem:[%s3 + $0x1b0] sm:$0xff]
      %v868 = vld [vmem:[%s3 + $0x1b8] sm:$0xff]
      %v869 = vld [vmem:[%s3 + $0x1c0] sm:$0xff]
      %v870 = vld [vmem:[%s3 + $0x1c8] sm:$0xff]
      %v871 = vld [vmem:[%s3 + $0x1d0] sm:$0xff]
      %v872 = vld [vmem:[%s3 + $0x1d8] sm:$0xff]
      %v873 = vld [vmem:[%s3 + $0x1e0] sm:$0xff]
      %v874 = vld [vmem:[%s3 + $0x1e8] sm:$0xff]
      %v875 = vld [vmem:[%s3 + $0x1f0] sm:$0xff]
      %v876 = vld [vmem:[%s3 + $0x1f8] sm:$0xff]
      %v877 = vld [vmem:[%s3 + $0x200] sm:$0xff]
      %v878 = vld [vmem:[%s3 + $0x208] sm:$0xff]
      %v879 = vld [vmem:[%s3 + $0x210] sm:$0xff]
      %v880 = vld [vmem:[%s3 + $0x218] sm:$0xff]
      %v881 = vld [vmem:[%s3 + $0x220] sm:$0xff]
      %v882 = vld [vmem:[%s3 + $0x228] sm:$0xff]
      %v883 = vld [vmem:[%s3 + $0x230] sm:$0xff]
      %v884 = vld [vmem:[%s3 + $0x238] sm:$0xff]
      %v885 = vld [vmem:[%s3 + $0x240] sm:$0xff]
      %v886 = vld [vmem:[%s3 + $0x248] sm:$0xff]
      %v887 = vld [vmem:[%s3 + $0x250] sm:$0xff]
      %v888 = vld [vmem:[%s3 + $0x258] sm:$0xff]
      %v889 = vld [vmem:[%s3 + $0x260] sm:$0xff]
      %v890 = vld [vmem:[%s3 + $0x268] sm:$0xff]
      %v891 = vld [vmem:[%s3 + $0x270] sm:$0xff]
      %v892 = vld [vmem:[%s3 + $0x278] sm:$0xff]
      %v893 = vld [vmem:[%s3 + $0x280] sm:$0xff]
      %v894 = vld [vmem:[%s3 + $0x288] sm:$0xff]
      %v895 = vld [vmem:[%s3 + $0x290] sm:$0xff]
      %v896 = vld [vmem:[%s3 + $0x298] sm:$0xff]
      %v897 = vld [vmem:[%s3 + $0x2a0] sm:$0xff]
      %v898 = vld [vmem:[%s3 + $0x2a8] sm:$0xff]
      %v899 = vld [vmem:[%s3 + $0x2b0] sm:$0xff]
      %v900 = vld [vmem:[%s3 + $0x2b8] sm:$0xff]
      %v901 = vld [vmem:[%s3 + $0x2c0] sm:$0xff]
      %v902 = vld [vmem:[%s3 + $0x2c8] sm:$0xff]
      %v903 = vld [vmem:[%s3 + $0x2d0] sm:$0xff]
      %v904 = vld [vmem:[%s3 + $0x2d8] sm:$0xff]
      %v905 = vld [vmem:[%s3 + $0x2e0] sm:$0xff]
      %v906 = vld [vmem:[%s3 + $0x2e8] sm:$0xff]
      %v907 = vld [vmem:[%s3 + $0x2f0] sm:$0xff]
      %v908 = vld [vmem:[%s3 + $0x2f8] sm:$0xff]
      %v909 = vld [vmem:[%s3 + $0x300] sm:$0xff]
      %v910 = vld [vmem:[%s3 + $0x308] sm:$0xff]
      %v911 = vld [vmem:[%s3 + $0x310] sm:$0xff]
      %v912 = vld [vmem:[%s3 + $0x318] sm:$0xff]
      %v913 = vld [vmem:[%s3 + $0x320] sm:$0xff]
      %v914 = vld [vmem:[%s3 + $0x328] sm:$0xff]
      %v915 = vld [vmem:[%s3 + $0x330] sm:$0xff]
      %v916 = vld [vmem:[%s3 + $0x338] sm:$0xff]
      %v917 = vld [vmem:[%s3 + $0x340] sm:$0xff]
      %v918 = vld [vmem:[%s3 + $0x348] sm:$0xff]
      %v919 = vld [vmem:[%s3 + $0x350] sm:$0xff]
      %v920 = vld [vmem:[%s3 + $0x358] sm:$0xff]
      %v921 = vld [vmem:[%s3 + $0x360] sm:$0xff]
      %v922 = vld [vmem:[%s3 + $0x368] sm:$0xff]
      %v923 = vld [vmem:[%s3 + $0x370] sm:$0xff]
      %v924 = vld [vmem:[%s3 + $0x378] sm:$0xff]
      %v925 = vld [vmem:[%s3 + $0x380] sm:$0xff]
      %v926 = vld [vmem:[%s3 + $0x388] sm:$0xff]
      %v927 = vld [vmem:[%s3 + $0x390] sm:$0xff]
      %v928 = vld [vmem:[%s3 + $0x398] sm:$0xff]
      %v929 = vld [vmem:[%s3 + $0x3a0] sm:$0xff]
      %v930 = vld [vmem:[%s3 + $0x3a8] sm:$0xff]
      %v931 = vld [vmem:[%s3 + $0x3b0] sm:$0xff]
      %v932 = vld [vmem:[%s3 + $0x3b8] sm:$0xff]
      %v933 = vld [vmem:[%s3 + $0x3c0] sm:$0xff]
      %v934 = vld [vmem:[%s3 + $0x3c8] sm:$0xff]
      %v935 = vld [vmem:[%s3 + $0x3d0] sm:$0xff]
      %v936 = vld [vmem:[%s3 + $0x3d8] sm:$0xff]
      %v937 = vld [vmem:[%s3 + $0x3e0] sm:$0xff]
      %v938 = vld [vmem:[%s3 + $0x3e8] sm:$0xff]
      %v939 = vld [vmem:[%s3 + $0x3f0] sm:$0xff]
      %v940 = vld [vmem:[%s3 + $0x3f8] sm:$0xff]
      %v941 = vld [vmem:[%s3 + $0x400] sm:$0xff]
      %v942 = vld [vmem:[%s3 + $0x408] sm:$0xff]
      %v943 = vld [vmem:[%s3 + $0x410] sm:$0xff]
      %v944 = vld [vmem:[%s3 + $0x418] sm:$0xff]
      %v945 = vld [vmem:[%s3 + $0x420] sm:$0xff]
      %v946 = vld [vmem:[%s3 + $0x428] sm:$0xff]
      %v947 = vld [vmem:[%s3 + $0x430] sm:$0xff]
      %v948 = vld [vmem:[%s3 + $0x438] sm:$0xff]
      %v949 = vld [vmem:[%s3 + $0x440] sm:$0xff]
      %v950 = vld [vmem:[%s3 + $0x448] sm:$0xff]
      %v951 = vld [vmem:[%s3 + $0x450] sm:$0xff]
      %v952 = vld [vmem:[%s3 + $0x458] sm:$0xff]
      %v953 = vld [vmem:[%s3 + $0x460] sm:$0xff]
      %v954 = vld [vmem:[%s3 + $0x468] sm:$0xff]
      %v955 = vld [vmem:[%s3 + $0x470] sm:$0xff]
      %v956 = vld [vmem:[%s3 + $0x478] sm:$0xff]
      %v957 = vld [vmem:[%s4] sm:$0x1]
      %v959 = vperm.slane %v957, 0
      %961 = vmatpush.msra.mxu0 %v828
      %962 = vmatpush.msra.mxu0 %v827
      %963 = vmatpush.msra.mxu0 %v826
      %964 = vmatpush.msra.mxu0 %v825
      %965 = vmatpush.msra.mxu0 %v824
      %966 = vmatpush.msra.mxu0 %v823
      %967 = vmatpush.msra.mxu0 %v822
      %968 = vmatpush.msra.mxu0 %v821
      %969 = vmatpush.msra.mxu0 %v820
      %970 = vmatpush.msra.mxu0 %v819
      %971 = vmatpush.msra.mxu0 %v818
      %972 = vmatpush.msra.mxu0 %v817
      %973 = vmatpush.msra.mxu0 %v816
      %974 = vmatpush.msra.mxu0 %v815
      %975 = vmatpush.msra.mxu0 %v814
      %976 = vmatpush.msra.mxu0 %v813
      %977 = vmatmul.f32.gmra.mxu0 %v611
      %v978 = vpop.f32.mrf.mxu0
      %v979 = vadd.f32 %v959, %v978
      %980 = vmatmul.f32.gmra.mxu0 %v612
      %v981 = vpop.f32.mrf.mxu0
      %v982 = vadd.f32 %v959, %v981
      %983 = vmatmul.f32.gmra.mxu0 %v614
      %v984 = vpop.f32.mrf.mxu0
      %v985 = vadd.f32 %v959, %v984
      %986 = vmatmul.f32.gmra.mxu0 %v615
      %v987 = vpop.f32.mrf.mxu0
      %v988 = vadd.f32 %v959, %v987
      %989 = vmatmul.f32.gmra.mxu0 %v617
      %v990 = vpop.f32.mrf.mxu0
      %v991 = vadd.f32 %v959, %v990
      %992 = vmatmul.f32.gmra.mxu0 %v618
      %v993 = vpop.f32.mrf.mxu0
      %v994 = vadd.f32 %v959, %v993
      %995 = vmatmul.f32.gmra.mxu0 %v620
      %v996 = vpop.f32.mrf.mxu0
      %v997 = vadd.f32 %v959, %v996
      %998 = vmatmul.f32.gmra.mxu0 %v621
      %v999 = vpop.f32.mrf.mxu0
      %v1000 = vadd.f32 %v959, %v999
      %1001 = vmatmul.f32.gmra.mxu0 %v623
      %v1002 = vpop.f32.mrf.mxu0
      %v1003 = vadd.f32 %v959, %v1002
      %1004 = vmatmul.f32.gmra.mxu0 %v624
      %v1005 = vpop.f32.mrf.mxu0
      %v1006 = vadd.f32 %v959, %v1005
      %1007 = vmatmul.f32.gmra.mxu0 %v626
      %v1008 = vpop.f32.mrf.mxu0
      %v1009 = vadd.f32 %v959, %v1008
      %1010 = vmatmul.f32.gmra.mxu0 %v627
      %v1011 = vpop.f32.mrf.mxu0
      %v1012 = vadd.f32 %v959, %v1011
      %1013 = vmatmul.f32.gmra.mxu0 %v629
      %v1014 = vpop.f32.mrf.mxu0
      %v1015 = vadd.f32 %v959, %v1014
      %1016 = vmatmul.f32.gmra.mxu0 %v630
      %v1017 = vpop.f32.mrf.mxu0
      %v1018 = vadd.f32 %v959, %v1017
      %1019 = vmatmul.f32.gmra.mxu0 %v632
      %v1020 = vpop.f32.mrf.mxu0
      %v1021 = vadd.f32 %v959, %v1020
      %1022 = vmatmul.f32.gmra.mxu0 %v633
      %v1023 = vpop.f32.mrf.mxu0
      %v1024 = vadd.f32 %v959, %v1023
      %1025 = vdwg.mxu0
      %1026 = vmatpush.msra.mxu0 %v844
      %1027 = vmatpush.msra.mxu0 %v843
      %1028 = vmatpush.msra.mxu0 %v842
      %1029 = vmatpush.msra.mxu0 %v841
      %1030 = vmatpush.msra.mxu0 %v840
      %1031 = vmatpush.msra.mxu0 %v839
      %1032 = vmatpush.msra.mxu0 %v838
      %1033 = vmatpush.msra.mxu0 %v837
      %1034 = vmatpush.msra.mxu0 %v836
      %1035 = vmatpush.msra.mxu0 %v835
      %1036 = vmatpush.msra.mxu0 %v834
      %1037 = vmatpush.msra.mxu0 %v833
      %1038 = vmatpush.msra.mxu0 %v832
      %1039 = vmatpush.msra.mxu0 %v831
      %1040 = vmatpush.msra.mxu0 %v830
      %1041 = vmatpush.msra.mxu0 %v829
      %1042 = vmatmul.f32.gmra.mxu0 %v668
      %v1043 = vpop.f32.mrf.mxu0
      %v1044 = vadd.f32 %v979, %v1043
      %1045 = vmatmul.f32.gmra.mxu0 %v670
      %v1046 = vpop.f32.mrf.mxu0
      %v1047 = vadd.f32 %v982, %v1046
      %1048 = vmatmul.f32.gmra.mxu0 %v673
      %v1049 = vpop.f32.mrf.mxu0
      %v1050 = vadd.f32 %v985, %v1049
      %1051 = vmatmul.f32.gmra.mxu0 %v675
      %v1052 = vpop.f32.mrf.mxu0
      %v1053 = vadd.f32 %v988, %v1052
      %1054 = vmatmul.f32.gmra.mxu0 %v678
      %v1055 = vpop.f32.mrf.mxu0
      %v1056 = vadd.f32 %v991, %v1055
      %1057 = vmatmul.f32.gmra.mxu0 %v680
      %v1058 = vpop.f32.mrf.mxu0
      %v1059 = vadd.f32 %v994, %v1058
      %1060 = vmatmul.f32.gmra.mxu0 %v683
      %v1061 = vpop.f32.mrf.mxu0
      %v1062 = vadd.f32 %v997, %v1061
      %1063 = vmatmul.f32.gmra.mxu0 %v685
      %v1064 = vpop.f32.mrf.mxu0
      %v1065 = vadd.f32 %v1000, %v1064
      %1066 = vmatmul.f32.gmra.mxu0 %v688
      %v1067 = vpop.f32.mrf.mxu0
      %v1068 = vadd.f32 %v1003, %v1067
      %1069 = vmatmul.f32.gmra.mxu0 %v690
      %v1070 = vpop.f32.mrf.mxu0
      %v1071 = vadd.f32 %v1006, %v1070
      %1072 = vmatmul.f32.gmra.mxu0 %v693
      %v1073 = vpop.f32.mrf.mxu0
      %v1074 = vadd.f32 %v1009, %v1073
      %1075 = vmatmul.f32.gmra.mxu0 %v695
      %v1076 = vpop.f32.mrf.mxu0
      %v1077 = vadd.f32 %v1012, %v1076
      %1078 = vmatmul.f32.gmra.mxu0 %v698
      %v1079 = vpop.f32.mrf.mxu0
      %v1080 = vadd.f32 %v1015, %v1079
      %1081 = vmatmul.f32.gmra.mxu0 %v700
      %v1082 = vpop.f32.mrf.mxu0
      %v1083 = vadd.f32 %v1018, %v1082
      %1084 = vmatmul.f32.gmra.mxu0 %v703
      %v1085 = vpop.f32.mrf.mxu0
      %v1086 = vadd.f32 %v1021, %v1085
      %1087 = vmatmul.f32.gmra.mxu0 %v705
      %v1088 = vpop.f32.mrf.mxu0
      %v1089 = vadd.f32 %v1024, %v1088
      %1090 = vdwg.mxu0
      %1091 = vmatpush.msra.mxu0 %v860
      %1092 = vmatpush.msra.mxu0 %v859
      %1093 = vmatpush.msra.mxu0 %v858
      %1094 = vmatpush.msra.mxu0 %v857
      %1095 = vmatpush.msra.mxu0 %v856
      %1096 = vmatpush.msra.mxu0 %v855
      %1097 = vmatpush.msra.mxu0 %v854
      %1098 = vmatpush.msra.mxu0 %v853
      %1099 = vmatpush.msra.mxu0 %v852
      %1100 = vmatpush.msra.mxu0 %v851
      %1101 = vmatpush.msra.mxu0 %v850
      %1102 = vmatpush.msra.mxu0 %v849
      %1103 = vmatpush.msra.mxu0 %v848
      %1104 = vmatpush.msra.mxu0 %v847
      %1105 = vmatpush.msra.mxu0 %v846
      %1106 = vmatpush.msra.mxu0 %v845
      %1107 = vmatmul.f32.gmra.mxu0 %v725
      %v1108 = vpop.f32.mrf.mxu0
      %v1109 = vadd.f32 %v1044, %v1108
      %1110 = vmatmul.f32.gmra.mxu0 %v727
      %v1111 = vpop.f32.mrf.mxu0
      %v1112 = vadd.f32 %v1047, %v1111
      %1113 = vmatmul.f32.gmra.mxu0 %v730
      %v1114 = vpop.f32.mrf.mxu0
      %v1115 = vadd.f32 %v1050, %v1114
      %1116 = vmatmul.f32.gmra.mxu0 %v732
      %v1117 = vpop.f32.mrf.mxu0
      %v1118 = vadd.f32 %v1053, %v1117
      %1119 = vmatmul.f32.gmra.mxu0 %v735
      %v1120 = vpop.f32.mrf.mxu0
      %v1121 = vadd.f32 %v1056, %v1120
      %1122 = vmatmul.f32.gmra.mxu0 %v737
      %v1123 = vpop.f32.mrf.mxu0
      %v1124 = vadd.f32 %v1059, %v1123
      %1125 = vmatmul.f32.gmra.mxu0 %v740
      %v1126 = vpop.f32.mrf.mxu0
      %v1127 = vadd.f32 %v1062, %v1126
      %1128 = vmatmul.f32.gmra.mxu0 %v742
      %v1129 = vpop.f32.mrf.mxu0
      %v1130 = vadd.f32 %v1065, %v1129
      %1131 = vmatmul.f32.gmra.mxu0 %v745
      %v1132 = vpop.f32.mrf.mxu0
      %v1133 = vadd.f32 %v1068, %v1132
      %1134 = vmatmul.f32.gmra.mxu0 %v747
      %v1135 = vpop.f32.mrf.mxu0
      %v1136 = vadd.f32 %v1071, %v1135
      %1137 = vmatmul.f32.gmra.mxu0 %v750
      %v1138 = vpop.f32.mrf.mxu0
      %v1139 = vadd.f32 %v1074, %v1138
      %1140 = vmatmul.f32.gmra.mxu0 %v752
      %v1141 = vpop.f32.mrf.mxu0
      %v1142 = vadd.f32 %v1077, %v1141
      %1143 = vmatmul.f32.gmra.mxu0 %v755
      %v1144 = vpop.f32.mrf.mxu0
      %v1145 = vadd.f32 %v1080, %v1144
      %1146 = vmatmul.f32.gmra.mxu0 %v757
      %v1147 = vpop.f32.mrf.mxu0
      %v1148 = vadd.f32 %v1083, %v1147
      %1149 = vmatmul.f32.gmra.mxu0 %v760
      %v1150 = vpop.f32.mrf.mxu0
      %v1151 = vadd.f32 %v1086, %v1150
      %1152 = vmatmul.f32.gmra.mxu0 %v762
      %v1153 = vpop.f32.mrf.mxu0
      %v1154 = vadd.f32 %v1089, %v1153
      %1155 = vdwg.mxu0
      %1156 = vmatpush.msra.mxu0 %v876
      %1157 = vmatpush.msra.mxu0 %v875
      %1158 = vmatpush.msra.mxu0 %v874
      %1159 = vmatpush.msra.mxu0 %v873
      %1160 = vmatpush.msra.mxu0 %v872
      %1161 = vmatpush.msra.mxu0 %v871
      %1162 = vmatpush.msra.mxu0 %v870
      %1163 = vmatpush.msra.mxu0 %v869
      %1164 = vmatpush.msra.mxu0 %v868
      %1165 = vmatpush.msra.mxu0 %v867
      %1166 = vmatpush.msra.mxu0 %v866
      %1167 = vmatpush.msra.mxu0 %v865
      %1168 = vmatpush.msra.mxu0 %v864
      %1169 = vmatpush.msra.mxu0 %v863
      %1170 = vmatpush.msra.mxu0 %v862
      %1171 = vmatpush.msra.mxu0 %v861
      %1172 = vmatmul.f32.gmra.mxu0 %v614
      %v1173 = vpop.f32.mrf.mxu0
      %v1174 = vadd.f32 %v1109, %v1173
      %1175 = vmatmul.f32.gmra.mxu0 %v615
      %v1176 = vpop.f32.mrf.mxu0
      %v1177 = vadd.f32 %v1112, %v1176
      %1178 = vmatmul.f32.gmra.mxu0 %v617
      %v1179 = vpop.f32.mrf.mxu0
      %v1180 = vadd.f32 %v1115, %v1179
      %1181 = vmatmul.f32.gmra.mxu0 %v618
      %v1182 = vpop.f32.mrf.mxu0
      %v1183 = vadd.f32 %v1118, %v1182
      %1184 = vmatmul.f32.gmra.mxu0 %v620
      %v1185 = vpop.f32.mrf.mxu0
      %v1186 = vadd.f32 %v1121, %v1185
      %1187 = vmatmul.f32.gmra.mxu0 %v621
      %v1188 = vpop.f32.mrf.mxu0
      %v1189 = vadd.f32 %v1124, %v1188
      %1190 = vmatmul.f32.gmra.mxu0 %v623
      %v1191 = vpop.f32.mrf.mxu0
      %v1192 = vadd.f32 %v1127, %v1191
      %1193 = vmatmul.f32.gmra.mxu0 %v624
      %v1194 = vpop.f32.mrf.mxu0
      %v1195 = vadd.f32 %v1130, %v1194
      %1196 = vmatmul.f32.gmra.mxu0 %v626
      %v1197 = vpop.f32.mrf.mxu0
      %v1198 = vadd.f32 %v1133, %v1197
      %1199 = vmatmul.f32.gmra.mxu0 %v627
      %v1200 = vpop.f32.mrf.mxu0
      %v1201 = vadd.f32 %v1136, %v1200
      %1202 = vmatmul.f32.gmra.mxu0 %v629
      %v1203 = vpop.f32.mrf.mxu0
      %v1204 = vadd.f32 %v1139, %v1203
      %1205 = vmatmul.f32.gmra.mxu0 %v630
      %v1206 = vpop.f32.mrf.mxu0
      %v1207 = vadd.f32 %v1142, %v1206
      %1208 = vmatmul.f32.gmra.mxu0 %v632
      %v1209 = vpop.f32.mrf.mxu0
      %v1210 = vadd.f32 %v1145, %v1209
      %1211 = vmatmul.f32.gmra.mxu0 %v633
      %v1212 = vpop.f32.mrf.mxu0
      %v1213 = vadd.f32 %v1148, %v1212
      %1214 = vmatmul.f32.gmra.mxu0 %v635
      %v1215 = vpop.f32.mrf.mxu0
      %v1216 = vadd.f32 %v1151, %v1215
      %1217 = vmatmul.f32.gmra.mxu0 %v636
      %v1218 = vpop.f32.mrf.mxu0
      %v1219 = vadd.f32 %v1154, %v1218
      %1220 = vdwg.mxu0
      %1221 = vmatpush.msra.mxu0 %v892
      %1222 = vmatpush.msra.mxu0 %v891
      %1223 = vmatpush.msra.mxu0 %v890
      %1224 = vmatpush.msra.mxu0 %v889
      %1225 = vmatpush.msra.mxu0 %v888
      %1226 = vmatpush.msra.mxu0 %v887
      %1227 = vmatpush.msra.mxu0 %v886
      %1228 = vmatpush.msra.mxu0 %v885
      %1229 = vmatpush.msra.mxu0 %v884
      %1230 = vmatpush.msra.mxu0 %v883
      %1231 = vmatpush.msra.mxu0 %v882
      %1232 = vmatpush.msra.mxu0 %v881
      %1233 = vmatpush.msra.mxu0 %v880
      %1234 = vmatpush.msra.mxu0 %v879
      %1235 = vmatpush.msra.mxu0 %v878
      %1236 = vmatpush.msra.mxu0 %v877
      %1237 = vmatmul.f32.gmra.mxu0 %v673
      %v1238 = vpop.f32.mrf.mxu0
      %v1239 = vadd.f32 %v1174, %v1238
      %1240 = vmatmul.f32.gmra.mxu0 %v675
      %v1241 = vpop.f32.mrf.mxu0
      %v1242 = vadd.f32 %v1177, %v1241
      %1243 = vmatmul.f32.gmra.mxu0 %v678
      %v1244 = vpop.f32.mrf.mxu0
      %v1245 = vadd.f32 %v1180, %v1244
      %1246 = vmatmul.f32.gmra.mxu0 %v680
      %v1247 = vpop.f32.mrf.mxu0
      %v1248 = vadd.f32 %v1183, %v1247
      %1249 = vmatmul.f32.gmra.mxu0 %v683
      %v1250 = vpop.f32.mrf.mxu0
      %v1251 = vadd.f32 %v1186, %v1250
      %1252 = vmatmul.f32.gmra.mxu0 %v685
      %v1253 = vpop.f32.mrf.mxu0
      %v1254 = vadd.f32 %v1189, %v1253
      %1255 = vmatmul.f32.gmra.mxu0 %v688
      %v1256 = vpop.f32.mrf.mxu0
      %v1257 = vadd.f32 %v1192, %v1256
      %1258 = vmatmul.f32.gmra.mxu0 %v690
      %v1259 = vpop.f32.mrf.mxu0
      %v1260 = vadd.f32 %v1195, %v1259
      %1261 = vmatmul.f32.gmra.mxu0 %v693
      %v1262 = vpop.f32.mrf.mxu0
      %v1263 = vadd.f32 %v1198, %v1262
      %1264 = vmatmul.f32.gmra.mxu0 %v695
      %v1265 = vpop.f32.mrf.mxu0
      %v1266 = vadd.f32 %v1201, %v1265
      %1267 = vmatmul.f32.gmra.mxu0 %v698
      %v1268 = vpop.f32.mrf.mxu0
      %v1269 = vadd.f32 %v1204, %v1268
      %1270 = vmatmul.f32.gmra.mxu0 %v700
      %v1271 = vpop.f32.mrf.mxu0
      %v1272 = vadd.f32 %v1207, %v1271
      %1273 = vmatmul.f32.gmra.mxu0 %v703
      %v1274 = vpop.f32.mrf.mxu0
      %v1275 = vadd.f32 %v1210, %v1274
      %1276 = vmatmul.f32.gmra.mxu0 %v705
      %v1277 = vpop.f32.mrf.mxu0
      %v1278 = vadd.f32 %v1213, %v1277
      %1279 = vmatmul.f32.gmra.mxu0 %v784
      %v1280 = vpop.f32.mrf.mxu0
      %v1281 = vadd.f32 %v1216, %v1280
      %1282 = vmatmul.f32.gmra.mxu0 %v786
      %v1283 = vpop.f32.mrf.mxu0
      %v1284 = vadd.f32 %v1219, %v1283
      %1285 = vdwg.mxu0
      %1286 = vmatpush.msra.mxu0 %v908
      %1287 = vmatpush.msra.mxu0 %v907
      %1288 = vmatpush.msra.mxu0 %v906
      %1289 = vmatpush.msra.mxu0 %v905
      %1290 = vmatpush.msra.mxu0 %v904
      %1291 = vmatpush.msra.mxu0 %v903
      %1292 = vmatpush.msra.mxu0 %v902
      %1293 = vmatpush.msra.mxu0 %v901
      %1294 = vmatpush.msra.mxu0 %v900
      %1295 = vmatpush.msra.mxu0 %v899
      %1296 = vmatpush.msra.mxu0 %v898
      %1297 = vmatpush.msra.mxu0 %v897
      %1298 = vmatpush.msra.mxu0 %v896
      %1299 = vmatpush.msra.mxu0 %v895
      %1300 = vmatpush.msra.mxu0 %v894
      %1301 = vmatpush.msra.mxu0 %v893
      %1302 = vmatmul.f32.gmra.mxu0 %v730
      %v1303 = vpop.f32.mrf.mxu0
      %v1304 = vadd.f32 %v1239, %v1303
      %1305 = vmatmul.f32.gmra.mxu0 %v732
      %v1306 = vpop.f32.mrf.mxu0
      %v1307 = vadd.f32 %v1242, %v1306
      %1308 = vmatmul.f32.gmra.mxu0 %v735
      %v1309 = vpop.f32.mrf.mxu0
      %v1310 = vadd.f32 %v1245, %v1309
      %1311 = vmatmul.f32.gmra.mxu0 %v737
      %v1312 = vpop.f32.mrf.mxu0
      %v1313 = vadd.f32 %v1248, %v1312
      %1314 = vmatmul.f32.gmra.mxu0 %v740
      %v1315 = vpop.f32.mrf.mxu0
      %v1316 = vadd.f32 %v1251, %v1315
      %1317 = vmatmul.f32.gmra.mxu0 %v742
      %v1318 = vpop.f32.mrf.mxu0
      %v1319 = vadd.f32 %v1254, %v1318
      %1320 = vmatmul.f32.gmra.mxu0 %v745
      %v1321 = vpop.f32.mrf.mxu0
      %v1322 = vadd.f32 %v1257, %v1321
      %1323 = vmatmul.f32.gmra.mxu0 %v747
      %v1324 = vpop.f32.mrf.mxu0
      %v1325 = vadd.f32 %v1260, %v1324
      %1326 = vmatmul.f32.gmra.mxu0 %v750
      %v1327 = vpop.f32.mrf.mxu0
      %v1328 = vadd.f32 %v1263, %v1327
      %1329 = vmatmul.f32.gmra.mxu0 %v752
      %v1330 = vpop.f32.mrf.mxu0
      %v1331 = vadd.f32 %v1266, %v1330
      %1332 = vmatmul.f32.gmra.mxu0 %v755
      %v1333 = vpop.f32.mrf.mxu0
      %v1334 = vadd.f32 %v1269, %v1333
      %1335 = vmatmul.f32.gmra.mxu0 %v757
      %v1336 = vpop.f32.mrf.mxu0
      %v1337 = vadd.f32 %v1272, %v1336
      %1338 = vmatmul.f32.gmra.mxu0 %v760
      %v1339 = vpop.f32.mrf.mxu0
      %v1340 = vadd.f32 %v1275, %v1339
      %1341 = vmatmul.f32.gmra.mxu0 %v762
      %v1342 = vpop.f32.mrf.mxu0
      %v1343 = vadd.f32 %v1278, %v1342
      %1344 = vmatmul.f32.gmra.mxu0 %v791
      %v1345 = vpop.f32.mrf.mxu0
      %v1346 = vadd.f32 %v1281, %v1345
      %1347 = vmatmul.f32.gmra.mxu0 %v793
      %v1348 = vpop.f32.mrf.mxu0
      %v1349 = vadd.f32 %v1284, %v1348
      %1350 = vdwg.mxu0
      %1351 = vmatpush.msra.mxu0 %v924
      %1352 = vmatpush.msra.mxu0 %v923
      %1353 = vmatpush.msra.mxu0 %v922
      %1354 = vmatpush.msra.mxu0 %v921
      %1355 = vmatpush.msra.mxu0 %v920
      %1356 = vmatpush.msra.mxu0 %v919
      %1357 = vmatpush.msra.mxu0 %v918
      %1358 = vmatpush.msra.mxu0 %v917
      %1359 = vmatpush.msra.mxu0 %v916
      %1360 = vmatpush.msra.mxu0 %v915
      %1361 = vmatpush.msra.mxu0 %v914
      %1362 = vmatpush.msra.mxu0 %v913
      %1363 = vmatpush.msra.mxu0 %v912
      %1364 = vmatpush.msra.mxu0 %v911
      %1365 = vmatpush.msra.mxu0 %v910
      %1366 = vmatpush.msra.mxu0 %v909
      %1367 = vmatmul.f32.gmra.mxu0 %v617
      %v1368 = vpop.f32.mrf.mxu0
      %v1369 = vadd.f32 %v1304, %v1368
      %1370 = vmatmul.f32.gmra.mxu0 %v618
      %v1371 = vpop.f32.mrf.mxu0
      %v1372 = vadd.f32 %v1307, %v1371
      %1373 = vmatmul.f32.gmra.mxu0 %v620
      %v1374 = vpop.f32.mrf.mxu0
      %v1375 = vadd.f32 %v1310, %v1374
      %1376 = vmatmul.f32.gmra.mxu0 %v621
      %v1377 = vpop.f32.mrf.mxu0
      %v1378 = vadd.f32 %v1313, %v1377
      %1379 = vmatmul.f32.gmra.mxu0 %v623
      %v1380 = vpop.f32.mrf.mxu0
      %v1381 = vadd.f32 %v1316, %v1380
      %1382 = vmatmul.f32.gmra.mxu0 %v624
      %v1383 = vpop.f32.mrf.mxu0
      %v1384 = vadd.f32 %v1319, %v1383
      %1385 = vmatmul.f32.gmra.mxu0 %v626
      %v1386 = vpop.f32.mrf.mxu0
      %v1387 = vadd.f32 %v1322, %v1386
      %1388 = vmatmul.f32.gmra.mxu0 %v627
      %v1389 = vpop.f32.mrf.mxu0
      %v1390 = vadd.f32 %v1325, %v1389
      %1391 = vmatmul.f32.gmra.mxu0 %v629
      %v1392 = vpop.f32.mrf.mxu0
      %v1393 = vadd.f32 %v1328, %v1392
      %1394 = vmatmul.f32.gmra.mxu0 %v630
      %v1395 = vpop.f32.mrf.mxu0
      %v1396 = vadd.f32 %v1331, %v1395
      %1397 = vmatmul.f32.gmra.mxu0 %v632
      %v1398 = vpop.f32.mrf.mxu0
      %v1399 = vadd.f32 %v1334, %v1398
      %1400 = vmatmul.f32.gmra.mxu0 %v633
      %v1401 = vpop.f32.mrf.mxu0
      %v1402 = vadd.f32 %v1337, %v1401
      %1403 = vmatmul.f32.gmra.mxu0 %v635
      %v1404 = vpop.f32.mrf.mxu0
      %v1405 = vadd.f32 %v1340, %v1404
      %1406 = vmatmul.f32.gmra.mxu0 %v636
      %v1407 = vpop.f32.mrf.mxu0
      %v1408 = vadd.f32 %v1343, %v1407
      %1409 = vmatmul.f32.gmra.mxu0 %v638
      %v1410 = vpop.f32.mrf.mxu0
      %v1411 = vadd.f32 %v1346, %v1410
      %1412 = vmatmul.f32.gmra.mxu0 %v639
      %v1413 = vpop.f32.mrf.mxu0
      %v1414 = vadd.f32 %v1349, %v1413
      %1415 = vdwg.mxu0
      %1416 = vmatpush.msra.mxu0 %v940
      %1417 = vmatpush.msra.mxu0 %v939
      %1418 = vmatpush.msra.mxu0 %v938
      %1419 = vmatpush.msra.mxu0 %v937
      %1420 = vmatpush.msra.mxu0 %v936
      %1421 = vmatpush.msra.mxu0 %v935
      %1422 = vmatpush.msra.mxu0 %v934
      %1423 = vmatpush.msra.mxu0 %v933
      %1424 = vmatpush.msra.mxu0 %v932
      %1425 = vmatpush.msra.mxu0 %v931
      %1426 = vmatpush.msra.mxu0 %v930
      %1427 = vmatpush.msra.mxu0 %v929
      %1428 = vmatpush.msra.mxu0 %v928
      %1429 = vmatpush.msra.mxu0 %v927
      %1430 = vmatpush.msra.mxu0 %v926
      %1431 = vmatpush.msra.mxu0 %v925
      %1432 = vmatmul.f32.gmra.mxu0 %v678
      %v1433 = vpop.f32.mrf.mxu0
      %v1434 = vadd.f32 %v1369, %v1433
      %1435 = vmatmul.f32.gmra.mxu0 %v680
      %v1436 = vpop.f32.mrf.mxu0
      %v1437 = vadd.f32 %v1372, %v1436
      %1438 = vmatmul.f32.gmra.mxu0 %v683
      %v1439 = vpop.f32.mrf.mxu0
      %v1440 = vadd.f32 %v1375, %v1439
      %1441 = vmatmul.f32.gmra.mxu0 %v685
      %v1442 = vpop.f32.mrf.mxu0
      %v1443 = vadd.f32 %v1378, %v1442
      %1444 = vmatmul.f32.gmra.mxu0 %v688
      %v1445 = vpop.f32.mrf.mxu0
      %v1446 = vadd.f32 %v1381, %v1445
      %1447 = vmatmul.f32.gmra.mxu0 %v690
      %v1448 = vpop.f32.mrf.mxu0
      %v1449 = vadd.f32 %v1384, %v1448
      %1450 = vmatmul.f32.gmra.mxu0 %v693
      %v1451 = vpop.f32.mrf.mxu0
      %v1452 = vadd.f32 %v1387, %v1451
      %1453 = vmatmul.f32.gmra.mxu0 %v695
      %v1454 = vpop.f32.mrf.mxu0
      %v1455 = vadd.f32 %v1390, %v1454
      %1456 = vmatmul.f32.gmra.mxu0 %v698
      %v1457 = vpop.f32.mrf.mxu0
      %v1458 = vadd.f32 %v1393, %v1457
      %1459 = vmatmul.f32.gmra.mxu0 %v700
      %v1460 = vpop.f32.mrf.mxu0
      %v1461 = vadd.f32 %v1396, %v1460
      %1462 = vmatmul.f32.gmra.mxu0 %v703
      %v1463 = vpop.f32.mrf.mxu0
      %v1464 = vadd.f32 %v1399, %v1463
      %1465 = vmatmul.f32.gmra.mxu0 %v705
      %v1466 = vpop.f32.mrf.mxu0
      %v1467 = vadd.f32 %v1402, %v1466
      %1468 = vmatmul.f32.gmra.mxu0 %v784
      %v1469 = vpop.f32.mrf.mxu0
      %v1470 = vadd.f32 %v1405, %v1469
      %1471 = vmatmul.f32.gmra.mxu0 %v786
      %v1472 = vpop.f32.mrf.mxu0
      %v1473 = vadd.f32 %v1408, %v1472
      %1474 = vmatmul.f32.gmra.mxu0 %v801
      %v1475 = vpop.f32.mrf.mxu0
      %v1476 = vadd.f32 %v1411, %v1475
      %1477 = vmatmul.f32.gmra.mxu0 %v803
      %v1478 = vpop.f32.mrf.mxu0
      %v1479 = vadd.f32 %v1414, %v1478
      %1480 = vdwg.mxu0
      %1481 = vmatpush.msra.mxu0 %v956
      %1482 = vmatpush.msra.mxu0 %v955
      %1483 = vmatpush.msra.mxu0 %v954
      %1484 = vmatpush.msra.mxu0 %v953
      %1485 = vmatpush.msra.mxu0 %v952
      %1486 = vmatpush.msra.mxu0 %v951
      %1487 = vmatpush.msra.mxu0 %v950
      %1488 = vmatpush.msra.mxu0 %v949
      %1489 = vmatpush.msra.mxu0 %v948
      %1490 = vmatpush.msra.mxu0 %v947
      %1491 = vmatpush.msra.mxu0 %v946
      %1492 = vmatpush.msra.mxu0 %v945
      %1493 = vmatpush.msra.mxu0 %v944
      %1494 = vmatpush.msra.mxu0 %v943
      %1495 = vmatpush.msra.mxu0 %v942
      %1496 = vmatpush.msra.mxu0 %v941
      %1497 = vmatmul.f32.gmra.mxu0 %v735
      %v1498 = vpop.f32.mrf.mxu0
      %v1499 = vadd.f32 %v1434, %v1498
      %1500 = vmatmul.f32.gmra.mxu0 %v737
      %v1501 = vpop.f32.mrf.mxu0
      %v1502 = vadd.f32 %v1437, %v1501
      %1503 = vmatmul.f32.gmra.mxu0 %v740
      %v1504 = vpop.f32.mrf.mxu0
      %v1505 = vadd.f32 %v1440, %v1504
      %1506 = vmatmul.f32.gmra.mxu0 %v742
      %v1507 = vpop.f32.mrf.mxu0
      %v1508 = vadd.f32 %v1443, %v1507
      %1509 = vmatmul.f32.gmra.mxu0 %v745
      %v1510 = vpop.f32.mrf.mxu0
      %v1511 = vadd.f32 %v1446, %v1510
      %1512 = vmatmul.f32.gmra.mxu0 %v747
      %v1513 = vpop.f32.mrf.mxu0
      %v1514 = vadd.f32 %v1449, %v1513
      %1515 = vmatmul.f32.gmra.mxu0 %v750
      %v1516 = vpop.f32.mrf.mxu0
      %v1517 = vadd.f32 %v1452, %v1516
      %1518 = vmatmul.f32.gmra.mxu0 %v752
      %v1519 = vpop.f32.mrf.mxu0
      %v1520 = vadd.f32 %v1455, %v1519
      %1521 = vmatmul.f32.gmra.mxu0 %v755
      %v1522 = vpop.f32.mrf.mxu0
      %v1523 = vadd.f32 %v1458, %v1522
      %1524 = vmatmul.f32.gmra.mxu0 %v757
      %v1525 = vpop.f32.mrf.mxu0
      %v1526 = vadd.f32 %v1461, %v1525
      %1527 = vmatmul.f32.gmra.mxu0 %v760
      %v1528 = vpop.f32.mrf.mxu0
      %v1529 = vadd.f32 %v1464, %v1528
      %1530 = vmatmul.f32.gmra.mxu0 %v762
      %v1531 = vpop.f32.mrf.mxu0
      %v1532 = vadd.f32 %v1467, %v1531
      %1533 = vmatmul.f32.gmra.mxu0 %v791
      %v1534 = vpop.f32.mrf.mxu0
      %v1535 = vadd.f32 %v1470, %v1534
      %1536 = vmatmul.f32.gmra.mxu0 %v793
      %v1537 = vpop.f32.mrf.mxu0
      %v1538 = vadd.f32 %v1473, %v1537
      %1539 = vmatmul.f32.gmra.mxu0 %v808
      %v1540 = vpop.f32.mrf.mxu0
      %v1541 = vadd.f32 %v1476, %v1540
      %1542 = vmatmul.f32.gmra.mxu0 %v810
      %v1543 = vpop.f32.mrf.mxu0
      %v1544 = vadd.f32 %v1479, %v1543
      %1545 = vdwg.mxu0
      %1546 = vst [vmem:[%s302] sm:$0xff] %v1499
      %1547 = vst [vmem:[%s302 + $0x8] sm:$0xff] %v1502
      %1548 = vst [vmem:[%s302 + $0x10] sm:$0xff] %v1505
      %1549 = vst [vmem:[%s302 + $0x18] sm:$0xff] %v1508
      %1550 = vst [vmem:[%s302 + $0x20] sm:$0xff] %v1511
      %1551 = vst [vmem:[%s302 + $0x28] sm:$0xff] %v1514
      %1552 = vst [vmem:[%s302 + $0x30] sm:$0xff] %v1517
      %1553 = vst [vmem:[%s302 + $0x38] sm:$0xff] %v1520
      %1554 = vst [vmem:[%s302 + $0x40] sm:$0xff] %v1523
      %1555 = vst [vmem:[%s302 + $0x48] sm:$0xff] %v1526
      %1556 = vst [vmem:[%s302 + $0x50] sm:$0xff] %v1529
      %1557 = vst [vmem:[%s302 + $0x58] sm:$0xff] %v1532
      %1558 = vst [vmem:[%s302 + $0x60] sm:$0xff] %v1535
      %1559 = vst [vmem:[%s302 + $0x68] sm:$0xff] %v1538
      %1560 = vst [vmem:[%s302 + $0x70] sm:$0xff] %v1541
      %1561 = vst [vmem:[%s302 + $0x78] sm:$0xff] %v1544
      %v1562 = vadd.f32 %v1499, %v1502
      %v1563 = vadd.f32 %v1562, %v1505
      %v1564 = vadd.f32 %v1563, %v1508
      %v1565 = vadd.f32 %v1564, %v1511
      %v1566 = vadd.f32 %v1565, %v1514
      %v1567 = vadd.f32 %v1566, %v1517
      %v1568 = vadd.f32 %v1567, %v1520
      %v1569 = vadd.f32 %v1568, %v1523
      %v1570 = vadd.f32 %v1569, %v1526
      %v1571 = vadd.f32 %v1570, %v1529
      %v1572 = vadd.f32 %v1571, %v1532
      %v1573 = vadd.f32 %v1572, %v1535
      %v1574 = vadd.f32 %v1573, %v1538
      %v1575 = vadd.f32 %v1574, %v1541
      %v1576 = vadd.f32 %v1575, %v1544
      %v1577 = vrot.slane %v1576, 4
      %v1578 = vadd.f32 %v1576, %v1577
      %v1579 = vrot.slane %v1578, 2
      %v1580 = vadd.f32 %v1578, %v1579
      %v1581 = vrot.slane %v1580, 1
      %v1582 = vadd.f32 %v1580, %v1581
      %v1583 = vmul.f32 %v1499, %v1499
      %v1584 = vmul.f32 %v1502, %v1502
      %v1585 = vmul.f32 %v1505, %v1505
      %v1586 = vmul.f32 %v1508, %v1508
      %v1587 = vmul.f32 %v1511, %v1511
      %v1588 = vmul.f32 %v1514, %v1514
      %v1589 = vmul.f32 %v1517, %v1517
      %v1590 = vmul.f32 %v1520, %v1520
      %v1591 = vmul.f32 %v1523, %v1523
      %v1592 = vmul.f32 %v1526, %v1526
      %v1593 = vmul.f32 %v1529, %v1529
      %v1594 = vmul.f32 %v1532, %v1532
      %v1595 = vmul.f32 %v1535, %v1535
      %v1596 = vmul.f32 %v1538, %v1538
      %v1597 = vmul.f32 %v1541, %v1541
      %v1598 = vmul.f32 %v1544, %v1544
      %v1599 = vadd.f32 %v1583, %v1584
      %v1600 = vadd.f32 %v1599, %v1585
      %v1601 = vadd.f32 %v1600, %v1586
      %v1602 = vadd.f32 %v1601, %v1587
      %v1603 = vadd.f32 %v1602, %v1588
      %v1604 = vadd.f32 %v1603, %v1589
      %v1605 = vadd.f32 %v1604, %v1590
      %v1606 = vadd.f32 %v1605, %v1591
      %v1607 = vadd.f32 %v1606, %v1592
      %v1608 = vadd.f32 %v1607, %v1593
      %v1609 = vadd.f32 %v1608, %v1594
      %v1610 = vadd.f32 %v1609, %v1595
      %v1611 = vadd.f32 %v1610, %v1596
      %v1612 = vadd.f32 %v1611, %v1597
      %v1613 = vadd.f32 %v1612, %v1598
      %v1614 = vrot.slane %v1613, 4
      %v1615 = vadd.f32 %v1613, %v1614
      %v1616 = vrot.slane %v1615, 2
      %v1617 = vadd.f32 %v1615, %v1616
      %v1618 = vrot.slane %v1617, 1
      %v1619 = vadd.f32 %v1617, %v1618
      %vm1620 = vcmask 1040384
      %v1621 = vsel %vm1620, %v1582, %v1619
      %1622 = vst [vmem:[%s311] sm:$0x3] %v1621
      %s1623 = smul.u32 8, %s23
      %p1624 = scmp.lt.s32.totalorder %s22, 1
      %s1625 = scalar_select %p1624, %s22, 1
      %p1626 = scmp.lt.s32.totalorder %s1623, 15
      %s1627 = scalar_select %p1626, %s1623, 15
      %s1628 = smul.addr %s1627, 2
      %s1629 = smul.addr %s1625, 32
      %s1630 = sadd.s32 %s1628, %s1629
      %s1631 = smul.addr %s1630, 8
      %s1632 = scalar_lea.vmem %s5, %s1631
      %p1633 = scmp.lt.s32.totalorder %s22, 1
      %s1634 = scalar_select %p1633, %s22, 1
      %p1635 = scmp.lt.s32.totalorder %s23, 1
      %s1636 = scalar_select %p1635, %s23, 1
      %s1637 = smul.addr %s1634, 2
      %s1638 = sadd.s32 %s1636, %s1637
      %s1639 = smul.addr %s1638, 2
      %s1640 = scalar_lea.vmem %s6, %s1639
      // Predicated region
      $region41: #{double_conv.4} parent=39 // pred_check
        %p1641 = pneg %p162
      $region42: #{double_conv.4} parent=39 // pred_check_branch
        %1643 = sbr.rel (%p1641) target = $region44
      $region43: #{double_conv.4} parent=39 // pred_region
        %s1644 = smul.u32 8, %s23
      $region44: #{double_conv.4} parent=39 // pred_fallthru
        _
      // Predicated region
      $region45: #{double_conv.4} parent=39 // pred_check
        %p1645 = pneg %p190
      $region46: #{double_conv.4} parent=39 // pred_check_branch
        %1647 = sbr.rel (%p1645) target = $region48
      $region47: #{double_conv.4} parent=39 // pred_region
        _
      $region48: #{double_conv.4} parent=39 // pred_fallthru
        _
    $region40: #{double_conv.4} parent=5 // pred_fallthru
      _
    %p1648 = scmp.le.s32.totalorder 2, %s13
    // Predicated region
    $region49: #{double_conv.4} parent=5 // pred_check
      %p1649 = pneg %p1648
    $region50: #{double_conv.4} parent=5 // pred_check_branch
      %1651 = sbr.rel (%p1649) target = $region52
    $region51: #{double_conv.4} parent=5 // pred_region
      %s1652 = ssub.s32 %s13, 2
      // Predicated region
      $region53: #{double_conv.4} parent=51 // pred_check
        %p1653 = pneg %p168
      $region54: #{double_conv.4} parent=51 // pred_check_branch
        %1655 = sbr.rel (%p1653) target = $region56
      $region55: #{double_conv.4} parent=51 // pred_region
        %s1656 = smul.u32 8, %s25
        %p1657 = scmp.lt.s32.totalorder %s24, 1
        %s1658 = scalar_select %p1657, %s24, 1
        %p1659 = scmp.lt.s32.totalorder %s1656, 15
        %s1660 = scalar_select %p1659, %s1656, 15
        %s1661 = smul.addr %s1660, 2
        %s1662 = smul.addr %s1658, 32
        %s1663 = sadd.s32 %s1661, %s1662
        %s1664 = smul.addr %s1663, 8
        %s1665 = scalar_lea.vmem %s5, %s1664
      $region56: #{double_conv.4} parent=51 // pred_fallthru
        _
      // Predicated region
      $region57: #{double_conv.4} parent=51 // pred_check
        %p1666 = pneg %p196
      $region58: #{double_conv.4} parent=51 // pred_check_branch
        %1668 = sbr.rel (%p1666) target = $region60
      $region59: #{double_conv.4} parent=51 // pred_region
        %p1669 = scmp.lt.s32.totalorder %s24, 1
        %s1670 = scalar_select %p1669, %s24, 1
        %p1671 = scmp.lt.s32.totalorder %s25, 1
        %s1672 = scalar_select %p1671, %s25, 1
        %s1673 = smul.addr %s1670, 2
        %s1674 = sadd.s32 %s1672, %s1673
        %s1675 = smul.addr %s1674, 2
        %s1676 = scalar_lea.vmem %s6, %s1675
      $region60: #{double_conv.4} parent=51 // pred_fallthru
        _
    $region52: #{double_conv.4} parent=5 // pred_fallthru
      _
  $region6: #{double_conv.4} parent=0 // loop_footer
    %s17 = sadd.s32 1, %s13
  $region7: #{double_conv.4} parent=0 // loop_footer_branch
    %12 = sbr.rel target = $region3
  $region8: #{double_conv.4} parent=0 // loop_exit
    _

</llo_original>
